<compile_context>
chip_gen: v7x
topology: tpu7x:2x2x1
jax: 0.10.0
libtpu: 0.0.40
codegen_flags: <defaults>
</compile_context>

<pallas_src>
import functools

import numpy as np
import jax
import jax.numpy as jnp
from jax.experimental import pallas as pl
from jax.experimental.pallas import tpu as pltpu


def _hard_swish(x):
    # f_hard_swish(x) = relu6(x + 3) / 6 * x
    return jnp.clip(x + 3.0, 0.0, 6.0) * (1.0 / 6.0) * x


def _linear_bf16(x, w_ref, b_ref):
    # bf16 inputs on the MXU, f32 accumulation, f32 bias add.
    return jnp.dot(x.astype(jnp.bfloat16), w_ref[...],
                   preferred_element_type=jnp.float32) + b_ref[...]


def _densenet_kernel(sc_ref,                      # SMEM (2,): [drop_p, 1/(1-p)]
                     x_ref, rand_ref,             # VMEM activations / uniforms
                     w00_ref, b00_ref,
                     w10_ref, b10_ref,
                     w11_ref, b11_ref,
                     w20_ref, b20_ref,
                     w21_ref, b21_ref,
                     wo_ref, bo_ref,
                     out_ref,                     # (TB, 128) lane-dense output
                     cat_ref):                    # VMEM scratch (TB, 4*mid) f32
    mid = w00_ref.shape[1]

    x00 = x_ref[...]
    x10 = _hard_swish(_linear_bf16(x00, w00_ref, b00_ref))
    x11 = _hard_swish(_linear_bf16(x10, w10_ref, b10_ref))
    x12 = _hard_swish(_linear_bf16(x11, w11_ref, b11_ref)) + x11

    # torch.cat((x10, x12)) -> lane-aligned writes into the persistent scratch.
    cat_ref[:, 0:mid] = x10
    cat_ref[:, mid:2 * mid] = x12
    x20 = cat_ref[:, 0:2 * mid]

    x21 = _hard_swish(_linear_bf16(x20, w20_ref, b20_ref))
    x22 = _hard_swish(_linear_bf16(x21, w21_ref, b21_ref)) + x21

    # torch.cat((x20, x22)) -> x22 lands next to x20 in the same scratch.
    cat_ref[:, 2 * mid:4 * mid] = x22
    x30 = cat_ref[...]

    # Train-mode inverted dropout with runtime p (matches Bernoulli(1-p) / (1-p)).
    # TODO(synk): torch's exact dropout RNG stream cannot be reproduced; only the
    # distribution is matched (uniforms are supplied via jax.random).
    drop_p = sc_ref[0]
    inv_keep = sc_ref[1]
    keep = rand_ref[...] >= drop_p
    x_o = jnp.where(keep, x30 * inv_keep, 0.0)

    out_ref[...] = (jnp.dot(x_o.astype(jnp.bfloat16), wo_ref[...],
                            preferred_element_type=jnp.float32)
                    + bo_ref[...]).astype(out_ref.dtype)


def densenet_forward(drop_scalars, x, rand_u, packed, *, out_dim, block_b):
    """drop_scalars: f32 (2,) = [p, 1/(1-p)]; rand_u: f32 (B, 4*mid) uniforms."""
    B, inp_dim = x.shape
    mid4 = rand_u.shape[1]
    out_pad = packed[-1].shape[-1]          # lane-dense padded output width
    assert B % block_b == 0

    in_specs = (
        [pl.BlockSpec(memory_space=pltpu.MemorySpace.SMEM)]               # scalars
        + [pl.BlockSpec((block_b, inp_dim), lambda i: (i, 0)),            # x
           pl.BlockSpec((block_b, mid4), lambda i: (i, 0))]               # uniforms
        + [pl.BlockSpec(a.shape, lambda i: (0, 0)) for a in packed]       # weights
    )
    out = pl.pallas_call(
        _densenet_kernel,
        out_shape=jax.ShapeDtypeStruct((B, out_pad), jnp.float32),
        grid=(B // block_b,),
        in_specs=in_specs,
        out_specs=pl.BlockSpec((block_b, out_pad), lambda i: (i, 0)),
        scratch_shapes=[pltpu.VMEM((block_b, mid4), jnp.float32)],
        compiler_params=pltpu.CompilerParams(dimension_semantics=("parallel",)),
    )(drop_scalars, x, rand_u, *packed)
    return out[:, :out_dim]


def init_params(key, inp_dim, mid_dim, out_dim):
    """Mimics torch.nn.Linear's U(-1/sqrt(fan_in), 1/sqrt(fan_in)); weights bf16."""
    def linear_init(k, fan_in, fan_out):
        kw, kb = jax.random.split(k)
        bound = 1.0 / np.sqrt(fan_in)
        w = jax.random.uniform(kw, (fan_in, fan_out), jnp.float32, -bound, bound)
        b = jax.random.uniform(kb, (1, fan_out), jnp.float32, -bound, bound)
        return w.astype(jnp.bfloat16), b          # bf16 weights, f32 bias

    keys = jax.random.split(key, 6)
    p = {}
    p["w00"], p["b00"] = linear_init(keys[0], inp_dim, mid_dim)            # dense00
    p["w10"], p["b10"] = linear_init(keys[1], mid_dim, mid_dim)            # dense10
    p["w11"], p["b11"] = linear_init(keys[2], mid_dim, mid_dim)            # dense11
    p["w20"], p["b20"] = linear_init(keys[3], 2 * mid_dim, 2 * mid_dim)    # dense20
    p["w21"], p["b21"] = linear_init(keys[4], 2 * mid_dim, 2 * mid_dim)    # dense21
    p["wo"], p["bo"] = linear_init(keys[5], 4 * mid_dim, out_dim)          # dense_o
    return p


def pack_params(P, out_dim, lane=128):
    """Ordered weight tuple with the final layer zero-padded to a lane-dense width."""
    out_pad = ((out_dim + lane - 1) // lane) * lane
    wo_pad = jnp.pad(P["wo"], ((0, 0), (0, out_pad - out_dim)))
    bo_pad = jnp.pad(P["bo"], ((0, 0), (0, out_pad - out_dim)))
    return (P["w00"], P["b00"], P["w10"], P["b10"], P["w11"], P["b11"],
            P["w20"], P["b20"], P["w21"], P["b21"], wo_pad, bo_pad)


def reference_forward(x, P):
    """Pure-JAX reference (dropout disabled), mirroring the kernel's bf16 matmuls."""
    hs = lambda v: jnp.clip(v + 3.0, 0.0, 6.0) * (1.0 / 6.0) * v
    lin = lambda a, w, b: jnp.dot(a.astype(jnp.bfloat16), w,
                                  preferred_element_type=jnp.float32) + b
    x10 = hs(lin(x, P["w00"], P["b00"]))
    x11 = hs(lin(x10, P["w10"], P["b10"]))
    x12 = hs(lin(x11, P["w11"], P["b11"])) + x11
    x20 = jnp.concatenate((x10, x12), axis=1)
    x21 = hs(lin(x20, P["w20"], P["b20"]))
    x22 = hs(lin(x21, P["w21"], P["b21"])) + x21
    x30 = jnp.concatenate((x20, x22), axis=1)
    return lin(x30, P["wo"], P["bo"])


if __name__ == "__main__":
    inp_dim, mid_dim, out_dim = 32, 128, 8
    batch, TB = 256, 128                      # batched forward, 2 grid steps

    key = jax.random.PRNGKey(0)
    kx, kp, kd = jax.random.split(key, 3)
    params = init_params(kp, inp_dim, mid_dim, out_dim)
    packed = pack_params(params, out_dim)
    x = jax.random.normal(kx, (batch, inp_dim), jnp.float32)
    rand_u = jax.random.uniform(kd, (batch, 4 * mid_dim), jnp.float32)

    fwd = jax.jit(functools.partial(densenet_forward, out_dim=out_dim, block_b=TB))

    # Correctness check: kernel with dropout p=0 must match the pure-JAX reference.
    sc0 = jnp.array([0.0, 1.0], jnp.float32)
    y0 = fwd(sc0, x, rand_u, packed)
    jax.block_until_ready(y0)
    y_ref = reference_forward(x, params)
    np.testing.assert_allclose(np.asarray(y0), np.asarray(y_ref), rtol=2e-2, atol=2e-2)

    # Real forward: p ~ U(0.125, 0.375) sampled host-side like the torch module.
    # p is a runtime SMEM value -> same compiled program, no re-trace per call.
    drop_p = float(np.random.default_rng(0).uniform(0.125, 0.375))
    sc = jnp.array([drop_p, 1.0 / (1.0 - drop_p)], jnp.float32)
    y = fwd(sc, x, rand_u, packed)
    jax.block_until_ready(y)
    assert y.shape == (batch, out_dim) and y.dtype == jnp.float32

    print("KERNEL_OK")
</pallas_src>

<mosaic_0001>
module attributes {stable_mosaic.version = 11 : i64} {
  func.func @_densenet_kernel(%arg0: i32, %arg1: memref<2xf32, #tpu.memory_space<smem>>, %arg2: memref<128x32xf32, #tpu.memory_space<vmem>>, %arg3: memref<128x512xf32, #tpu.memory_space<vmem>>, %arg4: memref<32x128xbf16, #tpu.memory_space<vmem>>, %arg5: memref<1x128xf32, #tpu.memory_space<vmem>>, %arg6: memref<128x128xbf16, #tpu.memory_space<vmem>>, %arg7: memref<1x128xf32, #tpu.memory_space<vmem>>, %arg8: memref<128x128xbf16, #tpu.memory_space<vmem>>, %arg9: memref<1x128xf32, #tpu.memory_space<vmem>>, %arg10: memref<256x256xbf16, #tpu.memory_space<vmem>>, %arg11: memref<1x256xf32, #tpu.memory_space<vmem>>, %arg12: memref<256x256xbf16, #tpu.memory_space<vmem>>, %arg13: memref<1x256xf32, #tpu.memory_space<vmem>>, %arg14: memref<512x128xbf16, #tpu.memory_space<vmem>>, %arg15: memref<1x128xf32, #tpu.memory_space<vmem>>, %arg16: memref<128x128xf32, #tpu.memory_space<vmem>>, %arg17: memref<128x512xf32, #tpu.memory_space<vmem>>) attributes {dimension_semantics = [#tpu.dimension_semantics<parallel>], iteration_bounds = array<i64: 2>, scalar_prefetch = 0 : i64, scratch_operands = 1 : i64, tpu.core_type = #tpu.core_type<tc>, window_params = [{transform_indices = @transform_0, window_bounds = array<i64: 2>}, {transform_indices = @transform_1, window_bounds = array<i64: 128, 32>}, {transform_indices = @transform_2, window_bounds = array<i64: 128, 512>}, {pipeline_mode = #tpu.pipeline_mode<synchronous>, transform_indices = @transform_3, window_bounds = array<i64: 32, 128>}, {pipeline_mode = #tpu.pipeline_mode<synchronous>, transform_indices = @transform_4, window_bounds = array<i64: 1, 128>}, {pipeline_mode = #tpu.pipeline_mode<synchronous>, transform_indices = @transform_5, window_bounds = array<i64: 128, 128>}, {pipeline_mode = #tpu.pipeline_mode<synchronous>, transform_indices = @transform_6, window_bounds = array<i64: 1, 128>}, {pipeline_mode = #tpu.pipeline_mode<synchronous>, transform_indices = @transform_7, window_bounds = array<i64: 128, 128>}, {pipeline_mode = #tpu.pipeline_mode<synchronous>, transform_indices = @transform_8, window_bounds = array<i64: 1, 128>}, {pipeline_mode = #tpu.pipeline_mode<synchronous>, transform_indices = @transform_9, window_bounds = array<i64: 256, 256>}, {pipeline_mode = #tpu.pipeline_mode<synchronous>, transform_indices = @transform_10, window_bounds = array<i64: 1, 256>}, {pipeline_mode = #tpu.pipeline_mode<synchronous>, transform_indices = @transform_11, window_bounds = array<i64: 256, 256>}, {pipeline_mode = #tpu.pipeline_mode<synchronous>, transform_indices = @transform_12, window_bounds = array<i64: 1, 256>}, {pipeline_mode = #tpu.pipeline_mode<synchronous>, transform_indices = @transform_13, window_bounds = array<i64: 512, 128>}, {pipeline_mode = #tpu.pipeline_mode<synchronous>, transform_indices = @transform_14, window_bounds = array<i64: 1, 128>}, {transform_indices = @transform_15, window_bounds = array<i64: 128, 128>}]} {
    %c0 = arith.constant 0 : index
    %c0_0 = arith.constant 0 : index
    %0 = vector.load %arg2[%c0, %c0_0] : memref<128x32xf32, #tpu.memory_space<vmem>>, vector<128x32xf32>
    %1 = arith.truncf %0 : vector<128x32xf32> to vector<128x32xbf16>
    %c0_1 = arith.constant 0 : index
    %c0_2 = arith.constant 0 : index
    %2 = vector.load %arg4[%c0_1, %c0_2] : memref<32x128xbf16, #tpu.memory_space<vmem>>, vector<32x128xbf16>
    %cst = arith.constant dense<0.000000e+00> : vector<128x128xf32>
    %3 = tpu.matmul %1, %2, %cst {dimension_numbers = #tpu.dot_dimension_numbers<[1], [0], [0], [1], [0, 0, 1, 1], [], []>} : vector<128x32xbf16>, vector<32x128xbf16>, vector<128x128xf32> -> vector<128x128xf32>
    %c0_3 = arith.constant 0 : index
    %c0_4 = arith.constant 0 : index
    %4 = vector.load %arg5[%c0_3, %c0_4] : memref<1x128xf32, #tpu.memory_space<vmem>>, vector<1x128xf32>
    %5 = vector.broadcast %4 : vector<1x128xf32> to vector<128x128xf32>
    %6 = arith.addf %3, %5 : vector<128x128xf32>
    %cst_5 = arith.constant 3.000000e+00 : f32
    %7 = vector.broadcast %cst_5 : f32 to vector<128x128xf32>
    %8 = arith.addf %6, %7 : vector<128x128xf32>
    %cst_6 = arith.constant 0.000000e+00 : f32
    %cst_7 = arith.constant 6.000000e+00 : f32
    %9 = vector.broadcast %cst_6 : f32 to vector<128x128xf32>
    %10 = arith.maximumf %9, %8 : vector<128x128xf32>
    %11 = vector.broadcast %cst_7 : f32 to vector<128x128xf32>
    %12 = arith.minimumf %11, %10 : vector<128x128xf32>
    %cst_8 = arith.constant 0.166666672 : f32
    %13 = vector.broadcast %cst_8 : f32 to vector<128x128xf32>
    %14 = arith.mulf %12, %13 : vector<128x128xf32>
    %15 = arith.mulf %14, %6 : vector<128x128xf32>
    %16 = arith.truncf %15 : vector<128x128xf32> to vector<128x128xbf16>
    %c0_9 = arith.constant 0 : index
    %c0_10 = arith.constant 0 : index
    %17 = vector.load %arg6[%c0_9, %c0_10] : memref<128x128xbf16, #tpu.memory_space<vmem>>, vector<128x128xbf16>
    %cst_11 = arith.constant dense<0.000000e+00> : vector<128x128xf32>
    %18 = tpu.matmul %16, %17, %cst_11 {dimension_numbers = #tpu.dot_dimension_numbers<[1], [0], [0], [1], [0, 0, 1, 1], [], []>} : vector<128x128xbf16>, vector<128x128xbf16>, vector<128x128xf32> -> vector<128x128xf32>
    %c0_12 = arith.constant 0 : index
    %c0_13 = arith.constant 0 : index
    %19 = vector.load %arg7[%c0_12, %c0_13] : memref<1x128xf32, #tpu.memory_space<vmem>>, vector<1x128xf32>
    %20 = vector.broadcast %19 : vector<1x128xf32> to vector<128x128xf32>
    %21 = arith.addf %18, %20 : vector<128x128xf32>
    %cst_14 = arith.constant 3.000000e+00 : f32
    %22 = vector.broadcast %cst_14 : f32 to vector<128x128xf32>
    %23 = arith.addf %21, %22 : vector<128x128xf32>
    %cst_15 = arith.constant 0.000000e+00 : f32
    %cst_16 = arith.constant 6.000000e+00 : f32
    %24 = vector.broadcast %cst_15 : f32 to vector<128x128xf32>
    %25 = arith.maximumf %24, %23 : vector<128x128xf32>
    %26 = vector.broadcast %cst_16 : f32 to vector<128x128xf32>
    %27 = arith.minimumf %26, %25 : vector<128x128xf32>
    %cst_17 = arith.constant 0.166666672 : f32
    %28 = vector.broadcast %cst_17 : f32 to vector<128x128xf32>
    %29 = arith.mulf %27, %28 : vector<128x128xf32>
    %30 = arith.mulf %29, %21 : vector<128x128xf32>
    %31 = arith.truncf %30 : vector<128x128xf32> to vector<128x128xbf16>
    %c0_18 = arith.constant 0 : index
    %c0_19 = arith.constant 0 : index
    %32 = vector.load %arg8[%c0_18, %c0_19] : memref<128x128xbf16, #tpu.memory_space<vmem>>, vector<128x128xbf16>
    %cst_20 = arith.constant dense<0.000000e+00> : vector<128x128xf32>
    %33 = tpu.matmul %31, %32, %cst_20 {dimension_numbers = #tpu.dot_dimension_numbers<[1], [0], [0], [1], [0, 0, 1, 1], [], []>} : vector<128x128xbf16>, vector<128x128xbf16>, vector<128x128xf32> -> vector<128x128xf32>
    %c0_21 = arith.constant 0 : index
    %c0_22 = arith.constant 0 : index
    %34 = vector.load %arg9[%c0_21, %c0_22] : memref<1x128xf32, #tpu.memory_space<vmem>>, vector<1x128xf32>
    %35 = vector.broadcast %34 : vector<1x128xf32> to vector<128x128xf32>
    %36 = arith.addf %33, %35 : vector<128x128xf32>
    %cst_23 = arith.constant 3.000000e+00 : f32
    %37 = vector.broadcast %cst_23 : f32 to vector<128x128xf32>
    %38 = arith.addf %36, %37 : vector<128x128xf32>
    %cst_24 = arith.constant 0.000000e+00 : f32
    %cst_25 = arith.constant 6.000000e+00 : f32
    %39 = vector.broadcast %cst_24 : f32 to vector<128x128xf32>
    %40 = arith.maximumf %39, %38 : vector<128x128xf32>
    %41 = vector.broadcast %cst_25 : f32 to vector<128x128xf32>
    %42 = arith.minimumf %41, %40 : vector<128x128xf32>
    %cst_26 = arith.constant 0.166666672 : f32
    %43 = vector.broadcast %cst_26 : f32 to vector<128x128xf32>
    %44 = arith.mulf %42, %43 : vector<128x128xf32>
    %45 = arith.mulf %44, %36 : vector<128x128xf32>
    %46 = arith.addf %45, %30 : vector<128x128xf32>
    %c0_27 = arith.constant 0 : index
    %c0_28 = arith.constant 0 : index
    %47 = vector.load %arg17[%c0_27, %c0_28] : memref<128x512xf32, #tpu.memory_space<vmem>>, vector<128x128xf32>
    tpu.vector_store %arg17[%c0_27, %c0_28], %15 {strides = array<i32>} : memref<128x512xf32, #tpu.memory_space<vmem>>, vector<128x128xf32>,
    %c0_29 = arith.constant 0 : index
    %c128 = arith.constant 128 : index
    %48 = vector.load %arg17[%c0_29, %c128] : memref<128x512xf32, #tpu.memory_space<vmem>>, vector<128x128xf32>
    tpu.vector_store %arg17[%c0_29, %c128], %46 {strides = array<i32>} : memref<128x512xf32, #tpu.memory_space<vmem>>, vector<128x128xf32>,
    %c0_30 = arith.constant 0 : index
    %c0_31 = arith.constant 0 : index
    %49 = vector.load %arg17[%c0_30, %c0_31] : memref<128x512xf32, #tpu.memory_space<vmem>>, vector<128x256xf32>
    %50 = arith.truncf %49 : vector<128x256xf32> to vector<128x256xbf16>
    %c0_32 = arith.constant 0 : index
    %c0_33 = arith.constant 0 : index
    %51 = vector.load %arg10[%c0_32, %c0_33] : memref<256x256xbf16, #tpu.memory_space<vmem>>, vector<256x256xbf16>
    %cst_34 = arith.constant dense<0.000000e+00> : vector<128x256xf32>
    %52 = tpu.matmul %50, %51, %cst_34 {dimension_numbers = #tpu.dot_dimension_numbers<[1], [0], [0], [1], [0, 0, 1, 1], [], []>} : vector<128x256xbf16>, vector<256x256xbf16>, vector<128x256xf32> -> vector<128x256xf32>
    %c0_35 = arith.constant 0 : index
    %c0_36 = arith.constant 0 : index
    %53 = vector.load %arg11[%c0_35, %c0_36] : memref<1x256xf32, #tpu.memory_space<vmem>>, vector<1x256xf32>
    %54 = vector.broadcast %53 : vector<1x256xf32> to vector<128x256xf32>
    %55 = arith.addf %52, %54 : vector<128x256xf32>
    %cst_37 = arith.constant 3.000000e+00 : f32
    %56 = vector.broadcast %cst_37 : f32 to vector<128x256xf32>
    %57 = arith.addf %55, %56 : vector<128x256xf32>
    %cst_38 = arith.constant 0.000000e+00 : f32
    %cst_39 = arith.constant 6.000000e+00 : f32
    %58 = vector.broadcast %cst_38 : f32 to vector<128x256xf32>
    %59 = arith.maximumf %58, %57 : vector<128x256xf32>
    %60 = vector.broadcast %cst_39 : f32 to vector<128x256xf32>
    %61 = arith.minimumf %60, %59 : vector<128x256xf32>
    %cst_40 = arith.constant 0.166666672 : f32
    %62 = vector.broadcast %cst_40 : f32 to vector<128x256xf32>
    %63 = arith.mulf %61, %62 : vector<128x256xf32>
    %64 = arith.mulf %63, %55 : vector<128x256xf32>
    %65 = arith.truncf %64 : vector<128x256xf32> to vector<128x256xbf16>
    %c0_41 = arith.constant 0 : index
    %c0_42 = arith.constant 0 : index
    %66 = vector.load %arg12[%c0_41, %c0_42] : memref<256x256xbf16, #tpu.memory_space<vmem>>, vector<256x256xbf16>
    %cst_43 = arith.constant dense<0.000000e+00> : vector<128x256xf32>
    %67 = tpu.matmul %65, %66, %cst_43 {dimension_numbers = #tpu.dot_dimension_numbers<[1], [0], [0], [1], [0, 0, 1, 1], [], []>} : vector<128x256xbf16>, vector<256x256xbf16>, vector<128x256xf32> -> vector<128x256xf32>
    %c0_44 = arith.constant 0 : index
    %c0_45 = arith.constant 0 : index
    %68 = vector.load %arg13[%c0_44, %c0_45] : memref<1x256xf32, #tpu.memory_space<vmem>>, vector<1x256xf32>
    %69 = vector.broadcast %68 : vector<1x256xf32> to vector<128x256xf32>
    %70 = arith.addf %67, %69 : vector<128x256xf32>
    %cst_46 = arith.constant 3.000000e+00 : f32
    %71 = vector.broadcast %cst_46 : f32 to vector<128x256xf32>
    %72 = arith.addf %70, %71 : vector<128x256xf32>
    %cst_47 = arith.constant 0.000000e+00 : f32
    %cst_48 = arith.constant 6.000000e+00 : f32
    %73 = vector.broadcast %cst_47 : f32 to vector<128x256xf32>
    %74 = arith.maximumf %73, %72 : vector<128x256xf32>
    %75 = vector.broadcast %cst_48 : f32 to vector<128x256xf32>
    %76 = arith.minimumf %75, %74 : vector<128x256xf32>
    %cst_49 = arith.constant 0.166666672 : f32
    %77 = vector.broadcast %cst_49 : f32 to vector<128x256xf32>
    %78 = arith.mulf %76, %77 : vector<128x256xf32>
    %79 = arith.mulf %78, %70 : vector<128x256xf32>
    %80 = arith.addf %79, %64 : vector<128x256xf32>
    %c0_50 = arith.constant 0 : index
    %c256 = arith.constant 256 : index
    %81 = vector.load %arg17[%c0_50, %c256] : memref<128x512xf32, #tpu.memory_space<vmem>>, vector<128x256xf32>
    tpu.vector_store %arg17[%c0_50, %c256], %80 {strides = array<i32>} : memref<128x512xf32, #tpu.memory_space<vmem>>, vector<128x256xf32>,
    %c0_51 = arith.constant 0 : index
    %c0_52 = arith.constant 0 : index
    %82 = vector.load %arg17[%c0_51, %c0_52] : memref<128x512xf32, #tpu.memory_space<vmem>>, vector<128x512xf32>
    %c0_53 = arith.constant 0 : index
    %83 = memref.load %arg1[%c0_53] : memref<2xf32, #tpu.memory_space<smem>>
    %c1 = arith.constant 1 : index
    %84 = memref.load %arg1[%c1] : memref<2xf32, #tpu.memory_space<smem>>
    %c0_54 = arith.constant 0 : index
    %c0_55 = arith.constant 0 : index
    %85 = vector.load %arg3[%c0_54, %c0_55] : memref<128x512xf32, #tpu.memory_space<vmem>>, vector<128x512xf32>
    %86 = vector.broadcast %83 : f32 to vector<128x512xf32>
    %87 = arith.cmpf oge, %85, %86 : vector<128x512xf32>
    %88 = vector.broadcast %84 : f32 to vector<128x512xf32>
    %89 = arith.mulf %82, %88 : vector<128x512xf32>
    %cst_56 = arith.constant 0.000000e+00 : f32
    %90 = vector.broadcast %cst_56 : f32 to vector<128x512xf32>
    %91 = arith.select %87, %89, %90 : vector<128x512xi1>, vector<128x512xf32>
    %92 = arith.truncf %91 : vector<128x512xf32> to vector<128x512xbf16>
    %c0_57 = arith.constant 0 : index
    %c0_58 = arith.constant 0 : index
    %93 = vector.load %arg14[%c0_57, %c0_58] : memref<512x128xbf16, #tpu.memory_space<vmem>>, vector<512x128xbf16>
    %cst_59 = arith.constant dense<0.000000e+00> : vector<128x128xf32>
    %94 = tpu.matmul %92, %93, %cst_59 {dimension_numbers = #tpu.dot_dimension_numbers<[1], [0], [0], [1], [0, 0, 1, 1], [], []>} : vector<128x512xbf16>, vector<512x128xbf16>, vector<128x128xf32> -> vector<128x128xf32>
    %c0_60 = arith.constant 0 : index
    %c0_61 = arith.constant 0 : index
    %95 = vector.load %arg15[%c0_60, %c0_61] : memref<1x128xf32, #tpu.memory_space<vmem>>, vector<1x128xf32>
    %96 = vector.broadcast %95 : vector<1x128xf32> to vector<128x128xf32>
    %97 = arith.addf %94, %96 : vector<128x128xf32>
    %c0_62 = arith.constant 0 : index
    %c0_63 = arith.constant 0 : index
    %98 = vector.load %arg16[%c0_62, %c0_63] : memref<128x128xf32, #tpu.memory_space<vmem>>, vector<128x128xf32>
    tpu.vector_store %arg16[%c0_62, %c0_63], %97 {strides = array<i32>} : memref<128x128xf32, #tpu.memory_space<vmem>>, vector<128x128xf32>,
    return
  }
  func.func @transform_0(%arg0: i32) -> i32 {
    %c0_i32 = arith.constant 0 : i32
    %c0_i32_0 = arith.constant 0 : i32
    return %c0_i32 : i32
  }
  func.func @transform_1(%arg0: i32) -> (i32, i32) {
    %c0_i32 = arith.constant 0 : i32
    %c0_i32_0 = arith.constant 0 : i32
    return %arg0, %c0_i32 : i32, i32
  }
  func.func @transform_2(%arg0: i32) -> (i32, i32) {
    %c0_i32 = arith.constant 0 : i32
    %c0_i32_0 = arith.constant 0 : i32
    return %arg0, %c0_i32 : i32, i32
  }
  func.func @transform_3(%arg0: i32) -> (i32, i32) {
    %c0_i32 = arith.constant 0 : i32
    %c0_i32_0 = arith.constant 0 : i32
    %c0_i32_1 = arith.constant 0 : i32
    return %c0_i32, %c0_i32_0 : i32, i32
  }
  func.func @transform_4(%arg0: i32) -> (i32, i32) {
    %c0_i32 = arith.constant 0 : i32
    %c0_i32_0 = arith.constant 0 : i32
    %c0_i32_1 = arith.constant 0 : i32
    return %c0_i32, %c0_i32_0 : i32, i32
  }
  func.func @transform_5(%arg0: i32) -> (i32, i32) {
    %c0_i32 = arith.constant 0 : i32
    %c0_i32_0 = arith.constant 0 : i32
    %c0_i32_1 = arith.constant 0 : i32
    return %c0_i32, %c0_i32_0 : i32, i32
  }
  func.func @transform_6(%arg0: i32) -> (i32, i32) {
    %c0_i32 = arith.constant 0 : i32
    %c0_i32_0 = arith.constant 0 : i32
    %c0_i32_1 = arith.constant 0 : i32
    return %c0_i32, %c0_i32_0 : i32, i32
  }
  func.func @transform_7(%arg0: i32) -> (i32, i32) {
    %c0_i32 = arith.constant 0 : i32
    %c0_i32_0 = arith.constant 0 : i32
    %c0_i32_1 = arith.constant 0 : i32
    return %c0_i32, %c0_i32_0 : i32, i32
  }
  func.func @transform_8(%arg0: i32) -> (i32, i32) {
    %c0_i32 = arith.constant 0 : i32
    %c0_i32_0 = arith.constant 0 : i32
    %c0_i32_1 = arith.constant 0 : i32
    return %c0_i32, %c0_i32_0 : i32, i32
  }
  func.func @transform_9(%arg0: i32) -> (i32, i32) {
    %c0_i32 = arith.constant 0 : i32
    %c0_i32_0 = arith.constant 0 : i32
    %c0_i32_1 = arith.constant 0 : i32
    return %c0_i32, %c0_i32_0 : i32, i32
  }
  func.func @transform_10(%arg0: i32) -> (i32, i32) {
    %c0_i32 = arith.constant 0 : i32
    %c0_i32_0 = arith.constant 0 : i32
    %c0_i32_1 = arith.constant 0 : i32
    return %c0_i32, %c0_i32_0 : i32, i32
  }
  func.func @transform_11(%arg0: i32) -> (i32, i32) {
    %c0_i32 = arith.constant 0 : i32
    %c0_i32_0 = arith.constant 0 : i32
    %c0_i32_1 = arith.constant 0 : i32
    return %c0_i32, %c0_i32_0 : i32, i32
  }
  func.func @transform_12(%arg0: i32) -> (i32, i32) {
    %c0_i32 = arith.constant 0 : i32
    %c0_i32_0 = arith.constant 0 : i32
    %c0_i32_1 = arith.constant 0 : i32
    return %c0_i32, %c0_i32_0 : i32, i32
  }
  func.func @transform_13(%arg0: i32) -> (i32, i32) {
    %c0_i32 = arith.constant 0 : i32
    %c0_i32_0 = arith.constant 0 : i32
    %c0_i32_1 = arith.constant 0 : i32
    return %c0_i32, %c0_i32_0 : i32, i32
  }
  func.func @transform_14(%arg0: i32) -> (i32, i32) {
    %c0_i32 = arith.constant 0 : i32
    %c0_i32_0 = arith.constant 0 : i32
    %c0_i32_1 = arith.constant 0 : i32
    return %c0_i32, %c0_i32_0 : i32, i32
  }
  func.func @transform_15(%arg0: i32) -> (i32, i32) {
    %c0_i32 = arith.constant 0 : i32
    %c0_i32_0 = arith.constant 0 : i32
    return %arg0, %c0_i32 : i32, i32
  }
}

</mosaic_0001>

<llo_original>
// kernel: densenet_forward.1
$region0: #{densenet_forward.1}
  #allocation0 [shape = 'u32[]', space=smem, size = 0x4, offset = 0x4, fixed_abs, tag = 'smem constant byte address 0x4 - core index']
  #allocation1 [shape = 'u32[144,128]{1,0:T(1,128)}', space=vmem, size = 0x12000, scoped, tag = 'internal scratch']
  #allocation2 [shape = 'f32[128,512]{1,0:T(8,128)}', space=vmem, size = 0x40000, scoped, tag = 'scratch operand']
  %s0 = inlined_call_operand.vmem [shape: f32[2], index: 0, kind: input, shape index: {}]
  %s1 = inlined_call_operand.vmem [shape: f32[256,32], index: 1, kind: input, shape index: {}]
  %s2 = inlined_call_operand.hbm [shape: f32[256,512], index: 2, kind: input, shape index: {}]
  %s3 = inlined_call_operand.vmem [shape: bf16[32,128], index: 3, kind: input, shape index: {}]
  %s4 = inlined_call_operand.vmem [shape: f32[1,128], index: 4, kind: input, shape index: {}]
  %s5 = inlined_call_operand.vmem [shape: bf16[128,128], index: 5, kind: input, shape index: {}]
  %s6 = inlined_call_operand.vmem [shape: f32[1,128], index: 6, kind: input, shape index: {}]
  %s7 = inlined_call_operand.hbm [shape: bf16[128,128], index: 7, kind: input, shape index: {}]
  %s8 = inlined_call_operand.vmem [shape: f32[1,128], index: 8, kind: input, shape index: {}]
  %s9 = inlined_call_operand.vmem [shape: bf16[256,256], index: 9, kind: input, shape index: {}]
  %s10 = inlined_call_operand.vmem [shape: f32[1,256], index: 10, kind: input, shape index: {}]
  %s11 = inlined_call_operand.hbm [shape: bf16[256,256], index: 11, kind: input, shape index: {}]
  %s12 = inlined_call_operand.vmem [shape: f32[1,256], index: 12, kind: input, shape index: {}]
  %s13 = inlined_call_operand.hbm [shape: bf16[512,128], index: 13, kind: input, shape index: {}]
  %s14 = inlined_call_operand.vmem [shape: f32[1,128], index: 14, kind: input, shape index: {}]
  %s15 = inlined_call_operand.vmem [shape: f32[256,128], index: 15, kind: output, shape index: {}]
  %s16 = sld [smem:[#allocation0]]
  $region113: #{densenet_forward.1} parent=0
    _
  %s18 = ssub.s32 1, %s16
  %s19 = scalar_select 0, %s18, %s16
  $region1: #{densenet_forward.1} parent=0
    #allocation3 [shape = 'u8[512]{0}', space=smem, size = 0x200, scoped, tag = 'input window, operand 0, single buffered']
    #allocation4 [shape = 's32[2]{0}', space=sflag, size = 0x8, scoped, tag = 'scoped memory for densenet_forward.1']
    #allocation5 [shape = 's32[2]{0}', space=sflag, size = 0x8, scoped, tag = 'scoped memory for densenet_forward.1']
    #allocation6 [shape = 'u8[524288]{0}', space=vmem, size = 0x80000, scoped, tag = 'input window, operand 2']
    #allocation7 [shape = 'u8[32768]{0}', space=vmem, size = 0x8000, scoped, tag = 'input window, operand 7, single buffered']
    #allocation8 [shape = 's32[1]{0}', space=sflag, size = 0x4, scoped, tag = 'scoped memory for densenet_forward.1']
    #allocation9 [shape = 'u8[131072]{0}', space=vmem, size = 0x20000, scoped, tag = 'input window, operand 11, single buffered']
    #allocation10 [shape = 'u8[131072]{0}', space=vmem, size = 0x20000, scoped, tag = 'input window, operand 13, single buffered']
    #allocation11 [shape = 's32[1]{0}', space=sflag, size = 0x4, scoped, tag = 'scoped memory for densenet_forward.1']
    %20 = vsyncpa [#allocation5], 0
    %21 = vsyncpa [#allocation4], 0
    %s22 = scalar_lea.sflag [#allocation4], 1
    %23 = vsyncpa %s22, 0
    %24 = vsyncpa [#allocation8], 0
    %25 = vsyncpa [#allocation11], 0
    loop: start=0, step=1, limit=4
    $region2: #{densenet_forward.1} parent=1 // loop_pre_header
      _
    $region3: #{densenet_forward.1} parent=1 // loop_header
      %s27 = sphi 0, %s31
      %p28 = scmp.ge.s32.totalorder %s27, 4
      %s35 = sphi 0, %s35
      %s37 = sphi 0, %s35
      %s38 = sphi 0, %s37
      %s52 = sphi 0, %s38
      %s58 = sphi 0, %s60
      %s61 = sphi 0, %s58
      %s62 = sphi 0, %s61
      %s78 = sphi 0, %s62
      %s84 = sphi 0, %s86
      %s87 = sphi 0, %s84
      %s88 = sphi 0, %s87
      %s104 = sphi 0, %s88
      %s108 = sphi 0, %s108
      %s110 = sphi 0, %s108
      %s111 = sphi 0, %s110
      %s125 = sphi 0, %s111
      %s129 = sphi 0, %s129
      %s131 = sphi 0, %s129
      %s132 = sphi 0, %s131
      %s146 = sphi 0, %s132
      %s150 = sphi 0, %s150
      %s152 = sphi 0, %s150
      %s153 = sphi 0, %s152
      %s167 = sphi 0, %s153
      %s171 = sphi 0, %s171
      %s173 = sphi 0, %s171
      %s174 = sphi 0, %s173
      %s188 = sphi 0, %s174
      %s192 = sphi 0, %s192
      %s194 = sphi 0, %s192
      %s195 = sphi 0, %s194
      %s209 = sphi 0, %s195
      %s213 = sphi 0, %s213
      %s215 = sphi 0, %s213
      %s216 = sphi 0, %s215
      %s230 = sphi 0, %s216
      %s234 = sphi 0, %s234
      %s236 = sphi 0, %s234
      %s237 = sphi 0, %s236
      %s251 = sphi 0, %s237
      %s255 = sphi 0, %s255
      %s257 = sphi 0, %s255
      %s258 = sphi 0, %s257
      %s272 = sphi 0, %s258
      %s276 = sphi 0, %s276
      %s278 = sphi 0, %s276
      %s279 = sphi 0, %s278
      %s293 = sphi 0, %s279
      %s297 = sphi 0, %s297
      %s299 = sphi 0, %s297
      %s300 = sphi 0, %s299
      %s314 = sphi 0, %s300
      %s318 = sphi 0, %s318
      %s320 = sphi 0, %s318
      %s321 = sphi 0, %s320
      %s335 = sphi 0, %s321
      %s339 = sphi 0, %s339
      %s341 = sphi 0, %s339
      %s342 = sphi 0, %s341
      %s356 = sphi 0, %s342
      %s362 = sphi 0, %s364
      %s365 = sphi 0, %s362
      %s366 = sphi 0, %s365
      %s382 = sphi 0, %s366
    $region4: #{densenet_forward.1} parent=1 // loop_header_branch
      %30 = sbr.rel (%p28) target = $region8
    $region5: #{densenet_forward.1} parent=1 // loop_body
      %s32 = ssub.s32 %s27, 1
      %s33 = ssub.s32 %s27, 2
      %s34 = sadd.s32 %s27, 1
      %s36 = sadd.s32 %s35, 1
      %p39 = scmp.eq.s32.totalorder %s27, 1
      %p40 = scmp.ne.s32.totalorder %s35, %s37
      %p41 = scmp.eq.s32.totalorder %s27, 0
      %p42 = por %p40, %p41
      %p43 = scmp.ne.s32.totalorder %s35, %s37
      %p44 = scmp.eq.s32.totalorder %s32, 1
      %p45 = por %p43, %p44
      %p46 = scmp.ne.s32.totalorder %s37, %s38
      %p47 = scmp.eq.s32.totalorder %s32, 0
      %p48 = por %p46, %p47
      %p49 = scmp.ne.s32.totalorder %s37, %s38
      %p50 = scmp.eq.s32.totalorder %s33, 1
      %p51 = por %p49, %p50
      %p53 = scmp.ne.s32.totalorder %s38, %s52
      %p54 = scmp.eq.s32.totalorder %s33, 0
      %p55 = por %p53, %p54
      %s56 = ssub.s32 %s27, %s34
      %p57 = scmp.eq.s32.totalorder %s56, 0
      %s59 = sadd.s32 %s58, 1
      %s60 = scalar_select %p57, %s58, %s59
      %p63 = pneg %p57
      %p64 = scmp.eq.s32.totalorder %s27, 1
      %p65 = por %p63, %p64
      %p66 = scmp.ne.s32.totalorder %s58, %s61
      %p67 = scmp.eq.s32.totalorder %s27, 0
      %p68 = por %p66, %p67
      %p69 = scmp.ne.s32.totalorder %s58, %s61
      %p70 = scmp.eq.s32.totalorder %s32, 1
      %p71 = por %p69, %p70
      %p72 = scmp.ne.s32.totalorder %s61, %s62
      %p73 = scmp.eq.s32.totalorder %s32, 0
      %p74 = por %p72, %p73
      %p75 = scmp.ne.s32.totalorder %s61, %s62
      %p76 = scmp.eq.s32.totalorder %s33, 1
      %p77 = por %p75, %p76
      %p79 = scmp.ne.s32.totalorder %s62, %s78
      %p80 = scmp.eq.s32.totalorder %s33, 0
      %p81 = por %p79, %p80
      %s82 = ssub.s32 %s27, %s34
      %p83 = scmp.eq.s32.totalorder %s82, 0
      %s85 = sadd.s32 %s84, 1
      %s86 = scalar_select %p83, %s84, %s85
      %p89 = pneg %p83
      %p90 = scmp.eq.s32.totalorder %s27, 1
      %p91 = por %p89, %p90
      %p92 = scmp.ne.s32.totalorder %s84, %s87
      %p93 = scmp.eq.s32.totalorder %s27, 0
      %p94 = por %p92, %p93
      %p95 = scmp.ne.s32.totalorder %s84, %s87
      %p96 = scmp.eq.s32.totalorder %s32, 1
      %p97 = por %p95, %p96
      %p98 = scmp.ne.s32.totalorder %s87, %s88
      %p99 = scmp.eq.s32.totalorder %s32, 0
      %p100 = por %p98, %p99
      %p101 = scmp.ne.s32.totalorder %s87, %s88
      %p102 = scmp.eq.s32.totalorder %s33, 1
      %p103 = por %p101, %p102
      %p105 = scmp.ne.s32.totalorder %s88, %s104
      %p106 = scmp.eq.s32.totalorder %s33, 0
      %p107 = por %p105, %p106
      %s109 = sadd.s32 %s108, 1
      %p112 = scmp.eq.s32.totalorder %s27, 1
      %p113 = scmp.ne.s32.totalorder %s108, %s110
      %p114 = scmp.eq.s32.totalorder %s27, 0
      %p115 = por %p113, %p114
      %p116 = scmp.ne.s32.totalorder %s108, %s110
      %p117 = scmp.eq.s32.totalorder %s32, 1
      %p118 = por %p116, %p117
      %p119 = scmp.ne.s32.totalorder %s110, %s111
      %p120 = scmp.eq.s32.totalorder %s32, 0
      %p121 = por %p119, %p120
      %p122 = scmp.ne.s32.totalorder %s110, %s111
      %p123 = scmp.eq.s32.totalorder %s33, 1
      %p124 = por %p122, %p123
      %p126 = scmp.ne.s32.totalorder %s111, %s125
      %p127 = scmp.eq.s32.totalorder %s33, 0
      %p128 = por %p126, %p127
      %s130 = sadd.s32 %s129, 1
      %p133 = scmp.eq.s32.totalorder %s27, 1
      %p134 = scmp.ne.s32.totalorder %s129, %s131
      %p135 = scmp.eq.s32.totalorder %s27, 0
      %p136 = por %p134, %p135
      %p137 = scmp.ne.s32.totalorder %s129, %s131
      %p138 = scmp.eq.s32.totalorder %s32, 1
      %p139 = por %p137, %p138
      %p140 = scmp.ne.s32.totalorder %s131, %s132
      %p141 = scmp.eq.s32.totalorder %s32, 0
      %p142 = por %p140, %p141
      %p143 = scmp.ne.s32.totalorder %s131, %s132
      %p144 = scmp.eq.s32.totalorder %s33, 1
      %p145 = por %p143, %p144
      %p147 = scmp.ne.s32.totalorder %s132, %s146
      %p148 = scmp.eq.s32.totalorder %s33, 0
      %p149 = por %p147, %p148
      %s151 = sadd.s32 %s150, 1
      %p154 = scmp.eq.s32.totalorder %s27, 1
      %p155 = scmp.ne.s32.totalorder %s150, %s152
      %p156 = scmp.eq.s32.totalorder %s27, 0
      %p157 = por %p155, %p156
      %p158 = scmp.ne.s32.totalorder %s150, %s152
      %p159 = scmp.eq.s32.totalorder %s32, 1
      %p160 = por %p158, %p159
      %p161 = scmp.ne.s32.totalorder %s152, %s153
      %p162 = scmp.eq.s32.totalorder %s32, 0
      %p163 = por %p161, %p162
      %p164 = scmp.ne.s32.totalorder %s152, %s153
      %p165 = scmp.eq.s32.totalorder %s33, 1
      %p166 = por %p164, %p165
      %p168 = scmp.ne.s32.totalorder %s153, %s167
      %p169 = scmp.eq.s32.totalorder %s33, 0
      %p170 = por %p168, %p169
      %s172 = sadd.s32 %s171, 1
      %p175 = scmp.eq.s32.totalorder %s27, 1
      %p176 = scmp.ne.s32.totalorder %s171, %s173
      %p177 = scmp.eq.s32.totalorder %s27, 0
      %p178 = por %p176, %p177
      %p179 = scmp.ne.s32.totalorder %s171, %s173
      %p180 = scmp.eq.s32.totalorder %s32, 1
      %p181 = por %p179, %p180
      %p182 = scmp.ne.s32.totalorder %s173, %s174
      %p183 = scmp.eq.s32.totalorder %s32, 0
      %p184 = por %p182, %p183
      %p185 = scmp.ne.s32.totalorder %s173, %s174
      %p186 = scmp.eq.s32.totalorder %s33, 1
      %p187 = por %p185, %p186
      %p189 = scmp.ne.s32.totalorder %s174, %s188
      %p190 = scmp.eq.s32.totalorder %s33, 0
      %p191 = por %p189, %p190
      %s193 = sadd.s32 %s192, 1
      %p196 = scmp.eq.s32.totalorder %s27, 1
      %p197 = scmp.ne.s32.totalorder %s192, %s194
      %p198 = scmp.eq.s32.totalorder %s27, 0
      %p199 = por %p197, %p198
      %p200 = scmp.ne.s32.totalorder %s192, %s194
      %p201 = scmp.eq.s32.totalorder %s32, 1
      %p202 = por %p200, %p201
      %p203 = scmp.ne.s32.totalorder %s194, %s195
      %p204 = scmp.eq.s32.totalorder %s32, 0
      %p205 = por %p203, %p204
      %p206 = scmp.ne.s32.totalorder %s194, %s195
      %p207 = scmp.eq.s32.totalorder %s33, 1
      %p208 = por %p206, %p207
      %p210 = scmp.ne.s32.totalorder %s195, %s209
      %p211 = scmp.eq.s32.totalorder %s33, 0
      %p212 = por %p210, %p211
      %s214 = sadd.s32 %s213, 1
      %p217 = scmp.eq.s32.totalorder %s27, 1
      %p218 = scmp.ne.s32.totalorder %s213, %s215
      %p219 = scmp.eq.s32.totalorder %s27, 0
      %p220 = por %p218, %p219
      %p221 = scmp.ne.s32.totalorder %s213, %s215
      %p222 = scmp.eq.s32.totalorder %s32, 1
      %p223 = por %p221, %p222
      %p224 = scmp.ne.s32.totalorder %s215, %s216
      %p225 = scmp.eq.s32.totalorder %s32, 0
      %p226 = por %p224, %p225
      %p227 = scmp.ne.s32.totalorder %s215, %s216
      %p228 = scmp.eq.s32.totalorder %s33, 1
      %p229 = por %p227, %p228
      %p231 = scmp.ne.s32.totalorder %s216, %s230
      %p232 = scmp.eq.s32.totalorder %s33, 0
      %p233 = por %p231, %p232
      %s235 = sadd.s32 %s234, 1
      %p238 = scmp.eq.s32.totalorder %s27, 1
      %p239 = scmp.ne.s32.totalorder %s234, %s236
      %p240 = scmp.eq.s32.totalorder %s27, 0
      %p241 = por %p239, %p240
      %p242 = scmp.ne.s32.totalorder %s234, %s236
      %p243 = scmp.eq.s32.totalorder %s32, 1
      %p244 = por %p242, %p243
      %p245 = scmp.ne.s32.totalorder %s236, %s237
      %p246 = scmp.eq.s32.totalorder %s32, 0
      %p247 = por %p245, %p246
      %p248 = scmp.ne.s32.totalorder %s236, %s237
      %p249 = scmp.eq.s32.totalorder %s33, 1
      %p250 = por %p248, %p249
      %p252 = scmp.ne.s32.totalorder %s237, %s251
      %p253 = scmp.eq.s32.totalorder %s33, 0
      %p254 = por %p252, %p253
      %s256 = sadd.s32 %s255, 1
      %p259 = scmp.eq.s32.totalorder %s27, 1
      %p260 = scmp.ne.s32.totalorder %s255, %s257
      %p261 = scmp.eq.s32.totalorder %s27, 0
      %p262 = por %p260, %p261
      %p263 = scmp.ne.s32.totalorder %s255, %s257
      %p264 = scmp.eq.s32.totalorder %s32, 1
      %p265 = por %p263, %p264
      %p266 = scmp.ne.s32.totalorder %s257, %s258
      %p267 = scmp.eq.s32.totalorder %s32, 0
      %p268 = por %p266, %p267
      %p269 = scmp.ne.s32.totalorder %s257, %s258
      %p270 = scmp.eq.s32.totalorder %s33, 1
      %p271 = por %p269, %p270
      %p273 = scmp.ne.s32.totalorder %s258, %s272
      %p274 = scmp.eq.s32.totalorder %s33, 0
      %p275 = por %p273, %p274
      %s277 = sadd.s32 %s276, 1
      %p280 = scmp.eq.s32.totalorder %s27, 1
      %p281 = scmp.ne.s32.totalorder %s276, %s278
      %p282 = scmp.eq.s32.totalorder %s27, 0
      %p283 = por %p281, %p282
      %p284 = scmp.ne.s32.totalorder %s276, %s278
      %p285 = scmp.eq.s32.totalorder %s32, 1
      %p286 = por %p284, %p285
      %p287 = scmp.ne.s32.totalorder %s278, %s279
      %p288 = scmp.eq.s32.totalorder %s32, 0
      %p289 = por %p287, %p288
      %p290 = scmp.ne.s32.totalorder %s278, %s279
      %p291 = scmp.eq.s32.totalorder %s33, 1
      %p292 = por %p290, %p291
      %p294 = scmp.ne.s32.totalorder %s279, %s293
      %p295 = scmp.eq.s32.totalorder %s33, 0
      %p296 = por %p294, %p295
      %s298 = sadd.s32 %s297, 1
      %p301 = scmp.eq.s32.totalorder %s27, 1
      %p302 = scmp.ne.s32.totalorder %s297, %s299
      %p303 = scmp.eq.s32.totalorder %s27, 0
      %p304 = por %p302, %p303
      %p305 = scmp.ne.s32.totalorder %s297, %s299
      %p306 = scmp.eq.s32.totalorder %s32, 1
      %p307 = por %p305, %p306
      %p308 = scmp.ne.s32.totalorder %s299, %s300
      %p309 = scmp.eq.s32.totalorder %s32, 0
      %p310 = por %p308, %p309
      %p311 = scmp.ne.s32.totalorder %s299, %s300
      %p312 = scmp.eq.s32.totalorder %s33, 1
      %p313 = por %p311, %p312
      %p315 = scmp.ne.s32.totalorder %s300, %s314
      %p316 = scmp.eq.s32.totalorder %s33, 0
      %p317 = por %p315, %p316
      %s319 = sadd.s32 %s318, 1
      %p322 = scmp.eq.s32.totalorder %s27, 1
      %p323 = scmp.ne.s32.totalorder %s318, %s320
      %p324 = scmp.eq.s32.totalorder %s27, 0
      %p325 = por %p323, %p324
      %p326 = scmp.ne.s32.totalorder %s318, %s320
      %p327 = scmp.eq.s32.totalorder %s32, 1
      %p328 = por %p326, %p327
      %p329 = scmp.ne.s32.totalorder %s320, %s321
      %p330 = scmp.eq.s32.totalorder %s32, 0
      %p331 = por %p329, %p330
      %p332 = scmp.ne.s32.totalorder %s320, %s321
      %p333 = scmp.eq.s32.totalorder %s33, 1
      %p334 = por %p332, %p333
      %p336 = scmp.ne.s32.totalorder %s321, %s335
      %p337 = scmp.eq.s32.totalorder %s33, 0
      %p338 = por %p336, %p337
      %s340 = sadd.s32 %s339, 1
      %p343 = scmp.eq.s32.totalorder %s27, 1
      %p344 = scmp.ne.s32.totalorder %s339, %s341
      %p345 = scmp.eq.s32.totalorder %s27, 0
      %p346 = por %p344, %p345
      %p347 = scmp.ne.s32.totalorder %s339, %s341
      %p348 = scmp.eq.s32.totalorder %s32, 1
      %p349 = por %p347, %p348
      %p350 = scmp.ne.s32.totalorder %s341, %s342
      %p351 = scmp.eq.s32.totalorder %s32, 0
      %p352 = por %p350, %p351
      %p353 = scmp.ne.s32.totalorder %s341, %s342
      %p354 = scmp.eq.s32.totalorder %s33, 1
      %p355 = por %p353, %p354
      %p357 = scmp.ne.s32.totalorder %s342, %s356
      %p358 = scmp.eq.s32.totalorder %s33, 0
      %p359 = por %p357, %p358
      %s360 = ssub.s32 %s27, %s34
      %p361 = scmp.eq.s32.totalorder %s360, 0
      %s363 = sadd.s32 %s362, 1
      %s364 = scalar_select %p361, %s362, %s363
      %p367 = pneg %p361
      %p368 = scmp.eq.s32.totalorder %s27, 1
      %p369 = por %p367, %p368
      %p370 = scmp.ne.s32.totalorder %s362, %s365
      %p371 = scmp.eq.s32.totalorder %s27, 0
      %p372 = por %p370, %p371
      %p373 = scmp.ne.s32.totalorder %s362, %s365
      %p374 = scmp.eq.s32.totalorder %s32, 1
      %p375 = por %p373, %p374
      %p376 = scmp.ne.s32.totalorder %s365, %s366
      %p377 = scmp.eq.s32.totalorder %s32, 0
      %p378 = por %p376, %p377
      %p379 = scmp.ne.s32.totalorder %s365, %s366
      %p380 = scmp.eq.s32.totalorder %s33, 1
      %p381 = por %p379, %p380
      %p383 = scmp.ne.s32.totalorder %s366, %s382
      %p384 = scmp.eq.s32.totalorder %s33, 0
      %p385 = por %p383, %p384
      %p386 = scmp.le.s32.totalorder 1, %s27
      %p387 = scmp.lt.s32.totalorder %s27, 3
      %p388 = pnand %p386, %p387
      %p389 = pneg %p388
      // Predicated region
      $region9: #{densenet_forward.1} parent=5 // pred_check
        _
      $region10: #{densenet_forward.1} parent=5 // pred_check_branch
        %391 = sbr.rel (%p388) target = $region12
      $region11: #{densenet_forward.1} parent=5 // pred_region
        %s392 = ssub.s32 %s27, 1
        // Predicated region
        $region13: #{densenet_forward.1} parent=11 // pred_check
          %p393 = pneg %p48
        $region14: #{densenet_forward.1} parent=11 // pred_check_branch
          %395 = sbr.rel (%p393) target = $region16
        $region15: #{densenet_forward.1} parent=11 // pred_region
          %s397 = ssub.s32 16, 16
          %398 = vsyncadd [#allocation5], %s397
          %s400 = sshll.u32 %s0, 4
          %s401 = int_to_ptr.vmem [resolvable:$true] %s400
          %403 = dma.vmem_to_smem %s401, 16, [#allocation3], [#allocation5]
        $region16: #{densenet_forward.1} parent=11 // pred_fallthru
          _
        // Predicated region
        $region17: #{densenet_forward.1} parent=11 // pred_check
          %p404 = pneg %p121
        $region18: #{densenet_forward.1} parent=11 // pred_check_branch
          %406 = sbr.rel (%p404) target = $region20
        $region19: #{densenet_forward.1} parent=11 // pred_region
          _
        $region20: #{densenet_forward.1} parent=11 // pred_fallthru
          _
        // Predicated region
        $region21: #{densenet_forward.1} parent=11 // pred_check
          %p407 = pneg %p142
        $region22: #{densenet_forward.1} parent=11 // pred_check_branch
          %409 = sbr.rel (%p407) target = $region24
        $region23: #{densenet_forward.1} parent=11 // pred_region
          _
        $region24: #{densenet_forward.1} parent=11 // pred_fallthru
          _
        // Predicated region
        $region25: #{densenet_forward.1} parent=11 // pred_check
          %p410 = pneg %p163
        $region26: #{densenet_forward.1} parent=11 // pred_check_branch
          %412 = sbr.rel (%p410) target = $region28
        $region27: #{densenet_forward.1} parent=11 // pred_region
          _
        $region28: #{densenet_forward.1} parent=11 // pred_fallthru
          _
        // Predicated region
        $region29: #{densenet_forward.1} parent=11 // pred_check
          %p413 = pneg %p184
        $region30: #{densenet_forward.1} parent=11 // pred_check_branch
          %415 = sbr.rel (%p413) target = $region32
        $region31: #{densenet_forward.1} parent=11 // pred_region
          _
        $region32: #{densenet_forward.1} parent=11 // pred_fallthru
          _
        // Predicated region
        $region33: #{densenet_forward.1} parent=11 // pred_check
          %p416 = pneg %p205
        $region34: #{densenet_forward.1} parent=11 // pred_check_branch
          %418 = sbr.rel (%p416) target = $region36
        $region35: #{densenet_forward.1} parent=11 // pred_region
          %s420 = ssub.s32 1024, 1024
          %421 = vsyncadd [#allocation8], %s420
          %s422 = sshll.u32 [#allocation7], 4
          %s423 = int_to_ptr.vmem [resolvable:$true] %s422
          %428 = dma.hbm_to_vmem [thread:$0]  %s7, 1024, %s423, [#allocation8], 64, 64, 4
        $region36: #{densenet_forward.1} parent=11 // pred_fallthru
          _
        // Predicated region
        $region37: #{densenet_forward.1} parent=11 // pred_check
          %p429 = pneg %p226
        $region38: #{densenet_forward.1} parent=11 // pred_check_branch
          %431 = sbr.rel (%p429) target = $region40
        $region39: #{densenet_forward.1} parent=11 // pred_region
          _
        $region40: #{densenet_forward.1} parent=11 // pred_fallthru
          _
        // Predicated region
        $region41: #{densenet_forward.1} parent=11 // pred_check
          %p432 = pneg %p247
        $region42: #{densenet_forward.1} parent=11 // pred_check_branch
          %434 = sbr.rel (%p432) target = $region44
        $region43: #{densenet_forward.1} parent=11 // pred_region
          _
        $region44: #{densenet_forward.1} parent=11 // pred_fallthru
          _
        // Predicated region
        $region45: #{densenet_forward.1} parent=11 // pred_check
          %p435 = pneg %p268
        $region46: #{densenet_forward.1} parent=11 // pred_check_branch
          %437 = sbr.rel (%p435) target = $region48
        $region47: #{densenet_forward.1} parent=11 // pred_region
          _
        $region48: #{densenet_forward.1} parent=11 // pred_fallthru
          _
        // Predicated region
        $region49: #{densenet_forward.1} parent=11 // pred_check
          %p438 = pneg %p289
        $region50: #{densenet_forward.1} parent=11 // pred_check_branch
          %440 = sbr.rel (%p438) target = $region52
        $region51: #{densenet_forward.1} parent=11 // pred_region
          %s442 = ssub.s32 4096, 4096
          %443 = vsyncadd [#allocation8], %s442
          %s444 = sshll.u32 [#allocation9], 4
          %s445 = int_to_ptr.vmem [resolvable:$true] %s444
          %450 = dma.hbm_to_vmem [thread:$0]  %s11, 4096, %s445, [#allocation8], 128, 128, 8
        $region52: #{densenet_forward.1} parent=11 // pred_fallthru
          _
        // Predicated region
        $region53: #{densenet_forward.1} parent=11 // pred_check
          %p451 = pneg %p310
        $region54: #{densenet_forward.1} parent=11 // pred_check_branch
          %453 = sbr.rel (%p451) target = $region56
        $region55: #{densenet_forward.1} parent=11 // pred_region
          _
        $region56: #{densenet_forward.1} parent=11 // pred_fallthru
          _
        // Predicated region
        $region57: #{densenet_forward.1} parent=11 // pred_check
          %p454 = pneg %p331
        $region58: #{densenet_forward.1} parent=11 // pred_check_branch
          %456 = sbr.rel (%p454) target = $region60
        $region59: #{densenet_forward.1} parent=11 // pred_region
          %s458 = ssub.s32 4096, 4096
          %459 = vsyncadd [#allocation11], %s458
          %s460 = sshll.u32 [#allocation10], 4
          %s461 = int_to_ptr.vmem [resolvable:$true] %s460
          %466 = dma.hbm_to_vmem [thread:$0]  %s13, 4096, %s461, [#allocation11], 64, 64, 4
        $region60: #{densenet_forward.1} parent=11 // pred_fallthru
          _
        // Predicated region
        $region61: #{densenet_forward.1} parent=11 // pred_check
          %p467 = pneg %p352
        $region62: #{densenet_forward.1} parent=11 // pred_check_branch
          %469 = sbr.rel (%p467) target = $region64
        $region63: #{densenet_forward.1} parent=11 // pred_region
          _
        $region64: #{densenet_forward.1} parent=11 // pred_fallthru
          _
      $region12: #{densenet_forward.1} parent=5 // pred_fallthru
        _
      %p470 = scmp.lt.s32.totalorder %s27, 2
      // Predicated region
      $region65: #{densenet_forward.1} parent=5 // pred_check
        %p471 = pneg %p470
      $region66: #{densenet_forward.1} parent=5 // pred_check_branch
        %473 = sbr.rel (%p471) target = $region68
      $region67: #{densenet_forward.1} parent=5 // pred_region
        // Predicated region
        $region69: #{densenet_forward.1} parent=67 // pred_check
          %p474 = pneg %p68
        $region70: #{densenet_forward.1} parent=67 // pred_check_branch
          %476 = sbr.rel (%p474) target = $region72
        $region71: #{densenet_forward.1} parent=67 // pred_region
          %s477 = smul.u32 16, %s27
          %p478 = scmp.lt.s32.totalorder %s477, 31
          %s479 = scalar_select %p478, %s477, 31
          %s480 = smul.addr %s479, 8
          %s481 = scalar_lea.vmem %s1, %s480
          %s482 = smul.u32 16, %s27
        $region72: #{densenet_forward.1} parent=67 // pred_fallthru
          _
        // Predicated region
        $region73: #{densenet_forward.1} parent=67 // pred_check
          %p483 = pneg %p94
        $region74: #{densenet_forward.1} parent=67 // pred_check_branch
          %485 = sbr.rel (%p483) target = $region76
        $region75: #{densenet_forward.1} parent=67 // pred_region
          %s486 = sand.u32 %s84, 1
          %s487 = scalar_lea.sflag [#allocation4], %s486
          %s488 = sand.u32 %s84, 1
          %s489 = smul.addr %s488, 512
          %s490 = scalar_lea.vmem [#allocation6], %s489
          %s491 = smul.u32 16, %s27
          %s493 = ssub.s32 8192, 8192
          %494 = vsyncadd %s487, %s493
          %s495 = smul.addr %s491, 4
          %s496 = smul.addr %s495, 128
          %s497 = scalar_lea.hbm %s2, %s496
          %s498 = sshll.u32 %s490, 4
          %s499 = int_to_ptr.vmem [resolvable:$true] %s498
          %504 = dma.hbm_to_vmem [thread:$0]  %s497, 8192, %s499, %s487, 512, 512, 32
        $region76: #{densenet_forward.1} parent=67 // pred_fallthru
          _
      $region68: #{densenet_forward.1} parent=5 // pred_fallthru
        _
      %p505 = scmp.le.s32.totalorder 1, %s27
      %p506 = scmp.lt.s32.totalorder %s27, 3
      %p507 = pnand %p505, %p506
      %p508 = pneg %p507
      // Predicated region
      $region77: #{densenet_forward.1} parent=5 // pred_check
        _
      $region78: #{densenet_forward.1} parent=5 // pred_check_branch
        %510 = sbr.rel (%p507) target = $region80
      $region79: #{densenet_forward.1} parent=5 // pred_region
        %s511 = ssub.s32 %s27, 1
        // Predicated region
        $region81: #{densenet_forward.1} parent=79 // pred_check
          %p512 = pneg %p48
        $region82: #{densenet_forward.1} parent=79 // pred_check_branch
          %514 = sbr.rel (%p512) target = $region84
        $region83: #{densenet_forward.1} parent=79 // pred_region
          %515 = dma.done [#allocation5], 16
        $region84: #{densenet_forward.1} parent=79 // pred_fallthru
          _
        %s516 = sand.u32 %s87, 1
        %s517 = scalar_lea.sflag [#allocation4], %s516
        %s518 = sand.u32 %s87, 1
        %s519 = smul.addr %s518, 512
        %s520 = scalar_lea.vmem [#allocation6], %s519
        // Predicated region
        $region85: #{densenet_forward.1} parent=79 // pred_check
          %p521 = pneg %p100
        $region86: #{densenet_forward.1} parent=79 // pred_check_branch
          %523 = sbr.rel (%p521) target = $region88
        $region87: #{densenet_forward.1} parent=79 // pred_region
          %524 = dma.done %s517, 8192
        $region88: #{densenet_forward.1} parent=79 // pred_fallthru
          _
        // Predicated region
        $region89: #{densenet_forward.1} parent=79 // pred_check
          %p525 = pneg %p205
        $region90: #{densenet_forward.1} parent=79 // pred_check_branch
          %527 = sbr.rel (%p525) target = $region92
        $region91: #{densenet_forward.1} parent=79 // pred_region
          %528 = dma.done [#allocation8], 1024
        $region92: #{densenet_forward.1} parent=79 // pred_fallthru
          _
        // Predicated region
        $region93: #{densenet_forward.1} parent=79 // pred_check
          %p529 = pneg %p289
        $region94: #{densenet_forward.1} parent=79 // pred_check_branch
          %531 = sbr.rel (%p529) target = $region96
        $region95: #{densenet_forward.1} parent=79 // pred_region
          %532 = dma.done [#allocation8], 4096
        $region96: #{densenet_forward.1} parent=79 // pred_fallthru
          _
        // Predicated region
        $region97: #{densenet_forward.1} parent=79 // pred_check
          %p533 = pneg %p331
        $region98: #{densenet_forward.1} parent=79 // pred_check_branch
          %535 = sbr.rel (%p533) target = $region100
        $region99: #{densenet_forward.1} parent=79 // pred_region
          %536 = dma.done [#allocation11], 4096
        $region100: #{densenet_forward.1} parent=79 // pred_fallthru
          _
        %537 = sfence
        %p538 = pneg %p48
        %p539 = pneg %p45
        %s540 = smul.u32 16, %s32
        %p541 = scmp.lt.s32.totalorder %s540, 31
        %s542 = scalar_select %p541, %s540, 31
        %s543 = smul.addr %s542, 8
        %s544 = scalar_lea.vmem %s1, %s543
        %p545 = pneg %p74
        %p546 = pneg %p71
        %s547 = sand.u32 %s87, 1
        %s548 = scalar_lea.sflag [#allocation4], %s547
        %s549 = sand.u32 %s87, 1
        %s550 = smul.addr %s549, 512
        %s551 = scalar_lea.vmem [#allocation6], %s550
        %p552 = pneg %p100
        %p553 = pneg %p97
        %p554 = pneg %p121
        %p555 = pneg %p118
        %p556 = pneg %p142
        %p557 = pneg %p139
        %p558 = pneg %p163
        %p559 = pneg %p160
        %p560 = pneg %p184
        %p561 = pneg %p181
        %p562 = pneg %p205
        %p563 = pneg %p202
        %p564 = pneg %p226
        %p565 = pneg %p223
        %p566 = pneg %p247
        %p567 = pneg %p244
        %p568 = pneg %p268
        %p569 = pneg %p265
        %p570 = pneg %p289
        %p571 = pneg %p286
        %p572 = pneg %p310
        %p573 = pneg %p307
        %p574 = pneg %p331
        %p575 = pneg %p328
        %p576 = pneg %p352
        %p577 = pneg %p349
        %p578 = pneg %p378
        %p579 = pneg %p375
        %s580 = smul.u32 16, %s32
        %p581 = scmp.lt.s32.totalorder %s580, 31
        %s582 = scalar_select %p581, %s580, 31
        %s583 = smul.addr %s582, 8
        %s584 = scalar_lea.vmem %s15, %s583
        %s585 = smul.u32 16, %s32
        %p586 = scmp.lt.s32.totalorder %s585, 31
        %s587 = scalar_select %p586, %s585, 31
        %s588 = smul.addr %s587, 8
        %s589 = scalar_lea.vmem %s1, %s588
        %s590 = smul.u32 16, %s32
        %s591 = smul.u32 16, %s32
        %s592 = smul.u32 16, %s32
        %p593 = scmp.lt.s32.totalorder %s592, 31
        %s594 = scalar_select %p593, %s592, 31
        %s595 = smul.addr %s594, 8
        %s596 = scalar_lea.vmem %s15, %s595
        %s597 = smul.u32 16, %s32
        %v599 = vld [vmem:[%s589] sm:$0xff]
        %v600 = vld [vmem:[%s589 + $0x8] sm:$0xff]
        %v601 = vld [vmem:[%s589 + $0x10] sm:$0xff]
        %v602 = vld [vmem:[%s589 + $0x18] sm:$0xff]
        %v603 = vld [vmem:[%s589 + $0x20] sm:$0xff]
        %v604 = vld [vmem:[%s589 + $0x28] sm:$0xff]
        %v605 = vld [vmem:[%s589 + $0x30] sm:$0xff]
        %v606 = vld [vmem:[%s589 + $0x38] sm:$0xff]
        %v607 = vld [vmem:[%s589 + $0x40] sm:$0xff]
        %v608 = vld [vmem:[%s589 + $0x48] sm:$0xff]
        %v609 = vld [vmem:[%s589 + $0x50] sm:$0xff]
        %v610 = vld [vmem:[%s589 + $0x58] sm:$0xff]
        %v611 = vld [vmem:[%s589 + $0x60] sm:$0xff]
        %v612 = vld [vmem:[%s589 + $0x68] sm:$0xff]
        %v613 = vld [vmem:[%s589 + $0x70] sm:$0xff]
        %v614 = vld [vmem:[%s589 + $0x78] sm:$0xff]
        %v615 = vpack.c.bf16 %v600, %v599
        %v616 = vpack.c.bf16 %v602, %v601
        %v617 = vpack.c.bf16 %v604, %v603
        %v618 = vpack.c.bf16 %v606, %v605
        %v619 = vpack.c.bf16 %v608, %v607
        %v620 = vpack.c.bf16 %v610, %v609
        %v621 = vpack.c.bf16 %v612, %v611
        %v622 = vpack.c.bf16 %v614, %v613
        %v623 = vld [vmem:[%s3] sm:$0xf]
        %v624 = vld [vmem:[%s3 + $0x4] sm:$0xf]
        %v625 = vld [vmem:[%s3 + $0x8] sm:$0xf]
        %v626 = vld [vmem:[%s3 + $0xc] sm:$0xf]
        %v627 = vld [vmem:[%s4] sm:$0x1]
        %v629 = vlaneseq
        %v630 = vshrl.u32 %v629, 7
        %v631 = vsub.s32 0, %v630
        %v632 = vrot.slane %v627, %v631
        %v638 = vunpack.c.l.b16 %v623
        %v639 = vunpack.c.l.b16 %v624
        %v640 = vunpack.c.l.b16 %v625
        %v641 = vunpack.c.l.b16 %v626
        %v642 = vpack.c.b16 %v639, %v638
        %v643 = vpack.c.b16 %v641, %v640
        %vm646 = vcmask 261120
        %v648 = vsel %vm646, %v615, 0
        %v651 = vsel %vm646, %v616, 0
        %v654 = vsel %vm646, %v617, 0
        %v657 = vsel %vm646, %v618, 0
        %v660 = vsel %vm646, %v619, 0
        %v663 = vsel %vm646, %v620, 0
        %v666 = vsel %vm646, %v621, 0
        %v669 = vsel %vm646, %v622, 0
        %671 = vmatprep.subr.bf16.mxu0 0
        %672 = vmatpush1.bf16.msra.mxu0 %v642
        %673 = vmatprep.subr.bf16.mxu0 0
        %674 = vmatpush1.bf16.msra.mxu0 %v643
        %675 = vmatprep.subr.bf16.mxu0 0
        %676 = vmatpush1.bf16.msra.mxu0 0
        %677 = vmatprep.subr.bf16.mxu0 0
        %678 = vmatpush1.bf16.msra.mxu0 0
        %679 = vmatprep.subr.bf16.mxu0 0
        %680 = vmatpush1.bf16.msra.mxu0 0
        %681 = vmatprep.subr.bf16.mxu0 0
        %682 = vmatpush1.bf16.msra.mxu0 0
        %683 = vmatprep.subr.bf16.mxu0 0
        %684 = vmatpush1.bf16.msra.mxu0 0
        %685 = vmatprep.subr.bf16.mxu0 0
        %686 = vmatpush1.bf16.msra.mxu0 0
        %687 = vmatprep.subr.bf16.mxu0 0
        %688 = vmatpush1.bf16.msra.mxu0 0
        %689 = vmatprep.subr.bf16.mxu0 0
        %690 = vmatpush1.bf16.msra.mxu0 0
        %691 = vmatprep.subr.bf16.mxu0 0
        %692 = vmatpush1.bf16.msra.mxu0 0
        %693 = vmatprep.subr.bf16.mxu0 0
        %694 = vmatpush1.bf16.msra.mxu0 0
        %695 = vmatprep.subr.bf16.mxu0 0
        %696 = vmatpush1.bf16.msra.mxu0 0
        %697 = vmatprep.subr.bf16.mxu0 0
        %698 = vmatpush1.bf16.msra.mxu0 0
        %699 = vmatprep.subr.bf16.mxu0 0
        %700 = vmatpush1.bf16.msra.mxu0 0
        %701 = vmatprep.subr.bf16.mxu0 0
        %702 = vmatpush1.bf16.msra.mxu0 0
        %703 = vmatprep.mubr.bf16.mxu0 0
        %704 = vmatmul.mubr.bf16.gmra.mrb[0].mxu0 %v648
        %v705 = vpop.f32.mrb[0].mxu0
        %v706 = vadd.f32 %v632, %v705
        %v707 = vpop.f32.mrb[0].mxu0
        %v708 = vpop.f32.mrb[0].mxu0
        %v709 = vadd.f32 %v632, %v708
        %v710 = vpop.f32.mrb[0].mxu0
        %711 = vmatprep.mubr.bf16.mxu0 0
        %712 = vmatmul.mubr.bf16.gmra.mrb[0].mxu0 %v651
        %v713 = vpop.f32.mrb[0].mxu0
        %v714 = vadd.f32 %v632, %v713
        %v715 = vpop.f32.mrb[0].mxu0
        %v716 = vpop.f32.mrb[0].mxu0
        %v717 = vadd.f32 %v632, %v716
        %v718 = vpop.f32.mrb[0].mxu0
        %719 = vmatprep.mubr.bf16.mxu0 0
        %720 = vmatmul.mubr.bf16.gmra.mrb[0].mxu0 %v654
        %v721 = vpop.f32.mrb[0].mxu0
        %v722 = vadd.f32 %v632, %v721
        %v723 = vpop.f32.mrb[0].mxu0
        %v724 = vpop.f32.mrb[0].mxu0
        %v725 = vadd.f32 %v632, %v724
        %v726 = vpop.f32.mrb[0].mxu0
        %727 = vmatprep.mubr.bf16.mxu0 0
        %728 = vmatmul.mubr.bf16.gmra.mrb[0].mxu0 %v657
        %v729 = vpop.f32.mrb[0].mxu0
        %v730 = vadd.f32 %v632, %v729
        %v731 = vpop.f32.mrb[0].mxu0
        %v732 = vpop.f32.mrb[0].mxu0
        %v733 = vadd.f32 %v632, %v732
        %v734 = vpop.f32.mrb[0].mxu0
        %735 = vmatprep.mubr.bf16.mxu0 0
        %736 = vmatmul.mubr.bf16.gmra.mrb[0].mxu0 %v660
        %v737 = vpop.f32.mrb[0].mxu0
        %v738 = vadd.f32 %v632, %v737
        %v739 = vpop.f32.mrb[0].mxu0
        %v740 = vpop.f32.mrb[0].mxu0
        %v741 = vadd.f32 %v632, %v740
        %v742 = vpop.f32.mrb[0].mxu0
        %743 = vmatprep.mubr.bf16.mxu0 0
        %744 = vmatmul.mubr.bf16.gmra.mrb[0].mxu0 %v663
        %v745 = vpop.f32.mrb[0].mxu0
        %v746 = vadd.f32 %v632, %v745
        %v747 = vpop.f32.mrb[0].mxu0
        %v748 = vpop.f32.mrb[0].mxu0
        %v749 = vadd.f32 %v632, %v748
        %v750 = vpop.f32.mrb[0].mxu0
        %751 = vmatprep.mubr.bf16.mxu0 0
        %752 = vmatmul.mubr.bf16.gmra.mrb[0].mxu0 %v666
        %v753 = vpop.f32.mrb[0].mxu0
        %v754 = vadd.f32 %v632, %v753
        %v755 = vpop.f32.mrb[0].mxu0
        %v756 = vpop.f32.mrb[0].mxu0
        %v757 = vadd.f32 %v632, %v756
        %v758 = vpop.f32.mrb[0].mxu0
        %759 = vmatprep.mubr.bf16.mxu0 0
        %760 = vmatmul.mubr.bf16.gmra.mrb[0].mxu0 %v669
        %v761 = vpop.f32.mrb[0].mxu0
        %v762 = vadd.f32 %v632, %v761
        %v763 = vpop.f32.mrb[0].mxu0
        %v764 = vpop.f32.mrb[0].mxu0
        %v765 = vadd.f32 %v632, %v764
        %v766 = vpop.f32.mrb[0].mxu0
        %767 = vdwg.mxu0
        %v768 = vadd.f32 %v706, 3.0
        %v769 = vadd.f32 %v709, 3.0
        %v770 = vadd.f32 %v714, 3.0
        %v771 = vadd.f32 %v717, 3.0
        %v772 = vadd.f32 %v722, 3.0
        %v773 = vadd.f32 %v725, 3.0
        %v774 = vadd.f32 %v730, 3.0
        %v775 = vadd.f32 %v733, 3.0
        %v776 = vadd.f32 %v738, 3.0
        %v777 = vadd.f32 %v741, 3.0
        %v778 = vadd.f32 %v746, 3.0
        %v779 = vadd.f32 %v749, 3.0
        %v780 = vadd.f32 %v754, 3.0
        %v781 = vadd.f32 %v757, 3.0
        %v782 = vadd.f32 %v762, 3.0
        %v783 = vadd.f32 %v765, 3.0
        %v784 = vmax.f32 %v768, 0.0
        %v785 = vmax.f32 %v769, 0.0
        %v786 = vmax.f32 %v770, 0.0
        %v787 = vmax.f32 %v771, 0.0
        %v788 = vmax.f32 %v772, 0.0
        %v789 = vmax.f32 %v773, 0.0
        %v790 = vmax.f32 %v774, 0.0
        %v791 = vmax.f32 %v775, 0.0
        %v792 = vmax.f32 %v776, 0.0
        %v793 = vmax.f32 %v777, 0.0
        %v794 = vmax.f32 %v778, 0.0
        %v795 = vmax.f32 %v779, 0.0
        %v796 = vmax.f32 %v780, 0.0
        %v797 = vmax.f32 %v781, 0.0
        %v798 = vmax.f32 %v782, 0.0
        %v799 = vmax.f32 %v783, 0.0
        %v800 = vmin.f32 %v784, 6.0
        %v801 = vmin.f32 %v785, 6.0
        %v802 = vmin.f32 %v786, 6.0
        %v803 = vmin.f32 %v787, 6.0
        %v804 = vmin.f32 %v788, 6.0
        %v805 = vmin.f32 %v789, 6.0
        %v806 = vmin.f32 %v790, 6.0
        %v807 = vmin.f32 %v791, 6.0
        %v808 = vmin.f32 %v792, 6.0
        %v809 = vmin.f32 %v793, 6.0
        %v810 = vmin.f32 %v794, 6.0
        %v811 = vmin.f32 %v795, 6.0
        %v812 = vmin.f32 %v796, 6.0
        %v813 = vmin.f32 %v797, 6.0
        %v814 = vmin.f32 %v798, 6.0
        %v815 = vmin.f32 %v799, 6.0
        %v816 = vmul.f32 %v800, 0.16666667
        %v817 = vmul.f32 %v801, 0.16666667
        %v818 = vmul.f32 %v802, 0.16666667
        %v819 = vmul.f32 %v803, 0.16666667
        %v820 = vmul.f32 %v804, 0.16666667
        %v821 = vmul.f32 %v805, 0.16666667
        %v822 = vmul.f32 %v806, 0.16666667
        %v823 = vmul.f32 %v807, 0.16666667
        %v824 = vmul.f32 %v808, 0.16666667
        %v825 = vmul.f32 %v809, 0.16666667
        %v826 = vmul.f32 %v810, 0.16666667
        %v827 = vmul.f32 %v811, 0.16666667
        %v828 = vmul.f32 %v812, 0.16666667
        %v829 = vmul.f32 %v813, 0.16666667
        %v830 = vmul.f32 %v814, 0.16666667
        %v831 = vmul.f32 %v815, 0.16666667
        %v832 = vmul.f32 %v816, %v706
        %v833 = vmul.f32 %v817, %v709
        %v834 = vmul.f32 %v818, %v714
        %v835 = vmul.f32 %v819, %v717
        %v836 = vmul.f32 %v820, %v722
        %v837 = vmul.f32 %v821, %v725
        %v838 = vmul.f32 %v822, %v730
        %v839 = vmul.f32 %v823, %v733
        %v840 = vmul.f32 %v824, %v738
        %v841 = vmul.f32 %v825, %v741
        %v842 = vmul.f32 %v826, %v746
        %v843 = vmul.f32 %v827, %v749
        %v844 = vmul.f32 %v828, %v754
        %v845 = vmul.f32 %v829, %v757
        %v846 = vmul.f32 %v830, %v762
        %v847 = vmul.f32 %v831, %v765
        %v848 = vpack.c.bf16 %v833, %v832
        %v849 = vpack.c.bf16 %v835, %v834
        %v850 = vpack.c.bf16 %v837, %v836
        %v851 = vpack.c.bf16 %v839, %v838
        %v852 = vpack.c.bf16 %v841, %v840
        %v853 = vpack.c.bf16 %v843, %v842
        %v854 = vpack.c.bf16 %v845, %v844
        %v855 = vpack.c.bf16 %v847, %v846
        %v856 = vld [vmem:[%s5] sm:$0xf]
        %v857 = vld [vmem:[%s5 + $0x4] sm:$0xf]
        %v858 = vld [vmem:[%s5 + $0x8] sm:$0xf]
        %v859 = vld [vmem:[%s5 + $0xc] sm:$0xf]
        %v860 = vld [vmem:[%s5 + $0x10] sm:$0xf]
        %v861 = vld [vmem:[%s5 + $0x14] sm:$0xf]
        %v862 = vld [vmem:[%s5 + $0x18] sm:$0xf]
        %v863 = vld [vmem:[%s5 + $0x1c] sm:$0xf]
        %v864 = vld [vmem:[%s5 + $0x20] sm:$0xf]
        %v865 = vld [vmem:[%s5 + $0x24] sm:$0xf]
        %v866 = vld [vmem:[%s5 + $0x28] sm:$0xf]
        %v867 = vld [vmem:[%s5 + $0x2c] sm:$0xf]
        %v868 = vld [vmem:[%s5 + $0x30] sm:$0xf]
        %v869 = vld [vmem:[%s5 + $0x34] sm:$0xf]
        %v870 = vld [vmem:[%s5 + $0x38] sm:$0xf]
        %v871 = vld [vmem:[%s5 + $0x3c] sm:$0xf]
        %v872 = vld [vmem:[%s6] sm:$0x1]
        %v874 = vlaneseq
        %v875 = vshrl.u32 %v874, 7
        %v876 = vsub.s32 0, %v875
        %v877 = vrot.slane %v872, %v876
        %v895 = vunpack.c.l.b16 %v856
        %v896 = vunpack.c.l.b16 %v857
        %v897 = vunpack.c.l.b16 %v858
        %v898 = vunpack.c.l.b16 %v859
        %v899 = vunpack.c.l.b16 %v860
        %v900 = vunpack.c.l.b16 %v861
        %v901 = vunpack.c.l.b16 %v862
        %v902 = vunpack.c.l.b16 %v863
        %v903 = vunpack.c.l.b16 %v864
        %v904 = vunpack.c.l.b16 %v865
        %v905 = vunpack.c.l.b16 %v866
        %v906 = vunpack.c.l.b16 %v867
        %v907 = vunpack.c.l.b16 %v868
        %v908 = vunpack.c.l.b16 %v869
        %v909 = vunpack.c.l.b16 %v870
        %v910 = vunpack.c.l.b16 %v871
        %v911 = vpack.c.b16 %v896, %v895
        %v912 = vpack.c.b16 %v898, %v897
        %v913 = vpack.c.b16 %v900, %v899
        %v914 = vpack.c.b16 %v902, %v901
        %v915 = vpack.c.b16 %v904, %v903
        %v916 = vpack.c.b16 %v906, %v905
        %v917 = vpack.c.b16 %v908, %v907
        %v918 = vpack.c.b16 %v910, %v909
        %927 = vmatprep.subr.bf16.mxu0 0
        %928 = vmatpush1.bf16.msra.mxu0 %v911
        %929 = vmatprep.subr.bf16.mxu0 0
        %930 = vmatpush1.bf16.msra.mxu0 %v912
        %931 = vmatprep.subr.bf16.mxu0 0
        %932 = vmatpush1.bf16.msra.mxu0 %v913
        %933 = vmatprep.subr.bf16.mxu0 0
        %934 = vmatpush1.bf16.msra.mxu0 %v914
        %935 = vmatprep.subr.bf16.mxu0 0
        %936 = vmatpush1.bf16.msra.mxu0 %v915
        %937 = vmatprep.subr.bf16.mxu0 0
        %938 = vmatpush1.bf16.msra.mxu0 %v916
        %939 = vmatprep.subr.bf16.mxu0 0
        %940 = vmatpush1.bf16.msra.mxu0 %v917
        %941 = vmatprep.subr.bf16.mxu0 0
        %942 = vmatpush1.bf16.msra.mxu0 %v918
        %943 = vmatprep.subr.bf16.mxu0 0
        %944 = vmatpush1.bf16.msra.mxu0 0
        %945 = vmatprep.subr.bf16.mxu0 0
        %946 = vmatpush1.bf16.msra.mxu0 0
        %947 = vmatprep.subr.bf16.mxu0 0
        %948 = vmatpush1.bf16.msra.mxu0 0
        %949 = vmatprep.subr.bf16.mxu0 0
        %950 = vmatpush1.bf16.msra.mxu0 0
        %951 = vmatprep.subr.bf16.mxu0 0
        %952 = vmatpush1.bf16.msra.mxu0 0
        %953 = vmatprep.subr.bf16.mxu0 0
        %954 = vmatpush1.bf16.msra.mxu0 0
        %955 = vmatprep.subr.bf16.mxu0 0
        %956 = vmatpush1.bf16.msra.mxu0 0
        %957 = vmatprep.subr.bf16.mxu0 0
        %958 = vmatpush1.bf16.msra.mxu0 0
        %959 = vmatprep.mubr.bf16.mxu0 0
        %960 = vmatmul.mubr.bf16.gmra.mrb[0].mxu0 %v848
        %v961 = vpop.f32.mrb[0].mxu0
        %v962 = vadd.f32 %v877, %v961
        %v963 = vpop.f32.mrb[0].mxu0
        %v964 = vpop.f32.mrb[0].mxu0
        %v965 = vadd.f32 %v877, %v964
        %v966 = vpop.f32.mrb[0].mxu0
        %967 = vmatprep.mubr.bf16.mxu0 0
        %968 = vmatmul.mubr.bf16.gmra.mrb[0].mxu0 %v849
        %v969 = vpop.f32.mrb[0].mxu0
        %v970 = vadd.f32 %v877, %v969
        %v971 = vpop.f32.mrb[0].mxu0
        %v972 = vpop.f32.mrb[0].mxu0
        %v973 = vadd.f32 %v877, %v972
        %v974 = vpop.f32.mrb[0].mxu0
        %975 = vmatprep.mubr.bf16.mxu0 0
        %976 = vmatmul.mubr.bf16.gmra.mrb[0].mxu0 %v850
        %v977 = vpop.f32.mrb[0].mxu0
        %v978 = vadd.f32 %v877, %v977
        %v979 = vpop.f32.mrb[0].mxu0
        %v980 = vpop.f32.mrb[0].mxu0
        %v981 = vadd.f32 %v877, %v980
        %v982 = vpop.f32.mrb[0].mxu0
        %983 = vmatprep.mubr.bf16.mxu0 0
        %984 = vmatmul.mubr.bf16.gmra.mrb[0].mxu0 %v851
        %v985 = vpop.f32.mrb[0].mxu0
        %v986 = vadd.f32 %v877, %v985
        %v987 = vpop.f32.mrb[0].mxu0
        %v988 = vpop.f32.mrb[0].mxu0
        %v989 = vadd.f32 %v877, %v988
        %v990 = vpop.f32.mrb[0].mxu0
        %991 = vmatprep.mubr.bf16.mxu0 0
        %992 = vmatmul.mubr.bf16.gmra.mrb[0].mxu0 %v852
        %v993 = vpop.f32.mrb[0].mxu0
        %v994 = vadd.f32 %v877, %v993
        %v995 = vpop.f32.mrb[0].mxu0
        %v996 = vpop.f32.mrb[0].mxu0
        %v997 = vadd.f32 %v877, %v996
        %v998 = vpop.f32.mrb[0].mxu0
        %999 = vmatprep.mubr.bf16.mxu0 0
        %1000 = vmatmul.mubr.bf16.gmra.mrb[0].mxu0 %v853
        %v1001 = vpop.f32.mrb[0].mxu0
        %v1002 = vadd.f32 %v877, %v1001
        %v1003 = vpop.f32.mrb[0].mxu0
        %v1004 = vpop.f32.mrb[0].mxu0
        %v1005 = vadd.f32 %v877, %v1004
        %v1006 = vpop.f32.mrb[0].mxu0
        %1007 = vmatprep.mubr.bf16.mxu0 0
        %1008 = vmatmul.mubr.bf16.gmra.mrb[0].mxu0 %v854
        %v1009 = vpop.f32.mrb[0].mxu0
        %v1010 = vadd.f32 %v877, %v1009
        %v1011 = vpop.f32.mrb[0].mxu0
        %v1012 = vpop.f32.mrb[0].mxu0
        %v1013 = vadd.f32 %v877, %v1012
        %v1014 = vpop.f32.mrb[0].mxu0
        %1015 = vmatprep.mubr.bf16.mxu0 0
        %1016 = vmatmul.mubr.bf16.gmra.mrb[0].mxu0 %v855
        %v1017 = vpop.f32.mrb[0].mxu0
        %v1018 = vadd.f32 %v877, %v1017
        %v1019 = vpop.f32.mrb[0].mxu0
        %v1020 = vpop.f32.mrb[0].mxu0
        %v1021 = vadd.f32 %v877, %v1020
        %v1022 = vpop.f32.mrb[0].mxu0
        %1023 = vdwg.mxu0
        %v1024 = vadd.f32 %v962, 3.0
        %v1025 = vadd.f32 %v965, 3.0
        %v1026 = vadd.f32 %v970, 3.0
        %v1027 = vadd.f32 %v973, 3.0
        %v1028 = vadd.f32 %v978, 3.0
        %v1029 = vadd.f32 %v981, 3.0
        %v1030 = vadd.f32 %v986, 3.0
        %v1031 = vadd.f32 %v989, 3.0
        %v1032 = vadd.f32 %v994, 3.0
        %v1033 = vadd.f32 %v997, 3.0
        %v1034 = vadd.f32 %v1002, 3.0
        %v1035 = vadd.f32 %v1005, 3.0
        %v1036 = vadd.f32 %v1010, 3.0
        %v1037 = vadd.f32 %v1013, 3.0
        %v1038 = vadd.f32 %v1018, 3.0
        %v1039 = vadd.f32 %v1021, 3.0
        %v1040 = vmax.f32 %v1024, 0.0
        %v1041 = vmax.f32 %v1025, 0.0
        %v1042 = vmax.f32 %v1026, 0.0
        %v1043 = vmax.f32 %v1027, 0.0
        %v1044 = vmax.f32 %v1028, 0.0
        %v1045 = vmax.f32 %v1029, 0.0
        %v1046 = vmax.f32 %v1030, 0.0
        %v1047 = vmax.f32 %v1031, 0.0
        %v1048 = vmax.f32 %v1032, 0.0
        %v1049 = vmax.f32 %v1033, 0.0
        %v1050 = vmax.f32 %v1034, 0.0
        %v1051 = vmax.f32 %v1035, 0.0
        %v1052 = vmax.f32 %v1036, 0.0
        %v1053 = vmax.f32 %v1037, 0.0
        %v1054 = vmax.f32 %v1038, 0.0
        %v1055 = vmax.f32 %v1039, 0.0
        %v1056 = vmin.f32 %v1040, 6.0
        %v1057 = vmin.f32 %v1041, 6.0
        %v1058 = vmin.f32 %v1042, 6.0
        %v1059 = vmin.f32 %v1043, 6.0
        %v1060 = vmin.f32 %v1044, 6.0
        %v1061 = vmin.f32 %v1045, 6.0
        %v1062 = vmin.f32 %v1046, 6.0
        %v1063 = vmin.f32 %v1047, 6.0
        %v1064 = vmin.f32 %v1048, 6.0
        %v1065 = vmin.f32 %v1049, 6.0
        %v1066 = vmin.f32 %v1050, 6.0
        %v1067 = vmin.f32 %v1051, 6.0
        %v1068 = vmin.f32 %v1052, 6.0
        %v1069 = vmin.f32 %v1053, 6.0
        %v1070 = vmin.f32 %v1054, 6.0
        %v1071 = vmin.f32 %v1055, 6.0
        %v1072 = vmul.f32 %v1056, 0.16666667
        %v1073 = vmul.f32 %v1057, 0.16666667
        %v1074 = vmul.f32 %v1058, 0.16666667
        %v1075 = vmul.f32 %v1059, 0.16666667
        %v1076 = vmul.f32 %v1060, 0.16666667
        %v1077 = vmul.f32 %v1061, 0.16666667
        %v1078 = vmul.f32 %v1062, 0.16666667
        %v1079 = vmul.f32 %v1063, 0.16666667
        %v1080 = vmul.f32 %v1064, 0.16666667
        %v1081 = vmul.f32 %v1065, 0.16666667
        %v1082 = vmul.f32 %v1066, 0.16666667
        %v1083 = vmul.f32 %v1067, 0.16666667
        %v1084 = vmul.f32 %v1068, 0.16666667
        %v1085 = vmul.f32 %v1069, 0.16666667
        %v1086 = vmul.f32 %v1070, 0.16666667
        %v1087 = vmul.f32 %v1071, 0.16666667
        %v1088 = vmul.f32 %v1072, %v962
        %v1089 = vmul.f32 %v1073, %v965
        %v1090 = vmul.f32 %v1074, %v970
        %v1091 = vmul.f32 %v1075, %v973
        %v1092 = vmul.f32 %v1076, %v978
        %v1093 = vmul.f32 %v1077, %v981
        %v1094 = vmul.f32 %v1078, %v986
        %v1095 = vmul.f32 %v1079, %v989
        %v1096 = vmul.f32 %v1080, %v994
        %v1097 = vmul.f32 %v1081, %v997
        %v1098 = vmul.f32 %v1082, %v1002
        %v1099 = vmul.f32 %v1083, %v1005
        %v1100 = vmul.f32 %v1084, %v1010
        %v1101 = vmul.f32 %v1085, %v1013
        %v1102 = vmul.f32 %v1086, %v1018
        %v1103 = vmul.f32 %v1087, %v1021
        %v1104 = vpack.c.bf16 %v1089, %v1088
        %v1105 = vpack.c.bf16 %v1091, %v1090
        %v1106 = vpack.c.bf16 %v1093, %v1092
        %v1107 = vpack.c.bf16 %v1095, %v1094
        %v1108 = vpack.c.bf16 %v1097, %v1096
        %v1109 = vpack.c.bf16 %v1099, %v1098
        %v1110 = vpack.c.bf16 %v1101, %v1100
        %v1111 = vpack.c.bf16 %v1103, %v1102
        %v1112 = vld [vmem:[#allocation7] sm:$0xf]
        %v1113 = vld [vmem:[#allocation7 + $0x4] sm:$0xf]
        %v1114 = vld [vmem:[#allocation7 + $0x8] sm:$0xf]
        %v1115 = vld [vmem:[#allocation7 + $0xc] sm:$0xf]
        %v1116 = vld [vmem:[#allocation7 + $0x10] sm:$0xf]
        %v1117 = vld [vmem:[#allocation7 + $0x14] sm:$0xf]
        %v1118 = vld [vmem:[#allocation7 + $0x18] sm:$0xf]
        %v1119 = vld [vmem:[#allocation7 + $0x1c] sm:$0xf]
        %v1120 = vld [vmem:[#allocation7 + $0x20] sm:$0xf]
        %v1121 = vld [vmem:[#allocation7 + $0x24] sm:$0xf]
        %v1122 = vld [vmem:[#allocation7 + $0x28] sm:$0xf]
        %v1123 = vld [vmem:[#allocation7 + $0x2c] sm:$0xf]
        %v1124 = vld [vmem:[#allocation7 + $0x30] sm:$0xf]
        %v1125 = vld [vmem:[#allocation7 + $0x34] sm:$0xf]
        %v1126 = vld [vmem:[#allocation7 + $0x38] sm:$0xf]
        %v1127 = vld [vmem:[#allocation7 + $0x3c] sm:$0xf]
        %v1128 = vld [vmem:[%s8] sm:$0x1]
        %v1130 = vlaneseq
        %v1131 = vshrl.u32 %v1130, 7
        %v1132 = vsub.s32 0, %v1131
        %v1133 = vrot.slane %v1128, %v1132
        %v1151 = vunpack.c.l.b16 %v1112
        %v1152 = vunpack.c.l.b16 %v1113
        %v1153 = vunpack.c.l.b16 %v1114
        %v1154 = vunpack.c.l.b16 %v1115
        %v1155 = vunpack.c.l.b16 %v1116
        %v1156 = vunpack.c.l.b16 %v1117
        %v1157 = vunpack.c.l.b16 %v1118
        %v1158 = vunpack.c.l.b16 %v1119
        %v1159 = vunpack.c.l.b16 %v1120
        %v1160 = vunpack.c.l.b16 %v1121
        %v1161 = vunpack.c.l.b16 %v1122
        %v1162 = vunpack.c.l.b16 %v1123
        %v1163 = vunpack.c.l.b16 %v1124
        %v1164 = vunpack.c.l.b16 %v1125
        %v1165 = vunpack.c.l.b16 %v1126
        %v1166 = vunpack.c.l.b16 %v1127
        %v1167 = vpack.c.b16 %v1152, %v1151
        %v1168 = vpack.c.b16 %v1154, %v1153
        %v1169 = vpack.c.b16 %v1156, %v1155
        %v1170 = vpack.c.b16 %v1158, %v1157
        %v1171 = vpack.c.b16 %v1160, %v1159
        %v1172 = vpack.c.b16 %v1162, %v1161
        %v1173 = vpack.c.b16 %v1164, %v1163
        %v1174 = vpack.c.b16 %v1166, %v1165
        %1183 = vmatprep.subr.bf16.mxu0 0
        %1184 = vmatpush1.bf16.msra.mxu0 %v1167
        %1185 = vmatprep.subr.bf16.mxu0 0
        %1186 = vmatpush1.bf16.msra.mxu0 %v1168
        %1187 = vmatprep.subr.bf16.mxu0 0
        %1188 = vmatpush1.bf16.msra.mxu0 %v1169
        %1189 = vmatprep.subr.bf16.mxu0 0
        %1190 = vmatpush1.bf16.msra.mxu0 %v1170
        %1191 = vmatprep.subr.bf16.mxu0 0
        %1192 = vmatpush1.bf16.msra.mxu0 %v1171
        %1193 = vmatprep.subr.bf16.mxu0 0
        %1194 = vmatpush1.bf16.msra.mxu0 %v1172
        %1195 = vmatprep.subr.bf16.mxu0 0
        %1196 = vmatpush1.bf16.msra.mxu0 %v1173
        %1197 = vmatprep.subr.bf16.mxu0 0
        %1198 = vmatpush1.bf16.msra.mxu0 %v1174
        %1199 = vmatprep.subr.bf16.mxu0 0
        %1200 = vmatpush1.bf16.msra.mxu0 0
        %1201 = vmatprep.subr.bf16.mxu0 0
        %1202 = vmatpush1.bf16.msra.mxu0 0
        %1203 = vmatprep.subr.bf16.mxu0 0
        %1204 = vmatpush1.bf16.msra.mxu0 0
        %1205 = vmatprep.subr.bf16.mxu0 0
        %1206 = vmatpush1.bf16.msra.mxu0 0
        %1207 = vmatprep.subr.bf16.mxu0 0
        %1208 = vmatpush1.bf16.msra.mxu0 0
        %1209 = vmatprep.subr.bf16.mxu0 0
        %1210 = vmatpush1.bf16.msra.mxu0 0
        %1211 = vmatprep.subr.bf16.mxu0 0
        %1212 = vmatpush1.bf16.msra.mxu0 0
        %1213 = vmatprep.subr.bf16.mxu0 0
        %1214 = vmatpush1.bf16.msra.mxu0 0
        %1215 = vmatprep.mubr.bf16.mxu0 0
        %1216 = vmatmul.mubr.bf16.gmra.mrb[0].mxu0 %v1104
        %v1217 = vpop.f32.mrb[0].mxu0
        %v1218 = vadd.f32 %v1133, %v1217
        %v1219 = vpop.f32.mrb[0].mxu0
        %v1220 = vpop.f32.mrb[0].mxu0
        %v1221 = vadd.f32 %v1133, %v1220
        %v1222 = vpop.f32.mrb[0].mxu0
        %1223 = vmatprep.mubr.bf16.mxu0 0
        %1224 = vmatmul.mubr.bf16.gmra.mrb[0].mxu0 %v1105
        %v1225 = vpop.f32.mrb[0].mxu0
        %v1226 = vadd.f32 %v1133, %v1225
        %v1227 = vpop.f32.mrb[0].mxu0
        %v1228 = vpop.f32.mrb[0].mxu0
        %v1229 = vadd.f32 %v1133, %v1228
        %v1230 = vpop.f32.mrb[0].mxu0
        %1231 = vmatprep.mubr.bf16.mxu0 0
        %1232 = vmatmul.mubr.bf16.gmra.mrb[0].mxu0 %v1106
        %v1233 = vpop.f32.mrb[0].mxu0
        %v1234 = vadd.f32 %v1133, %v1233
        %v1235 = vpop.f32.mrb[0].mxu0
        %v1236 = vpop.f32.mrb[0].mxu0
        %v1237 = vadd.f32 %v1133, %v1236
        %v1238 = vpop.f32.mrb[0].mxu0
        %1239 = vmatprep.mubr.bf16.mxu0 0
        %1240 = vmatmul.mubr.bf16.gmra.mrb[0].mxu0 %v1107
        %v1241 = vpop.f32.mrb[0].mxu0
        %v1242 = vadd.f32 %v1133, %v1241
        %v1243 = vpop.f32.mrb[0].mxu0
        %v1244 = vpop.f32.mrb[0].mxu0
        %v1245 = vadd.f32 %v1133, %v1244
        %v1246 = vpop.f32.mrb[0].mxu0
        %1247 = vmatprep.mubr.bf16.mxu0 0
        %1248 = vmatmul.mubr.bf16.gmra.mrb[0].mxu0 %v1108
        %v1249 = vpop.f32.mrb[0].mxu0
        %v1250 = vadd.f32 %v1133, %v1249
        %v1251 = vpop.f32.mrb[0].mxu0
        %v1252 = vpop.f32.mrb[0].mxu0
        %v1253 = vadd.f32 %v1133, %v1252
        %v1254 = vpop.f32.mrb[0].mxu0
        %1255 = vmatprep.mubr.bf16.mxu0 0
        %1256 = vmatmul.mubr.bf16.gmra.mrb[0].mxu0 %v1109
        %v1257 = vpop.f32.mrb[0].mxu0
        %v1258 = vadd.f32 %v1133, %v1257
        %v1259 = vpop.f32.mrb[0].mxu0
        %v1260 = vpop.f32.mrb[0].mxu0
        %v1261 = vadd.f32 %v1133, %v1260
        %v1262 = vpop.f32.mrb[0].mxu0
        %1263 = vmatprep.mubr.bf16.mxu0 0
        %1264 = vmatmul.mubr.bf16.gmra.mrb[0].mxu0 %v1110
        %v1265 = vpop.f32.mrb[0].mxu0
        %v1266 = vadd.f32 %v1133, %v1265
        %v1267 = vpop.f32.mrb[0].mxu0
        %v1268 = vpop.f32.mrb[0].mxu0
        %v1269 = vadd.f32 %v1133, %v1268
        %v1270 = vpop.f32.mrb[0].mxu0
        %1271 = vmatprep.mubr.bf16.mxu0 0
        %1272 = vmatmul.mubr.bf16.gmra.mrb[0].mxu0 %v1111
        %v1273 = vpop.f32.mrb[0].mxu0
        %v1274 = vadd.f32 %v1133, %v1273
        %v1275 = vpop.f32.mrb[0].mxu0
        %v1276 = vpop.f32.mrb[0].mxu0
        %v1277 = vadd.f32 %v1133, %v1276
        %v1278 = vpop.f32.mrb[0].mxu0
        %1279 = vdwg.mxu0
        %v1280 = vadd.f32 %v1218, 3.0
        %v1281 = vadd.f32 %v1221, 3.0
        %v1282 = vadd.f32 %v1226, 3.0
        %v1283 = vadd.f32 %v1229, 3.0
        %v1284 = vadd.f32 %v1234, 3.0
        %v1285 = vadd.f32 %v1237, 3.0
        %v1286 = vadd.f32 %v1242, 3.0
        %v1287 = vadd.f32 %v1245, 3.0
        %v1288 = vadd.f32 %v1250, 3.0
        %v1289 = vadd.f32 %v1253, 3.0
        %v1290 = vadd.f32 %v1258, 3.0
        %v1291 = vadd.f32 %v1261, 3.0
        %v1292 = vadd.f32 %v1266, 3.0
        %v1293 = vadd.f32 %v1269, 3.0
        %v1294 = vadd.f32 %v1274, 3.0
        %v1295 = vadd.f32 %v1277, 3.0
        %v1296 = vmax.f32 %v1280, 0.0
        %v1297 = vmax.f32 %v1281, 0.0
        %v1298 = vmax.f32 %v1282, 0.0
        %v1299 = vmax.f32 %v1283, 0.0
        %v1300 = vmax.f32 %v1284, 0.0
        %v1301 = vmax.f32 %v1285, 0.0
        %v1302 = vmax.f32 %v1286, 0.0
        %v1303 = vmax.f32 %v1287, 0.0
        %v1304 = vmax.f32 %v1288, 0.0
        %v1305 = vmax.f32 %v1289, 0.0
        %v1306 = vmax.f32 %v1290, 0.0
        %v1307 = vmax.f32 %v1291, 0.0
        %v1308 = vmax.f32 %v1292, 0.0
        %v1309 = vmax.f32 %v1293, 0.0
        %v1310 = vmax.f32 %v1294, 0.0
        %v1311 = vmax.f32 %v1295, 0.0
        %v1312 = vmin.f32 %v1296, 6.0
        %v1313 = vmin.f32 %v1297, 6.0
        %v1314 = vmin.f32 %v1298, 6.0
        %v1315 = vmin.f32 %v1299, 6.0
        %v1316 = vmin.f32 %v1300, 6.0
        %v1317 = vmin.f32 %v1301, 6.0
        %v1318 = vmin.f32 %v1302, 6.0
        %v1319 = vmin.f32 %v1303, 6.0
        %v1320 = vmin.f32 %v1304, 6.0
        %v1321 = vmin.f32 %v1305, 6.0
        %v1322 = vmin.f32 %v1306, 6.0
        %v1323 = vmin.f32 %v1307, 6.0
        %v1324 = vmin.f32 %v1308, 6.0
        %v1325 = vmin.f32 %v1309, 6.0
        %v1326 = vmin.f32 %v1310, 6.0
        %v1327 = vmin.f32 %v1311, 6.0
        %v1328 = vmul.f32 %v1312, 0.16666667
        %v1329 = vmul.f32 %v1313, 0.16666667
        %v1330 = vmul.f32 %v1314, 0.16666667
        %v1331 = vmul.f32 %v1315, 0.16666667
        %v1332 = vmul.f32 %v1316, 0.16666667
        %v1333 = vmul.f32 %v1317, 0.16666667
        %v1334 = vmul.f32 %v1318, 0.16666667
        %v1335 = vmul.f32 %v1319, 0.16666667
        %v1336 = vmul.f32 %v1320, 0.16666667
        %v1337 = vmul.f32 %v1321, 0.16666667
        %v1338 = vmul.f32 %v1322, 0.16666667
        %v1339 = vmul.f32 %v1323, 0.16666667
        %v1340 = vmul.f32 %v1324, 0.16666667
        %v1341 = vmul.f32 %v1325, 0.16666667
        %v1342 = vmul.f32 %v1326, 0.16666667
        %v1343 = vmul.f32 %v1327, 0.16666667
        %v1344 = vmul.f32 %v1328, %v1218
        %v1345 = vmul.f32 %v1329, %v1221
        %v1346 = vmul.f32 %v1330, %v1226
        %v1347 = vmul.f32 %v1331, %v1229
        %v1348 = vmul.f32 %v1332, %v1234
        %v1349 = vmul.f32 %v1333, %v1237
        %v1350 = vmul.f32 %v1334, %v1242
        %v1351 = vmul.f32 %v1335, %v1245
        %v1352 = vmul.f32 %v1336, %v1250
        %v1353 = vmul.f32 %v1337, %v1253
        %v1354 = vmul.f32 %v1338, %v1258
        %v1355 = vmul.f32 %v1339, %v1261
        %v1356 = vmul.f32 %v1340, %v1266
        %v1357 = vmul.f32 %v1341, %v1269
        %v1358 = vmul.f32 %v1342, %v1274
        %v1359 = vmul.f32 %v1343, %v1277
        %v1360 = vadd.f32 %v1344, %v1088
        %v1361 = vadd.f32 %v1345, %v1089
        %v1362 = vadd.f32 %v1346, %v1090
        %v1363 = vadd.f32 %v1347, %v1091
        %v1364 = vadd.f32 %v1348, %v1092
        %v1365 = vadd.f32 %v1349, %v1093
        %v1366 = vadd.f32 %v1350, %v1094
        %v1367 = vadd.f32 %v1351, %v1095
        %v1368 = vadd.f32 %v1352, %v1096
        %v1369 = vadd.f32 %v1353, %v1097
        %v1370 = vadd.f32 %v1354, %v1098
        %v1371 = vadd.f32 %v1355, %v1099
        %v1372 = vadd.f32 %v1356, %v1100
        %v1373 = vadd.f32 %v1357, %v1101
        %v1374 = vadd.f32 %v1358, %v1102
        %v1375 = vadd.f32 %v1359, %v1103
        %1376 = vst [vmem:[#allocation2] sm:$0xff] %v832
        %1377 = vst [vmem:[#allocation2 + $0x20] sm:$0xff] %v833
        %1378 = vst [vmem:[#allocation2 + $0x40] sm:$0xff] %v834
        %1379 = vst [vmem:[#allocation2 + $0x60] sm:$0xff] %v835
        %1380 = vst [vmem:[#allocation2 + $0x80] sm:$0xff] %v836
        %1381 = vst [vmem:[#allocation2 + $0xa0] sm:$0xff] %v837
        %1382 = vst [vmem:[#allocation2 + $0xc0] sm:$0xff] %v838
        %1383 = vst [vmem:[#allocation2 + $0xe0] sm:$0xff] %v839
        %1384 = vst [vmem:[#allocation2 + $0x100] sm:$0xff] %v840
        %1385 = vst [vmem:[#allocation2 + $0x120] sm:$0xff] %v841
        %1386 = vst [vmem:[#allocation2 + $0x140] sm:$0xff] %v842
        %1387 = vst [vmem:[#allocation2 + $0x160] sm:$0xff] %v843
        %1388 = vst [vmem:[#allocation2 + $0x180] sm:$0xff] %v844
        %1389 = vst [vmem:[#allocation2 + $0x1a0] sm:$0xff] %v845
        %1390 = vst [vmem:[#allocation2 + $0x1c0] sm:$0xff] %v846
        %1391 = vst [vmem:[#allocation2 + $0x1e0] sm:$0xff] %v847
        %1392 = vst [vmem:[#allocation2 + $0x8] sm:$0xff] %v1360
        %1393 = vst [vmem:[#allocation2 + $0x28] sm:$0xff] %v1361
        %1394 = vst [vmem:[#allocation2 + $0x48] sm:$0xff] %v1362
        %1395 = vst [vmem:[#allocation2 + $0x68] sm:$0xff] %v1363
        %1396 = vst [vmem:[#allocation2 + $0x88] sm:$0xff] %v1364
        %1397 = vst [vmem:[#allocation2 + $0xa8] sm:$0xff] %v1365
        %1398 = vst [vmem:[#allocation2 + $0xc8] sm:$0xff] %v1366
        %1399 = vst [vmem:[#allocation2 + $0xe8] sm:$0xff] %v1367
        %1400 = vst [vmem:[#allocation2 + $0x108] sm:$0xff] %v1368
        %1401 = vst [vmem:[#allocation2 + $0x128] sm:$0xff] %v1369
        %1402 = vst [vmem:[#allocation2 + $0x148] sm:$0xff] %v1370
        %1403 = vst [vmem:[#allocation2 + $0x168] sm:$0xff] %v1371
        %1404 = vst [vmem:[#allocation2 + $0x188] sm:$0xff] %v1372
        %1405 = vst [vmem:[#allocation2 + $0x1a8] sm:$0xff] %v1373
        %1406 = vst [vmem:[#allocation2 + $0x1c8] sm:$0xff] %v1374
        %1407 = vst [vmem:[#allocation2 + $0x1e8] sm:$0xff] %v1375
        %v1408 = vld [vmem:[#allocation2] sm:$0xff]
        %v1409 = vld [vmem:[#allocation2 + $0x8] sm:$0xff]
        %v1410 = vld [vmem:[#allocation2 + $0x20] sm:$0xff]
        %v1411 = vld [vmem:[#allocation2 + $0x28] sm:$0xff]
        %v1412 = vld [vmem:[#allocation2 + $0x40] sm:$0xff]
        %v1413 = vld [vmem:[#allocation2 + $0x48] sm:$0xff]
        %v1414 = vld [vmem:[#allocation2 + $0x60] sm:$0xff]
        %v1415 = vld [vmem:[#allocation2 + $0x68] sm:$0xff]
        %v1416 = vld [vmem:[#allocation2 + $0x80] sm:$0xff]
        %v1417 = vld [vmem:[#allocation2 + $0x88] sm:$0xff]
        %v1418 = vld [vmem:[#allocation2 + $0xa0] sm:$0xff]
        %v1419 = vld [vmem:[#allocation2 + $0xa8] sm:$0xff]
        %v1420 = vld [vmem:[#allocation2 + $0xc0] sm:$0xff]
        %v1421 = vld [vmem:[#allocation2 + $0xc8] sm:$0xff]
        %v1422 = vld [vmem:[#allocation2 + $0xe0] sm:$0xff]
        %v1423 = vld [vmem:[#allocation2 + $0xe8] sm:$0xff]
        %v1424 = vld [vmem:[#allocation2 + $0x100] sm:$0xff]
        %v1425 = vld [vmem:[#allocation2 + $0x108] sm:$0xff]
        %v1426 = vld [vmem:[#allocation2 + $0x120] sm:$0xff]
        %v1427 = vld [vmem:[#allocation2 + $0x128] sm:$0xff]
        %v1428 = vld [vmem:[#allocation2 + $0x140] sm:$0xff]
        %v1429 = vld [vmem:[#allocation2 + $0x148] sm:$0xff]
        %v1430 = vld [vmem:[#allocation2 + $0x160] sm:$0xff]
        %v1431 = vld [vmem:[#allocation2 + $0x168] sm:$0xff]
        %v1432 = vld [vmem:[#allocation2 + $0x180] sm:$0xff]
        %v1433 = vld [vmem:[#allocation2 + $0x188] sm:$0xff]
        %v1434 = vld [vmem:[#allocation2 + $0x1a0] sm:$0xff]
        %v1435 = vld [vmem:[#allocation2 + $0x1a8] sm:$0xff]
        %v1436 = vld [vmem:[#allocation2 + $0x1c0] sm:$0xff]
        %v1437 = vld [vmem:[#allocation2 + $0x1c8] sm:$0xff]
        %v1438 = vld [vmem:[#allocation2 + $0x1e0] sm:$0xff]
        %v1439 = vld [vmem:[#allocation2 + $0x1e8] sm:$0xff]
        %v1440 = vpack.c.bf16 %v1410, %v1408
        %v1441 = vpack.c.bf16 %v1411, %v1409
        %v1442 = vpack.c.bf16 %v1414, %v1412
        %v1443 = vpack.c.bf16 %v1415, %v1413
        %v1444 = vpack.c.bf16 %v1418, %v1416
        %v1445 = vpack.c.bf16 %v1419, %v1417
        %v1446 = vpack.c.bf16 %v1422, %v1420
        %v1447 = vpack.c.bf16 %v1423, %v1421
        %v1448 = vpack.c.bf16 %v1426, %v1424
        %v1449 = vpack.c.bf16 %v1427, %v1425
        %v1450 = vpack.c.bf16 %v1430, %v1428
        %v1451 = vpack.c.bf16 %v1431, %v1429
        %v1452 = vpack.c.bf16 %v1434, %v1432
        %v1453 = vpack.c.bf16 %v1435, %v1433
        %v1454 = vpack.c.bf16 %v1438, %v1436
        %v1455 = vpack.c.bf16 %v1439, %v1437
        %v1456 = vld [vmem:[%s9] sm:$0xff]
        %v1457 = vld [vmem:[%s9 + $0x8] sm:$0xff]
        %v1458 = vld [vmem:[%s9 + $0x10] sm:$0xff]
        %v1459 = vld [vmem:[%s9 + $0x18] sm:$0xff]
        %v1460 = vld [vmem:[%s9 + $0x20] sm:$0xff]
        %v1461 = vld [vmem:[%s9 + $0x28] sm:$0xff]
        %v1462 = vld [vmem:[%s9 + $0x30] sm:$0xff]
        %v1463 = vld [vmem:[%s9 + $0x38] sm:$0xff]
        %v1464 = vld [vmem:[%s9 + $0x40] sm:$0xff]
        %v1465 = vld [vmem:[%s9 + $0x48] sm:$0xff]
        %v1466 = vld [vmem:[%s9 + $0x50] sm:$0xff]
        %v1467 = vld [vmem:[%s9 + $0x58] sm:$0xff]
        %v1468 = vld [vmem:[%s9 + $0x60] sm:$0xff]
        %v1469 = vld [vmem:[%s9 + $0x68] sm:$0xff]
        %v1470 = vld [vmem:[%s9 + $0x70] sm:$0xff]
        %v1471 = vld [vmem:[%s9 + $0x78] sm:$0xff]
        %v1472 = vld [vmem:[%s9 + $0x80] sm:$0xff]
        %v1473 = vld [vmem:[%s9 + $0x88] sm:$0xff]
        %v1474 = vld [vmem:[%s9 + $0x90] sm:$0xff]
        %v1475 = vld [vmem:[%s9 + $0x98] sm:$0xff]
        %v1476 = vld [vmem:[%s9 + $0xa0] sm:$0xff]
        %v1477 = vld [vmem:[%s9 + $0xa8] sm:$0xff]
        %v1478 = vld [vmem:[%s9 + $0xb0] sm:$0xff]
        %v1479 = vld [vmem:[%s9 + $0xb8] sm:$0xff]
        %v1480 = vld [vmem:[%s9 + $0xc0] sm:$0xff]
        %v1481 = vld [vmem:[%s9 + $0xc8] sm:$0xff]
        %v1482 = vld [vmem:[%s9 + $0xd0] sm:$0xff]
        %v1483 = vld [vmem:[%s9 + $0xd8] sm:$0xff]
        %v1484 = vld [vmem:[%s9 + $0xe0] sm:$0xff]
        %v1485 = vld [vmem:[%s9 + $0xe8] sm:$0xff]
        %v1486 = vld [vmem:[%s9 + $0xf0] sm:$0xff]
        %v1487 = vld [vmem:[%s9 + $0xf8] sm:$0xff]
        %v1488 = vld [vmem:[%s10] sm:$0x3]
        %v1490 = vlaneseq
        %v1491 = vshrl.u32 %v1490, 7
        %v1492 = vsub.s32 0, %v1491
        %v1493 = vrot.slane %v1488, %v1492
        %v1494 = vlaneseq
        %v1495 = vshrl.u32 %v1494, 7
        %v1496 = vsub.s32 1, %v1495
        %v1497 = vrot.slane %v1488, %v1496
        %v1532 = vunpack.c.l.b16 %v1456
        %v1533 = vunpack.c.h.b16 %v1456
        %v1534 = vunpack.c.l.b16 %v1457
        %v1535 = vunpack.c.h.b16 %v1457
        %v1536 = vunpack.c.l.b16 %v1458
        %v1537 = vunpack.c.h.b16 %v1458
        %v1538 = vunpack.c.l.b16 %v1459
        %v1539 = vunpack.c.h.b16 %v1459
        %v1540 = vunpack.c.l.b16 %v1460
        %v1541 = vunpack.c.h.b16 %v1460
        %v1542 = vunpack.c.l.b16 %v1461
        %v1543 = vunpack.c.h.b16 %v1461
        %v1544 = vunpack.c.l.b16 %v1462
        %v1545 = vunpack.c.h.b16 %v1462
        %v1546 = vunpack.c.l.b16 %v1463
        %v1547 = vunpack.c.h.b16 %v1463
        %v1548 = vunpack.c.l.b16 %v1464
        %v1549 = vunpack.c.h.b16 %v1464
        %v1550 = vunpack.c.l.b16 %v1465
        %v1551 = vunpack.c.h.b16 %v1465
        %v1552 = vunpack.c.l.b16 %v1466
        %v1553 = vunpack.c.h.b16 %v1466
        %v1554 = vunpack.c.l.b16 %v1467
        %v1555 = vunpack.c.h.b16 %v1467
        %v1556 = vunpack.c.l.b16 %v1468
        %v1557 = vunpack.c.h.b16 %v1468
        %v1558 = vunpack.c.l.b16 %v1469
        %v1559 = vunpack.c.h.b16 %v1469
        %v1560 = vunpack.c.l.b16 %v1470
        %v1561 = vunpack.c.h.b16 %v1470
        %v1562 = vunpack.c.l.b16 %v1471
        %v1563 = vunpack.c.h.b16 %v1471
        %v1564 = vunpack.c.l.b16 %v1472
        %v1565 = vunpack.c.h.b16 %v1472
        %v1566 = vunpack.c.l.b16 %v1473
        %v1567 = vunpack.c.h.b16 %v1473
        %v1568 = vunpack.c.l.b16 %v1474
        %v1569 = vunpack.c.h.b16 %v1474
        %v1570 = vunpack.c.l.b16 %v1475
        %v1571 = vunpack.c.h.b16 %v1475
        %v1572 = vunpack.c.l.b16 %v1476
        %v1573 = vunpack.c.h.b16 %v1476
        %v1574 = vunpack.c.l.b16 %v1477
        %v1575 = vunpack.c.h.b16 %v1477
        %v1576 = vunpack.c.l.b16 %v1478
        %v1577 = vunpack.c.h.b16 %v1478
        %v1578 = vunpack.c.l.b16 %v1479
        %v1579 = vunpack.c.h.b16 %v1479
        %v1580 = vunpack.c.l.b16 %v1480
        %v1581 = vunpack.c.h.b16 %v1480
        %v1582 = vunpack.c.l.b16 %v1481
        %v1583 = vunpack.c.h.b16 %v1481
        %v1584 = vunpack.c.l.b16 %v1482
        %v1585 = vunpack.c.h.b16 %v1482
        %v1586 = vunpack.c.l.b16 %v1483
        %v1587 = vunpack.c.h.b16 %v1483
        %v1588 = vunpack.c.l.b16 %v1484
        %v1589 = vunpack.c.h.b16 %v1484
        %v1590 = vunpack.c.l.b16 %v1485
        %v1591 = vunpack.c.h.b16 %v1485
        %v1592 = vunpack.c.l.b16 %v1486
        %v1593 = vunpack.c.h.b16 %v1486
        %v1594 = vunpack.c.l.b16 %v1487
        %v1595 = vunpack.c.h.b16 %v1487
        %v1596 = vpack.c.b16 %v1534, %v1532
        %v1597 = vpack.c.b16 %v1535, %v1533
        %v1598 = vpack.c.b16 %v1538, %v1536
        %v1599 = vpack.c.b16 %v1539, %v1537
        %v1600 = vpack.c.b16 %v1542, %v1540
        %v1601 = vpack.c.b16 %v1543, %v1541
        %v1602 = vpack.c.b16 %v1546, %v1544
        %v1603 = vpack.c.b16 %v1547, %v1545
        %v1604 = vpack.c.b16 %v1550, %v1548
        %v1605 = vpack.c.b16 %v1551, %v1549
        %v1606 = vpack.c.b16 %v1554, %v1552
        %v1607 = vpack.c.b16 %v1555, %v1553
        %v1608 = vpack.c.b16 %v1558, %v1556
        %v1609 = vpack.c.b16 %v1559, %v1557
        %v1610 = vpack.c.b16 %v1562, %v1560
        %v1611 = vpack.c.b16 %v1563, %v1561
        %v1612 = vpack.c.b16 %v1566, %v1564
        %v1613 = vpack.c.b16 %v1567, %v1565
        %v1614 = vpack.c.b16 %v1570, %v1568
        %v1615 = vpack.c.b16 %v1571, %v1569
        %v1616 = vpack.c.b16 %v1574, %v1572
        %v1617 = vpack.c.b16 %v1575, %v1573
        %v1618 = vpack.c.b16 %v1578, %v1576
        %v1619 = vpack.c.b16 %v1579, %v1577
        %v1620 = vpack.c.b16 %v1582, %v1580
        %v1621 = vpack.c.b16 %v1583, %v1581
        %v1622 = vpack.c.b16 %v1586, %v1584
        %v1623 = vpack.c.b16 %v1587, %v1585
        %v1624 = vpack.c.b16 %v1590, %v1588
        %v1625 = vpack.c.b16 %v1591, %v1589
        %v1626 = vpack.c.b16 %v1594, %v1592
        %v1627 = vpack.c.b16 %v1595, %v1593
        %1660 = vmatprep.subr.bf16.mxu0 %v1597
        %1661 = vmatpush1.bf16.msra.mxu0 %v1596
        %1662 = vmatprep.subr.bf16.mxu0 %v1599
        %1663 = vmatpush1.bf16.msra.mxu0 %v1598
        %1664 = vmatprep.subr.bf16.mxu0 %v1601
        %1665 = vmatpush1.bf16.msra.mxu0 %v1600
        %1666 = vmatprep.subr.bf16.mxu0 %v1603
        %1667 = vmatpush1.bf16.msra.mxu0 %v1602
        %1668 = vmatprep.subr.bf16.mxu0 %v1605
        %1669 = vmatpush1.bf16.msra.mxu0 %v1604
        %1670 = vmatprep.subr.bf16.mxu0 %v1607
        %1671 = vmatpush1.bf16.msra.mxu0 %v1606
        %1672 = vmatprep.subr.bf16.mxu0 %v1609
        %1673 = vmatpush1.bf16.msra.mxu0 %v1608
        %1674 = vmatprep.subr.bf16.mxu0 %v1611
        %1675 = vmatpush1.bf16.msra.mxu0 %v1610
        %1676 = vmatprep.subr.bf16.mxu0 %v1613
        %1677 = vmatpush1.bf16.msra.mxu0 %v1612
        %1678 = vmatprep.subr.bf16.mxu0 %v1615
        %1679 = vmatpush1.bf16.msra.mxu0 %v1614
        %1680 = vmatprep.subr.bf16.mxu0 %v1617
        %1681 = vmatpush1.bf16.msra.mxu0 %v1616
        %1682 = vmatprep.subr.bf16.mxu0 %v1619
        %1683 = vmatpush1.bf16.msra.mxu0 %v1618
        %1684 = vmatprep.subr.bf16.mxu0 %v1621
        %1685 = vmatpush1.bf16.msra.mxu0 %v1620
        %1686 = vmatprep.subr.bf16.mxu0 %v1623
        %1687 = vmatpush1.bf16.msra.mxu0 %v1622
        %1688 = vmatprep.subr.bf16.mxu0 %v1625
        %1689 = vmatpush1.bf16.msra.mxu0 %v1624
        %1690 = vmatprep.subr.bf16.mxu0 %v1627
        %1691 = vmatpush1.bf16.msra.mxu0 %v1626
        %1692 = vmatprep.mubr.bf16.mxu0 %v1441
        %1693 = vmatmul.mubr.bf16.gmra.mrb[0].mxu0 %v1440
        %v1694 = vpop.f32.mrb[0].mxu0
        %v1695 = vadd.f32 %v1493, %v1694
        %v1696 = vpop.f32.mrb[0].mxu0
        %v1697 = vadd.f32 %v1497, %v1696
        %v1698 = vpop.f32.mrb[0].mxu0
        %v1699 = vadd.f32 %v1493, %v1698
        %v1700 = vpop.f32.mrb[0].mxu0
        %v1701 = vadd.f32 %v1497, %v1700
        %1702 = vmatprep.mubr.bf16.mxu0 %v1443
        %1703 = vmatmul.mubr.bf16.gmra.mrb[0].mxu0 %v1442
        %v1704 = vpop.f32.mrb[0].mxu0
        %v1705 = vadd.f32 %v1493, %v1704
        %v1706 = vpop.f32.mrb[0].mxu0
        %v1707 = vadd.f32 %v1497, %v1706
        %v1708 = vpop.f32.mrb[0].mxu0
        %v1709 = vadd.f32 %v1493, %v1708
        %v1710 = vpop.f32.mrb[0].mxu0
        %v1711 = vadd.f32 %v1497, %v1710
        %1712 = vmatprep.mubr.bf16.mxu0 %v1445
        %1713 = vmatmul.mubr.bf16.gmra.mrb[0].mxu0 %v1444
        %v1714 = vpop.f32.mrb[0].mxu0
        %v1715 = vadd.f32 %v1493, %v1714
        %v1716 = vpop.f32.mrb[0].mxu0
        %v1717 = vadd.f32 %v1497, %v1716
        %v1718 = vpop.f32.mrb[0].mxu0
        %v1719 = vadd.f32 %v1493, %v1718
        %v1720 = vpop.f32.mrb[0].mxu0
        %v1721 = vadd.f32 %v1497, %v1720
        %1722 = vmatprep.mubr.bf16.mxu0 %v1447
        %1723 = vmatmul.mubr.bf16.gmra.mrb[0].mxu0 %v1446
        %v1724 = vpop.f32.mrb[0].mxu0
        %v1725 = vadd.f32 %v1493, %v1724
        %v1726 = vpop.f32.mrb[0].mxu0
        %v1727 = vadd.f32 %v1497, %v1726
        %v1728 = vpop.f32.mrb[0].mxu0
        %v1729 = vadd.f32 %v1493, %v1728
        %v1730 = vpop.f32.mrb[0].mxu0
        %v1731 = vadd.f32 %v1497, %v1730
        %1732 = vmatprep.mubr.bf16.mxu0 %v1449
        %1733 = vmatmul.mubr.bf16.gmra.mrb[0].mxu0 %v1448
        %v1734 = vpop.f32.mrb[0].mxu0
        %v1735 = vadd.f32 %v1493, %v1734
        %v1736 = vpop.f32.mrb[0].mxu0
        %v1737 = vadd.f32 %v1497, %v1736
        %v1738 = vpop.f32.mrb[0].mxu0
        %v1739 = vadd.f32 %v1493, %v1738
        %v1740 = vpop.f32.mrb[0].mxu0
        %v1741 = vadd.f32 %v1497, %v1740
        %1742 = vmatprep.mubr.bf16.mxu0 %v1451
        %1743 = vmatmul.mubr.bf16.gmra.mrb[0].mxu0 %v1450
        %v1744 = vpop.f32.mrb[0].mxu0
        %v1745 = vadd.f32 %v1493, %v1744
        %v1746 = vpop.f32.mrb[0].mxu0
        %v1747 = vadd.f32 %v1497, %v1746
        %v1748 = vpop.f32.mrb[0].mxu0
        %v1749 = vadd.f32 %v1493, %v1748
        %v1750 = vpop.f32.mrb[0].mxu0
        %v1751 = vadd.f32 %v1497, %v1750
        %1752 = vmatprep.mubr.bf16.mxu0 %v1453
        %1753 = vmatmul.mubr.bf16.gmra.mrb[0].mxu0 %v1452
        %v1754 = vpop.f32.mrb[0].mxu0
        %v1755 = vadd.f32 %v1493, %v1754
        %v1756 = vpop.f32.mrb[0].mxu0
        %v1757 = vadd.f32 %v1497, %v1756
        %v1758 = vpop.f32.mrb[0].mxu0
        %v1759 = vadd.f32 %v1493, %v1758
        %v1760 = vpop.f32.mrb[0].mxu0
        %v1761 = vadd.f32 %v1497, %v1760
        %1762 = vmatprep.mubr.bf16.mxu0 %v1455
        %1763 = vmatmul.mubr.bf16.gmra.mrb[0].mxu0 %v1454
        %v1764 = vpop.f32.mrb[0].mxu0
        %v1765 = vadd.f32 %v1493, %v1764
        %v1766 = vpop.f32.mrb[0].mxu0
        %v1767 = vadd.f32 %v1497, %v1766
        %v1768 = vpop.f32.mrb[0].mxu0
        %v1769 = vadd.f32 %v1493, %v1768
        %v1770 = vpop.f32.mrb[0].mxu0
        %v1771 = vadd.f32 %v1497, %v1770
        %1772 = vdwg.mxu0
        %v1773 = vadd.f32 %v1695, 3.0
        %v1774 = vadd.f32 %v1697, 3.0
        %v1775 = vadd.f32 %v1699, 3.0
        %v1776 = vadd.f32 %v1701, 3.0
        %v1777 = vadd.f32 %v1705, 3.0
        %v1778 = vadd.f32 %v1707, 3.0
        %v1779 = vadd.f32 %v1709, 3.0
        %v1780 = vadd.f32 %v1711, 3.0
        %v1781 = vadd.f32 %v1715, 3.0
        %v1782 = vadd.f32 %v1717, 3.0
        %v1783 = vadd.f32 %v1719, 3.0
        %v1784 = vadd.f32 %v1721, 3.0
        %v1785 = vadd.f32 %v1725, 3.0
        %v1786 = vadd.f32 %v1727, 3.0
        %v1787 = vadd.f32 %v1729, 3.0
        %v1788 = vadd.f32 %v1731, 3.0
        %v1789 = vadd.f32 %v1735, 3.0
        %v1790 = vadd.f32 %v1737, 3.0
        %v1791 = vadd.f32 %v1739, 3.0
        %v1792 = vadd.f32 %v1741, 3.0
        %v1793 = vadd.f32 %v1745, 3.0
        %v1794 = vadd.f32 %v1747, 3.0
        %v1795 = vadd.f32 %v1749, 3.0
        %v1796 = vadd.f32 %v1751, 3.0
        %v1797 = vadd.f32 %v1755, 3.0
        %v1798 = vadd.f32 %v1757, 3.0
        %v1799 = vadd.f32 %v1759, 3.0
        %v1800 = vadd.f32 %v1761, 3.0
        %v1801 = vadd.f32 %v1765, 3.0
        %v1802 = vadd.f32 %v1767, 3.0
        %v1803 = vadd.f32 %v1769, 3.0
        %v1804 = vadd.f32 %v1771, 3.0
        %v1805 = vmax.f32 %v1773, 0.0
        %v1806 = vmax.f32 %v1774, 0.0
        %v1807 = vmax.f32 %v1775, 0.0
        %v1808 = vmax.f32 %v1776, 0.0
        %v1809 = vmax.f32 %v1777, 0.0
        %v1810 = vmax.f32 %v1778, 0.0
        %v1811 = vmax.f32 %v1779, 0.0
        %v1812 = vmax.f32 %v1780, 0.0
        %v1813 = vmax.f32 %v1781, 0.0
        %v1814 = vmax.f32 %v1782, 0.0
        %v1815 = vmax.f32 %v1783, 0.0
        %v1816 = vmax.f32 %v1784, 0.0
        %v1817 = vmax.f32 %v1785, 0.0
        %v1818 = vmax.f32 %v1786, 0.0
        %v1819 = vmax.f32 %v1787, 0.0
        %v1820 = vmax.f32 %v1788, 0.0
        %v1821 = vmax.f32 %v1789, 0.0
        %v1822 = vmax.f32 %v1790, 0.0
        %v1823 = vmax.f32 %v1791, 0.0
        %v1824 = vmax.f32 %v1792, 0.0
        %v1825 = vmax.f32 %v1793, 0.0
        %v1826 = vmax.f32 %v1794, 0.0
        %v1827 = vmax.f32 %v1795, 0.0
        %v1828 = vmax.f32 %v1796, 0.0
        %v1829 = vmax.f32 %v1797, 0.0
        %v1830 = vmax.f32 %v1798, 0.0
        %v1831 = vmax.f32 %v1799, 0.0
        %v1832 = vmax.f32 %v1800, 0.0
        %v1833 = vmax.f32 %v1801, 0.0
        %v1834 = vmax.f32 %v1802, 0.0
        %v1835 = vmax.f32 %v1803, 0.0
        %v1836 = vmax.f32 %v1804, 0.0
        %v1837 = vmin.f32 %v1805, 6.0
        %v1838 = vmin.f32 %v1806, 6.0
        %v1839 = vmin.f32 %v1807, 6.0
        %v1840 = vmin.f32 %v1808, 6.0
        %v1841 = vmin.f32 %v1809, 6.0
        %v1842 = vmin.f32 %v1810, 6.0
        %v1843 = vmin.f32 %v1811, 6.0
        %v1844 = vmin.f32 %v1812, 6.0
        %v1845 = vmin.f32 %v1813, 6.0
        %v1846 = vmin.f32 %v1814, 6.0
        %v1847 = vmin.f32 %v1815, 6.0
        %v1848 = vmin.f32 %v1816, 6.0
        %v1849 = vmin.f32 %v1817, 6.0
        %v1850 = vmin.f32 %v1818, 6.0
        %v1851 = vmin.f32 %v1819, 6.0
        %v1852 = vmin.f32 %v1820, 6.0
        %v1853 = vmin.f32 %v1821, 6.0
        %v1854 = vmin.f32 %v1822, 6.0
        %v1855 = vmin.f32 %v1823, 6.0
        %v1856 = vmin.f32 %v1824, 6.0
        %v1857 = vmin.f32 %v1825, 6.0
        %v1858 = vmin.f32 %v1826, 6.0
        %v1859 = vmin.f32 %v1827, 6.0
        %v1860 = vmin.f32 %v1828, 6.0
        %v1861 = vmin.f32 %v1829, 6.0
        %v1862 = vmin.f32 %v1830, 6.0
        %v1863 = vmin.f32 %v1831, 6.0
        %v1864 = vmin.f32 %v1832, 6.0
        %v1865 = vmin.f32 %v1833, 6.0
        %v1866 = vmin.f32 %v1834, 6.0
        %v1867 = vmin.f32 %v1835, 6.0
        %v1868 = vmin.f32 %v1836, 6.0
        %v1869 = vmul.f32 %v1837, 0.16666667
        %v1870 = vmul.f32 %v1838, 0.16666667
        %v1871 = vmul.f32 %v1839, 0.16666667
        %v1872 = vmul.f32 %v1840, 0.16666667
        %v1873 = vmul.f32 %v1841, 0.16666667
        %v1874 = vmul.f32 %v1842, 0.16666667
        %v1875 = vmul.f32 %v1843, 0.16666667
        %v1876 = vmul.f32 %v1844, 0.16666667
        %v1877 = vmul.f32 %v1845, 0.16666667
        %v1878 = vmul.f32 %v1846, 0.16666667
        %v1879 = vmul.f32 %v1847, 0.16666667
        %v1880 = vmul.f32 %v1848, 0.16666667
        %v1881 = vmul.f32 %v1849, 0.16666667
        %v1882 = vmul.f32 %v1850, 0.16666667
        %v1883 = vmul.f32 %v1851, 0.16666667
        %v1884 = vmul.f32 %v1852, 0.16666667
        %v1885 = vmul.f32 %v1853, 0.16666667
        %v1886 = vmul.f32 %v1854, 0.16666667
        %v1887 = vmul.f32 %v1855, 0.16666667
        %v1888 = vmul.f32 %v1856, 0.16666667
        %v1889 = vmul.f32 %v1857, 0.16666667
        %v1890 = vmul.f32 %v1858, 0.16666667
        %v1891 = vmul.f32 %v1859, 0.16666667
        %v1892 = vmul.f32 %v1860, 0.16666667
        %v1893 = vmul.f32 %v1861, 0.16666667
        %v1894 = vmul.f32 %v1862, 0.16666667
        %v1895 = vmul.f32 %v1863, 0.16666667
        %v1896 = vmul.f32 %v1864, 0.16666667
        %v1897 = vmul.f32 %v1865, 0.16666667
        %v1898 = vmul.f32 %v1866, 0.16666667
        %v1899 = vmul.f32 %v1867, 0.16666667
        %v1900 = vmul.f32 %v1868, 0.16666667
        %v1901 = vmul.f32 %v1869, %v1695
        %v1902 = vmul.f32 %v1870, %v1697
        %v1903 = vmul.f32 %v1871, %v1699
        %v1904 = vmul.f32 %v1872, %v1701
        %v1905 = vmul.f32 %v1873, %v1705
        %v1906 = vmul.f32 %v1874, %v1707
        %v1907 = vmul.f32 %v1875, %v1709
        %v1908 = vmul.f32 %v1876, %v1711
        %v1909 = vmul.f32 %v1877, %v1715
        %v1910 = vmul.f32 %v1878, %v1717
        %v1911 = vmul.f32 %v1879, %v1719
        %v1912 = vmul.f32 %v1880, %v1721
        %v1913 = vmul.f32 %v1881, %v1725
        %v1914 = vmul.f32 %v1882, %v1727
        %v1915 = vmul.f32 %v1883, %v1729
        %v1916 = vmul.f32 %v1884, %v1731
        %v1917 = vmul.f32 %v1885, %v1735
        %v1918 = vmul.f32 %v1886, %v1737
        %v1919 = vmul.f32 %v1887, %v1739
        %v1920 = vmul.f32 %v1888, %v1741
        %v1921 = vmul.f32 %v1889, %v1745
        %v1922 = vmul.f32 %v1890, %v1747
        %v1923 = vmul.f32 %v1891, %v1749
        %v1924 = vmul.f32 %v1892, %v1751
        %v1925 = vmul.f32 %v1893, %v1755
        %v1926 = vmul.f32 %v1894, %v1757
        %v1927 = vmul.f32 %v1895, %v1759
        %v1928 = vmul.f32 %v1896, %v1761
        %v1929 = vmul.f32 %v1897, %v1765
        %v1930 = vmul.f32 %v1898, %v1767
        %v1931 = vmul.f32 %v1899, %v1769
        %v1932 = vmul.f32 %v1900, %v1771
        %v1933 = vpack.c.bf16 %v1903, %v1901
        %v1934 = vpack.c.bf16 %v1904, %v1902
        %v1935 = vpack.c.bf16 %v1907, %v1905
        %v1936 = vpack.c.bf16 %v1908, %v1906
        %v1937 = vpack.c.bf16 %v1911, %v1909
        %v1938 = vpack.c.bf16 %v1912, %v1910
        %v1939 = vpack.c.bf16 %v1915, %v1913
        %v1940 = vpack.c.bf16 %v1916, %v1914
        %v1941 = vpack.c.bf16 %v1919, %v1917
        %v1942 = vpack.c.bf16 %v1920, %v1918
        %v1943 = vpack.c.bf16 %v1923, %v1921
        %v1944 = vpack.c.bf16 %v1924, %v1922
        %v1945 = vpack.c.bf16 %v1927, %v1925
        %v1946 = vpack.c.bf16 %v1928, %v1926
        %v1947 = vpack.c.bf16 %v1931, %v1929
        %v1948 = vpack.c.bf16 %v1932, %v1930
        %v1949 = vld [vmem:[#allocation9] sm:$0xff]
        %v1950 = vld [vmem:[#allocation9 + $0x8] sm:$0xff]
        %v1951 = vld [vmem:[#allocation9 + $0x10] sm:$0xff]
        %v1952 = vld [vmem:[#allocation9 + $0x18] sm:$0xff]
        %v1953 = vld [vmem:[#allocation9 + $0x20] sm:$0xff]
        %v1954 = vld [vmem:[#allocation9 + $0x28] sm:$0xff]
        %v1955 = vld [vmem:[#allocation9 + $0x30] sm:$0xff]
        %v1956 = vld [vmem:[#allocation9 + $0x38] sm:$0xff]
        %v1957 = vld [vmem:[#allocation9 + $0x40] sm:$0xff]
        %v1958 = vld [vmem:[#allocation9 + $0x48] sm:$0xff]
        %v1959 = vld [vmem:[#allocation9 + $0x50] sm:$0xff]
        %v1960 = vld [vmem:[#allocation9 + $0x58] sm:$0xff]
        %v1961 = vld [vmem:[#allocation9 + $0x60] sm:$0xff]
        %v1962 = vld [vmem:[#allocation9 + $0x68] sm:$0xff]
        %v1963 = vld [vmem:[#allocation9 + $0x70] sm:$0xff]
        %v1964 = vld [vmem:[#allocation9 + $0x78] sm:$0xff]
        %v1965 = vld [vmem:[#allocation9 + $0x80] sm:$0xff]
        %v1966 = vld [vmem:[#allocation9 + $0x88] sm:$0xff]
        %v1967 = vld [vmem:[#allocation9 + $0x90] sm:$0xff]
        %v1968 = vld [vmem:[#allocation9 + $0x98] sm:$0xff]
        %v1969 = vld [vmem:[#allocation9 + $0xa0] sm:$0xff]
        %v1970 = vld [vmem:[#allocation9 + $0xa8] sm:$0xff]
        %v1971 = vld [vmem:[#allocation9 + $0xb0] sm:$0xff]
        %v1972 = vld [vmem:[#allocation9 + $0xb8] sm:$0xff]
        %v1973 = vld [vmem:[#allocation9 + $0xc0] sm:$0xff]
        %v1974 = vld [vmem:[#allocation9 + $0xc8] sm:$0xff]
        %v1975 = vld [vmem:[#allocation9 + $0xd0] sm:$0xff]
        %v1976 = vld [vmem:[#allocation9 + $0xd8] sm:$0xff]
        %v1977 = vld [vmem:[#allocation9 + $0xe0] sm:$0xff]
        %v1978 = vld [vmem:[#allocation9 + $0xe8] sm:$0xff]
        %v1979 = vld [vmem:[#allocation9 + $0xf0] sm:$0xff]
        %v1980 = vld [vmem:[#allocation9 + $0xf8] sm:$0xff]
        %v1981 = vld [vmem:[%s12] sm:$0x3]
        %v1983 = vlaneseq
        %v1984 = vshrl.u32 %v1983, 7
        %v1985 = vsub.s32 0, %v1984
        %v1986 = vrot.slane %v1981, %v1985
        %v1987 = vlaneseq
        %v1988 = vshrl.u32 %v1987, 7
        %v1989 = vsub.s32 1, %v1988
        %v1990 = vrot.slane %v1981, %v1989
        %v2025 = vunpack.c.l.b16 %v1949
        %v2026 = vunpack.c.h.b16 %v1949
        %v2027 = vunpack.c.l.b16 %v1950
        %v2028 = vunpack.c.h.b16 %v1950
        %v2029 = vunpack.c.l.b16 %v1951
        %v2030 = vunpack.c.h.b16 %v1951
        %v2031 = vunpack.c.l.b16 %v1952
        %v2032 = vunpack.c.h.b16 %v1952
        %v2033 = vunpack.c.l.b16 %v1953
        %v2034 = vunpack.c.h.b16 %v1953
        %v2035 = vunpack.c.l.b16 %v1954
        %v2036 = vunpack.c.h.b16 %v1954
        %v2037 = vunpack.c.l.b16 %v1955
        %v2038 = vunpack.c.h.b16 %v1955
        %v2039 = vunpack.c.l.b16 %v1956
        %v2040 = vunpack.c.h.b16 %v1956
        %v2041 = vunpack.c.l.b16 %v1957
        %v2042 = vunpack.c.h.b16 %v1957
        %v2043 = vunpack.c.l.b16 %v1958
        %v2044 = vunpack.c.h.b16 %v1958
        %v2045 = vunpack.c.l.b16 %v1959
        %v2046 = vunpack.c.h.b16 %v1959
        %v2047 = vunpack.c.l.b16 %v1960
        %v2048 = vunpack.c.h.b16 %v1960
        %v2049 = vunpack.c.l.b16 %v1961
        %v2050 = vunpack.c.h.b16 %v1961
        %v2051 = vunpack.c.l.b16 %v1962
        %v2052 = vunpack.c.h.b16 %v1962
        %v2053 = vunpack.c.l.b16 %v1963
        %v2054 = vunpack.c.h.b16 %v1963
        %v2055 = vunpack.c.l.b16 %v1964
        %v2056 = vunpack.c.h.b16 %v1964
        %v2057 = vunpack.c.l.b16 %v1965
        %v2058 = vunpack.c.h.b16 %v1965
        %v2059 = vunpack.c.l.b16 %v1966
        %v2060 = vunpack.c.h.b16 %v1966
        %v2061 = vunpack.c.l.b16 %v1967
        %v2062 = vunpack.c.h.b16 %v1967
        %v2063 = vunpack.c.l.b16 %v1968
        %v2064 = vunpack.c.h.b16 %v1968
        %v2065 = vunpack.c.l.b16 %v1969
        %v2066 = vunpack.c.h.b16 %v1969
        %v2067 = vunpack.c.l.b16 %v1970
        %v2068 = vunpack.c.h.b16 %v1970
        %v2069 = vunpack.c.l.b16 %v1971
        %v2070 = vunpack.c.h.b16 %v1971
        %v2071 = vunpack.c.l.b16 %v1972
        %v2072 = vunpack.c.h.b16 %v1972
        %v2073 = vunpack.c.l.b16 %v1973
        %v2074 = vunpack.c.h.b16 %v1973
        %v2075 = vunpack.c.l.b16 %v1974
        %v2076 = vunpack.c.h.b16 %v1974
        %v2077 = vunpack.c.l.b16 %v1975
        %v2078 = vunpack.c.h.b16 %v1975
        %v2079 = vunpack.c.l.b16 %v1976
        %v2080 = vunpack.c.h.b16 %v1976
        %v2081 = vunpack.c.l.b16 %v1977
        %v2082 = vunpack.c.h.b16 %v1977
        %v2083 = vunpack.c.l.b16 %v1978
        %v2084 = vunpack.c.h.b16 %v1978
        %v2085 = vunpack.c.l.b16 %v1979
        %v2086 = vunpack.c.h.b16 %v1979
        %v2087 = vunpack.c.l.b16 %v1980
        %v2088 = vunpack.c.h.b16 %v1980
        %v2089 = vpack.c.b16 %v2027, %v2025
        %v2090 = vpack.c.b16 %v2028, %v2026
        %v2091 = vpack.c.b16 %v2031, %v2029
        %v2092 = vpack.c.b16 %v2032, %v2030
        %v2093 = vpack.c.b16 %v2035, %v2033
        %v2094 = vpack.c.b16 %v2036, %v2034
        %v2095 = vpack.c.b16 %v2039, %v2037
        %v2096 = vpack.c.b16 %v2040, %v2038
        %v2097 = vpack.c.b16 %v2043, %v2041
        %v2098 = vpack.c.b16 %v2044, %v2042
        %v2099 = vpack.c.b16 %v2047, %v2045
        %v2100 = vpack.c.b16 %v2048, %v2046
        %v2101 = vpack.c.b16 %v2051, %v2049
        %v2102 = vpack.c.b16 %v2052, %v2050
        %v2103 = vpack.c.b16 %v2055, %v2053
        %v2104 = vpack.c.b16 %v2056, %v2054
        %v2105 = vpack.c.b16 %v2059, %v2057
        %v2106 = vpack.c.b16 %v2060, %v2058
        %v2107 = vpack.c.b16 %v2063, %v2061
        %v2108 = vpack.c.b16 %v2064, %v2062
        %v2109 = vpack.c.b16 %v2067, %v2065
        %v2110 = vpack.c.b16 %v2068, %v2066
        %v2111 = vpack.c.b16 %v2071, %v2069
        %v2112 = vpack.c.b16 %v2072, %v2070
        %v2113 = vpack.c.b16 %v2075, %v2073
        %v2114 = vpack.c.b16 %v2076, %v2074
        %v2115 = vpack.c.b16 %v2079, %v2077
        %v2116 = vpack.c.b16 %v2080, %v2078
        %v2117 = vpack.c.b16 %v2083, %v2081
        %v2118 = vpack.c.b16 %v2084, %v2082
        %v2119 = vpack.c.b16 %v2087, %v2085
        %v2120 = vpack.c.b16 %v2088, %v2086
        %2153 = vmatprep.subr.bf16.mxu0 %v2090
        %2154 = vmatpush1.bf16.msra.mxu0 %v2089
        %2155 = vmatprep.subr.bf16.mxu0 %v2092
        %2156 = vmatpush1.bf16.msra.mxu0 %v2091
        %2157 = vmatprep.subr.bf16.mxu0 %v2094
        %2158 = vmatpush1.bf16.msra.mxu0 %v2093
        %2159 = vmatprep.subr.bf16.mxu0 %v2096
        %2160 = vmatpush1.bf16.msra.mxu0 %v2095
        %2161 = vmatprep.subr.bf16.mxu0 %v2098
        %2162 = vmatpush1.bf16.msra.mxu0 %v2097
        %2163 = vmatprep.subr.bf16.mxu0 %v2100
        %2164 = vmatpush1.bf16.msra.mxu0 %v2099
        %2165 = vmatprep.subr.bf16.mxu0 %v2102
        %2166 = vmatpush1.bf16.msra.mxu0 %v2101
        %2167 = vmatprep.subr.bf16.mxu0 %v2104
        %2168 = vmatpush1.bf16.msra.mxu0 %v2103
        %2169 = vmatprep.subr.bf16.mxu0 %v2106
        %2170 = vmatpush1.bf16.msra.mxu0 %v2105
        %2171 = vmatprep.subr.bf16.mxu0 %v2108
        %2172 = vmatpush1.bf16.msra.mxu0 %v2107
        %2173 = vmatprep.subr.bf16.mxu0 %v2110
        %2174 = vmatpush1.bf16.msra.mxu0 %v2109
        %2175 = vmatprep.subr.bf16.mxu0 %v2112
        %2176 = vmatpush1.bf16.msra.mxu0 %v2111
        %2177 = vmatprep.subr.bf16.mxu0 %v2114
        %2178 = vmatpush1.bf16.msra.mxu0 %v2113
        %2179 = vmatprep.subr.bf16.mxu0 %v2116
        %2180 = vmatpush1.bf16.msra.mxu0 %v2115
        %2181 = vmatprep.subr.bf16.mxu0 %v2118
        %2182 = vmatpush1.bf16.msra.mxu0 %v2117
        %2183 = vmatprep.subr.bf16.mxu0 %v2120
        %2184 = vmatpush1.bf16.msra.mxu0 %v2119
        %2185 = vmatprep.mubr.bf16.mxu0 %v1934
        %2186 = vmatmul.mubr.bf16.gmra.mrb[0].mxu0 %v1933
        %v2187 = vpop.f32.mrb[0].mxu0
        %v2188 = vadd.f32 %v1986, %v2187
        %v2189 = vpop.f32.mrb[0].mxu0
        %v2190 = vadd.f32 %v1990, %v2189
        %v2191 = vpop.f32.mrb[0].mxu0
        %v2192 = vadd.f32 %v1986, %v2191
        %v2193 = vpop.f32.mrb[0].mxu0
        %v2194 = vadd.f32 %v1990, %v2193
        %2195 = vmatprep.mubr.bf16.mxu0 %v1936
        %2196 = vmatmul.mubr.bf16.gmra.mrb[0].mxu0 %v1935
        %v2197 = vpop.f32.mrb[0].mxu0
        %v2198 = vadd.f32 %v1986, %v2197
        %v2199 = vpop.f32.mrb[0].mxu0
        %v2200 = vadd.f32 %v1990, %v2199
        %v2201 = vpop.f32.mrb[0].mxu0
        %v2202 = vadd.f32 %v1986, %v2201
        %v2203 = vpop.f32.mrb[0].mxu0
        %v2204 = vadd.f32 %v1990, %v2203
        %2205 = vmatprep.mubr.bf16.mxu0 %v1938
        %2206 = vmatmul.mubr.bf16.gmra.mrb[0].mxu0 %v1937
        %v2207 = vpop.f32.mrb[0].mxu0
        %v2208 = vadd.f32 %v1986, %v2207
        %v2209 = vpop.f32.mrb[0].mxu0
        %v2210 = vadd.f32 %v1990, %v2209
        %v2211 = vpop.f32.mrb[0].mxu0
        %v2212 = vadd.f32 %v1986, %v2211
        %v2213 = vpop.f32.mrb[0].mxu0
        %v2214 = vadd.f32 %v1990, %v2213
        %2215 = vmatprep.mubr.bf16.mxu0 %v1940
        %2216 = vmatmul.mubr.bf16.gmra.mrb[0].mxu0 %v1939
        %v2217 = vpop.f32.mrb[0].mxu0
        %v2218 = vadd.f32 %v1986, %v2217
        %v2219 = vpop.f32.mrb[0].mxu0
        %v2220 = vadd.f32 %v1990, %v2219
        %v2221 = vpop.f32.mrb[0].mxu0
        %v2222 = vadd.f32 %v1986, %v2221
        %v2223 = vpop.f32.mrb[0].mxu0
        %v2224 = vadd.f32 %v1990, %v2223
        %2225 = vmatprep.mubr.bf16.mxu0 %v1942
        %2226 = vmatmul.mubr.bf16.gmra.mrb[0].mxu0 %v1941
        %v2227 = vpop.f32.mrb[0].mxu0
        %v2228 = vadd.f32 %v1986, %v2227
        %v2229 = vpop.f32.mrb[0].mxu0
        %v2230 = vadd.f32 %v1990, %v2229
        %v2231 = vpop.f32.mrb[0].mxu0
        %v2232 = vadd.f32 %v1986, %v2231
        %v2233 = vpop.f32.mrb[0].mxu0
        %v2234 = vadd.f32 %v1990, %v2233
        %2235 = vmatprep.mubr.bf16.mxu0 %v1944
        %2236 = vmatmul.mubr.bf16.gmra.mrb[0].mxu0 %v1943
        %v2237 = vpop.f32.mrb[0].mxu0
        %v2238 = vadd.f32 %v1986, %v2237
        %v2239 = vpop.f32.mrb[0].mxu0
        %v2240 = vadd.f32 %v1990, %v2239
        %v2241 = vpop.f32.mrb[0].mxu0
        %v2242 = vadd.f32 %v1986, %v2241
        %v2243 = vpop.f32.mrb[0].mxu0
        %v2244 = vadd.f32 %v1990, %v2243
        %2245 = vmatprep.mubr.bf16.mxu0 %v1946
        %2246 = vmatmul.mubr.bf16.gmra.mrb[0].mxu0 %v1945
        %v2247 = vpop.f32.mrb[0].mxu0
        %v2248 = vadd.f32 %v1986, %v2247
        %v2249 = vpop.f32.mrb[0].mxu0
        %v2250 = vadd.f32 %v1990, %v2249
        %v2251 = vpop.f32.mrb[0].mxu0
        %v2252 = vadd.f32 %v1986, %v2251
        %v2253 = vpop.f32.mrb[0].mxu0
        %v2254 = vadd.f32 %v1990, %v2253
        %2255 = vmatprep.mubr.bf16.mxu0 %v1948
        %2256 = vmatmul.mubr.bf16.gmra.mrb[0].mxu0 %v1947
        %v2257 = vpop.f32.mrb[0].mxu0
        %v2258 = vadd.f32 %v1986, %v2257
        %v2259 = vpop.f32.mrb[0].mxu0
        %v2260 = vadd.f32 %v1990, %v2259
        %v2261 = vpop.f32.mrb[0].mxu0
        %v2262 = vadd.f32 %v1986, %v2261
        %v2263 = vpop.f32.mrb[0].mxu0
        %v2264 = vadd.f32 %v1990, %v2263
        %2265 = vdwg.mxu0
        %v2266 = vadd.f32 %v2188, 3.0
        %v2267 = vadd.f32 %v2190, 3.0
        %v2268 = vadd.f32 %v2192, 3.0
        %v2269 = vadd.f32 %v2194, 3.0
        %v2270 = vadd.f32 %v2198, 3.0
        %v2271 = vadd.f32 %v2200, 3.0
        %v2272 = vadd.f32 %v2202, 3.0
        %v2273 = vadd.f32 %v2204, 3.0
        %v2274 = vadd.f32 %v2208, 3.0
        %v2275 = vadd.f32 %v2210, 3.0
        %v2276 = vadd.f32 %v2212, 3.0
        %v2277 = vadd.f32 %v2214, 3.0
        %v2278 = vadd.f32 %v2218, 3.0
        %v2279 = vadd.f32 %v2220, 3.0
        %v2280 = vadd.f32 %v2222, 3.0
        %v2281 = vadd.f32 %v2224, 3.0
        %v2282 = vadd.f32 %v2228, 3.0
        %v2283 = vadd.f32 %v2230, 3.0
        %v2284 = vadd.f32 %v2232, 3.0
        %v2285 = vadd.f32 %v2234, 3.0
        %v2286 = vadd.f32 %v2238, 3.0
        %v2287 = vadd.f32 %v2240, 3.0
        %v2288 = vadd.f32 %v2242, 3.0
        %v2289 = vadd.f32 %v2244, 3.0
        %v2290 = vadd.f32 %v2248, 3.0
        %v2291 = vadd.f32 %v2250, 3.0
        %v2292 = vadd.f32 %v2252, 3.0
        %v2293 = vadd.f32 %v2254, 3.0
        %v2294 = vadd.f32 %v2258, 3.0
        %v2295 = vadd.f32 %v2260, 3.0
        %v2296 = vadd.f32 %v2262, 3.0
        %v2297 = vadd.f32 %v2264, 3.0
        %v2298 = vmax.f32 %v2266, 0.0
        %v2299 = vmax.f32 %v2267, 0.0
        %v2300 = vmax.f32 %v2268, 0.0
        %v2301 = vmax.f32 %v2269, 0.0
        %v2302 = vmax.f32 %v2270, 0.0
        %v2303 = vmax.f32 %v2271, 0.0
        %v2304 = vmax.f32 %v2272, 0.0
        %v2305 = vmax.f32 %v2273, 0.0
        %v2306 = vmax.f32 %v2274, 0.0
        %v2307 = vmax.f32 %v2275, 0.0
        %v2308 = vmax.f32 %v2276, 0.0
        %v2309 = vmax.f32 %v2277, 0.0
        %v2310 = vmax.f32 %v2278, 0.0
        %v2311 = vmax.f32 %v2279, 0.0
        %v2312 = vmax.f32 %v2280, 0.0
        %v2313 = vmax.f32 %v2281, 0.0
        %v2314 = vmax.f32 %v2282, 0.0
        %v2315 = vmax.f32 %v2283, 0.0
        %v2316 = vmax.f32 %v2284, 0.0
        %v2317 = vmax.f32 %v2285, 0.0
        %v2318 = vmax.f32 %v2286, 0.0
        %v2319 = vmax.f32 %v2287, 0.0
        %v2320 = vmax.f32 %v2288, 0.0
        %v2321 = vmax.f32 %v2289, 0.0
        %v2322 = vmax.f32 %v2290, 0.0
        %v2323 = vmax.f32 %v2291, 0.0
        %v2324 = vmax.f32 %v2292, 0.0
        %v2325 = vmax.f32 %v2293, 0.0
        %v2326 = vmax.f32 %v2294, 0.0
        %v2327 = vmax.f32 %v2295, 0.0
        %v2328 = vmax.f32 %v2296, 0.0
        %v2329 = vmax.f32 %v2297, 0.0
        %v2330 = vmin.f32 %v2298, 6.0
        %v2331 = vmin.f32 %v2299, 6.0
        %v2332 = vmin.f32 %v2300, 6.0
        %v2333 = vmin.f32 %v2301, 6.0
        %v2334 = vmin.f32 %v2302, 6.0
        %v2335 = vmin.f32 %v2303, 6.0
        %v2336 = vmin.f32 %v2304, 6.0
        %v2337 = vmin.f32 %v2305, 6.0
        %v2338 = vmin.f32 %v2306, 6.0
        %v2339 = vmin.f32 %v2307, 6.0
        %v2340 = vmin.f32 %v2308, 6.0
        %v2341 = vmin.f32 %v2309, 6.0
        %v2342 = vmin.f32 %v2310, 6.0
        %v2343 = vmin.f32 %v2311, 6.0
        %v2344 = vmin.f32 %v2312, 6.0
        %v2345 = vmin.f32 %v2313, 6.0
        %v2346 = vmin.f32 %v2314, 6.0
        %v2347 = vmin.f32 %v2315, 6.0
        %v2348 = vmin.f32 %v2316, 6.0
        %v2349 = vmin.f32 %v2317, 6.0
        %v2350 = vmin.f32 %v2318, 6.0
        %v2351 = vmin.f32 %v2319, 6.0
        %v2352 = vmin.f32 %v2320, 6.0
        %v2353 = vmin.f32 %v2321, 6.0
        %v2354 = vmin.f32 %v2322, 6.0
        %v2355 = vmin.f32 %v2323, 6.0
        %v2356 = vmin.f32 %v2324, 6.0
        %v2357 = vmin.f32 %v2325, 6.0
        %v2358 = vmin.f32 %v2326, 6.0
        %v2359 = vmin.f32 %v2327, 6.0
        %v2360 = vmin.f32 %v2328, 6.0
        %v2361 = vmin.f32 %v2329, 6.0
        %v2362 = vmul.f32 %v2330, 0.16666667
        %v2363 = vmul.f32 %v2331, 0.16666667
        %v2364 = vmul.f32 %v2332, 0.16666667
        %v2365 = vmul.f32 %v2333, 0.16666667
        %v2366 = vmul.f32 %v2334, 0.16666667
        %v2367 = vmul.f32 %v2335, 0.16666667
        %v2368 = vmul.f32 %v2336, 0.16666667
        %v2369 = vmul.f32 %v2337, 0.16666667
        %v2370 = vmul.f32 %v2338, 0.16666667
        %v2371 = vmul.f32 %v2339, 0.16666667
        %v2372 = vmul.f32 %v2340, 0.16666667
        %v2373 = vmul.f32 %v2341, 0.16666667
        %v2374 = vmul.f32 %v2342, 0.16666667
        %v2375 = vmul.f32 %v2343, 0.16666667
        %v2376 = vmul.f32 %v2344, 0.16666667
        %v2377 = vmul.f32 %v2345, 0.16666667
        %v2378 = vmul.f32 %v2346, 0.16666667
        %v2379 = vmul.f32 %v2347, 0.16666667
        %v2380 = vmul.f32 %v2348, 0.16666667
        %v2381 = vmul.f32 %v2349, 0.16666667
        %v2382 = vmul.f32 %v2350, 0.16666667
        %v2383 = vmul.f32 %v2351, 0.16666667
        %v2384 = vmul.f32 %v2352, 0.16666667
        %v2385 = vmul.f32 %v2353, 0.16666667
        %v2386 = vmul.f32 %v2354, 0.16666667
        %v2387 = vmul.f32 %v2355, 0.16666667
        %v2388 = vmul.f32 %v2356, 0.16666667
        %v2389 = vmul.f32 %v2357, 0.16666667
        %v2390 = vmul.f32 %v2358, 0.16666667
        %v2391 = vmul.f32 %v2359, 0.16666667
        %v2392 = vmul.f32 %v2360, 0.16666667
        %v2393 = vmul.f32 %v2361, 0.16666667
        %v2394 = vmul.f32 %v2362, %v2188
        %v2395 = vmul.f32 %v2363, %v2190
        %v2396 = vmul.f32 %v2364, %v2192
        %v2397 = vmul.f32 %v2365, %v2194
        %v2398 = vmul.f32 %v2366, %v2198
        %v2399 = vmul.f32 %v2367, %v2200
        %v2400 = vmul.f32 %v2368, %v2202
        %v2401 = vmul.f32 %v2369, %v2204
        %v2402 = vmul.f32 %v2370, %v2208
        %v2403 = vmul.f32 %v2371, %v2210
        %v2404 = vmul.f32 %v2372, %v2212
        %v2405 = vmul.f32 %v2373, %v2214
        %v2406 = vmul.f32 %v2374, %v2218
        %v2407 = vmul.f32 %v2375, %v2220
        %v2408 = vmul.f32 %v2376, %v2222
        %v2409 = vmul.f32 %v2377, %v2224
        %v2410 = vmul.f32 %v2378, %v2228
        %v2411 = vmul.f32 %v2379, %v2230
        %v2412 = vmul.f32 %v2380, %v2232
        %v2413 = vmul.f32 %v2381, %v2234
        %v2414 = vmul.f32 %v2382, %v2238
        %v2415 = vmul.f32 %v2383, %v2240
        %v2416 = vmul.f32 %v2384, %v2242
        %v2417 = vmul.f32 %v2385, %v2244
        %v2418 = vmul.f32 %v2386, %v2248
        %v2419 = vmul.f32 %v2387, %v2250
        %v2420 = vmul.f32 %v2388, %v2252
        %v2421 = vmul.f32 %v2389, %v2254
        %v2422 = vmul.f32 %v2390, %v2258
        %v2423 = vmul.f32 %v2391, %v2260
        %v2424 = vmul.f32 %v2392, %v2262
        %v2425 = vmul.f32 %v2393, %v2264
        %v2426 = vadd.f32 %v2394, %v1901
        %v2427 = vadd.f32 %v2395, %v1902
        %v2428 = vadd.f32 %v2396, %v1903
        %v2429 = vadd.f32 %v2397, %v1904
        %v2430 = vadd.f32 %v2398, %v1905
        %v2431 = vadd.f32 %v2399, %v1906
        %v2432 = vadd.f32 %v2400, %v1907
        %v2433 = vadd.f32 %v2401, %v1908
        %v2434 = vadd.f32 %v2402, %v1909
        %v2435 = vadd.f32 %v2403, %v1910
        %v2436 = vadd.f32 %v2404, %v1911
        %v2437 = vadd.f32 %v2405, %v1912
        %v2438 = vadd.f32 %v2406, %v1913
        %v2439 = vadd.f32 %v2407, %v1914
        %v2440 = vadd.f32 %v2408, %v1915
        %v2441 = vadd.f32 %v2409, %v1916
        %v2442 = vadd.f32 %v2410, %v1917
        %v2443 = vadd.f32 %v2411, %v1918
        %v2444 = vadd.f32 %v2412, %v1919
        %v2445 = vadd.f32 %v2413, %v1920
        %v2446 = vadd.f32 %v2414, %v1921
        %v2447 = vadd.f32 %v2415, %v1922
        %v2448 = vadd.f32 %v2416, %v1923
        %v2449 = vadd.f32 %v2417, %v1924
        %v2450 = vadd.f32 %v2418, %v1925
        %v2451 = vadd.f32 %v2419, %v1926
        %v2452 = vadd.f32 %v2420, %v1927
        %v2453 = vadd.f32 %v2421, %v1928
        %v2454 = vadd.f32 %v2422, %v1929
        %v2455 = vadd.f32 %v2423, %v1930
        %v2456 = vadd.f32 %v2424, %v1931
        %v2457 = vadd.f32 %v2425, %v1932
        %2458 = vst [vmem:[#allocation2 + $0x10] sm:$0xff] %v2426
        %2459 = vst [vmem:[#allocation2 + $0x18] sm:$0xff] %v2427
        %2460 = vst [vmem:[#allocation2 + $0x30] sm:$0xff] %v2428
        %2461 = vst [vmem:[#allocation2 + $0x38] sm:$0xff] %v2429
        %2462 = vst [vmem:[#allocation2 + $0x50] sm:$0xff] %v2430
        %2463 = vst [vmem:[#allocation2 + $0x58] sm:$0xff] %v2431
        %2464 = vst [vmem:[#allocation2 + $0x70] sm:$0xff] %v2432
        %2465 = vst [vmem:[#allocation2 + $0x78] sm:$0xff] %v2433
        %2466 = vst [vmem:[#allocation2 + $0x90] sm:$0xff] %v2434
        %2467 = vst [vmem:[#allocation2 + $0x98] sm:$0xff] %v2435
        %2468 = vst [vmem:[#allocation2 + $0xb0] sm:$0xff] %v2436
        %2469 = vst [vmem:[#allocation2 + $0xb8] sm:$0xff] %v2437
        %2470 = vst [vmem:[#allocation2 + $0xd0] sm:$0xff] %v2438
        %2471 = vst [vmem:[#allocation2 + $0xd8] sm:$0xff] %v2439
        %2472 = vst [vmem:[#allocation2 + $0xf0] sm:$0xff] %v2440
        %2473 = vst [vmem:[#allocation2 + $0xf8] sm:$0xff] %v2441
        %2474 = vst [vmem:[#allocation2 + $0x110] sm:$0xff] %v2442
        %2475 = vst [vmem:[#allocation2 + $0x118] sm:$0xff] %v2443
        %2476 = vst [vmem:[#allocation2 + $0x130] sm:$0xff] %v2444
        %2477 = vst [vmem:[#allocation2 + $0x138] sm:$0xff] %v2445
        %2478 = vst [vmem:[#allocation2 + $0x150] sm:$0xff] %v2446
        %2479 = vst [vmem:[#allocation2 + $0x158] sm:$0xff] %v2447
        %2480 = vst [vmem:[#allocation2 + $0x170] sm:$0xff] %v2448
        %2481 = vst [vmem:[#allocation2 + $0x178] sm:$0xff] %v2449
        %2482 = vst [vmem:[#allocation2 + $0x190] sm:$0xff] %v2450
        %2483 = vst [vmem:[#allocation2 + $0x198] sm:$0xff] %v2451
        %2484 = vst [vmem:[#allocation2 + $0x1b0] sm:$0xff] %v2452
        %2485 = vst [vmem:[#allocation2 + $0x1b8] sm:$0xff] %v2453
        %2486 = vst [vmem:[#allocation2 + $0x1d0] sm:$0xff] %v2454
        %2487 = vst [vmem:[#allocation2 + $0x1d8] sm:$0xff] %v2455
        %2488 = vst [vmem:[#allocation2 + $0x1f0] sm:$0xff] %v2456
        %2489 = vst [vmem:[#allocation2 + $0x1f8] sm:$0xff] %v2457
        %v2490 = vld [vmem:[#allocation2] sm:$0xff]
        %v2491 = vld [vmem:[#allocation2 + $0x8] sm:$0xff]
        %v2492 = vld [vmem:[#allocation2 + $0x10] sm:$0xff]
        %v2493 = vld [vmem:[#allocation2 + $0x18] sm:$0xff]
        %v2494 = vld [vmem:[#allocation2 + $0x20] sm:$0xff]
        %v2495 = vld [vmem:[#allocation2 + $0x28] sm:$0xff]
        %v2496 = vld [vmem:[#allocation2 + $0x30] sm:$0xff]
        %v2497 = vld [vmem:[#allocation2 + $0x38] sm:$0xff]
        %v2498 = vld [vmem:[#allocation2 + $0x40] sm:$0xff]
        %v2499 = vld [vmem:[#allocation2 + $0x48] sm:$0xff]
        %v2500 = vld [vmem:[#allocation2 + $0x50] sm:$0xff]
        %v2501 = vld [vmem:[#allocation2 + $0x58] sm:$0xff]
        %v2502 = vld [vmem:[#allocation2 + $0x60] sm:$0xff]
        %v2503 = vld [vmem:[#allocation2 + $0x68] sm:$0xff]
        %v2504 = vld [vmem:[#allocation2 + $0x70] sm:$0xff]
        %v2505 = vld [vmem:[#allocation2 + $0x78] sm:$0xff]
        %v2506 = vld [vmem:[#allocation2 + $0x80] sm:$0xff]
        %v2507 = vld [vmem:[#allocation2 + $0x88] sm:$0xff]
        %v2508 = vld [vmem:[#allocation2 + $0x90] sm:$0xff]
        %v2509 = vld [vmem:[#allocation2 + $0x98] sm:$0xff]
        %v2510 = vld [vmem:[#allocation2 + $0xa0] sm:$0xff]
        %v2511 = vld [vmem:[#allocation2 + $0xa8] sm:$0xff]
        %v2512 = vld [vmem:[#allocation2 + $0xb0] sm:$0xff]
        %v2513 = vld [vmem:[#allocation2 + $0xb8] sm:$0xff]
        %v2514 = vld [vmem:[#allocation2 + $0xc0] sm:$0xff]
        %v2515 = vld [vmem:[#allocation2 + $0xc8] sm:$0xff]
        %v2516 = vld [vmem:[#allocation2 + $0xd0] sm:$0xff]
        %v2517 = vld [vmem:[#allocation2 + $0xd8] sm:$0xff]
        %v2518 = vld [vmem:[#allocation2 + $0xe0] sm:$0xff]
        %v2519 = vld [vmem:[#allocation2 + $0xe8] sm:$0xff]
        %v2520 = vld [vmem:[#allocation2 + $0xf0] sm:$0xff]
        %v2521 = vld [vmem:[#allocation2 + $0xf8] sm:$0xff]
        %v2522 = vld [vmem:[#allocation2 + $0x100] sm:$0xff]
        %v2523 = vld [vmem:[#allocation2 + $0x108] sm:$0xff]
        %v2524 = vld [vmem:[#allocation2 + $0x110] sm:$0xff]
        %v2525 = vld [vmem:[#allocation2 + $0x118] sm:$0xff]
        %v2526 = vld [vmem:[#allocation2 + $0x120] sm:$0xff]
        %v2527 = vld [vmem:[#allocation2 + $0x128] sm:$0xff]
        %v2528 = vld [vmem:[#allocation2 + $0x130] sm:$0xff]
        %v2529 = vld [vmem:[#allocation2 + $0x138] sm:$0xff]
        %v2530 = vld [vmem:[#allocation2 + $0x140] sm:$0xff]
        %v2531 = vld [vmem:[#allocation2 + $0x148] sm:$0xff]
        %v2532 = vld [vmem:[#allocation2 + $0x150] sm:$0xff]
        %v2533 = vld [vmem:[#allocation2 + $0x158] sm:$0xff]
        %v2534 = vld [vmem:[#allocation2 + $0x160] sm:$0xff]
        %v2535 = vld [vmem:[#allocation2 + $0x168] sm:$0xff]
        %v2536 = vld [vmem:[#allocation2 + $0x170] sm:$0xff]
        %v2537 = vld [vmem:[#allocation2 + $0x178] sm:$0xff]
        %v2538 = vld [vmem:[#allocation2 + $0x180] sm:$0xff]
        %v2539 = vld [vmem:[#allocation2 + $0x188] sm:$0xff]
        %v2540 = vld [vmem:[#allocation2 + $0x190] sm:$0xff]
        %v2541 = vld [vmem:[#allocation2 + $0x198] sm:$0xff]
        %v2542 = vld [vmem:[#allocation2 + $0x1a0] sm:$0xff]
        %v2543 = vld [vmem:[#allocation2 + $0x1a8] sm:$0xff]
        %v2544 = vld [vmem:[#allocation2 + $0x1b0] sm:$0xff]
        %v2545 = vld [vmem:[#allocation2 + $0x1b8] sm:$0xff]
        %v2546 = vld [vmem:[#allocation2 + $0x1c0] sm:$0xff]
        %v2547 = vld [vmem:[#allocation2 + $0x1c8] sm:$0xff]
        %v2548 = vld [vmem:[#allocation2 + $0x1d0] sm:$0xff]
        %v2549 = vld [vmem:[#allocation2 + $0x1d8] sm:$0xff]
        %v2550 = vld [vmem:[#allocation2 + $0x1e0] sm:$0xff]
        %v2551 = vld [vmem:[#allocation2 + $0x1e8] sm:$0xff]
        %v2552 = vld [vmem:[#allocation2 + $0x1f0] sm:$0xff]
        %v2553 = vld [vmem:[#allocation2 + $0x1f8] sm:$0xff]
        %s2554 = sld [smem:[#allocation3]]
        %s2555 = sld [smem:[#allocation3 + $0x1]]
        %v2556 = vld [vmem:[%s520] sm:$0xff]
        %v2557 = vld [vmem:[%s520 + $0x8] sm:$0xff]
        %v2558 = vld [vmem:[%s520 + $0x10] sm:$0xff]
        %v2559 = vld [vmem:[%s520 + $0x18] sm:$0xff]
        %v2560 = vld [vmem:[%s520 + $0x20] sm:$0xff]
        %v2561 = vld [vmem:[%s520 + $0x28] sm:$0xff]
        %v2562 = vld [vmem:[%s520 + $0x30] sm:$0xff]
        %v2563 = vld [vmem:[%s520 + $0x38] sm:$0xff]
        %v2564 = vld [vmem:[%s520 + $0x40] sm:$0xff]
        %v2565 = vld [vmem:[%s520 + $0x48] sm:$0xff]
        %v2566 = vld [vmem:[%s520 + $0x50] sm:$0xff]
        %v2567 = vld [vmem:[%s520 + $0x58] sm:$0xff]
        %v2568 = vld [vmem:[%s520 + $0x60] sm:$0xff]
        %v2569 = vld [vmem:[%s520 + $0x68] sm:$0xff]
        %v2570 = vld [vmem:[%s520 + $0x70] sm:$0xff]
        %v2571 = vld [vmem:[%s520 + $0x78] sm:$0xff]
        %v2572 = vld [vmem:[%s520 + $0x80] sm:$0xff]
        %v2573 = vld [vmem:[%s520 + $0x88] sm:$0xff]
        %v2574 = vld [vmem:[%s520 + $0x90] sm:$0xff]
        %v2575 = vld [vmem:[%s520 + $0x98] sm:$0xff]
        %v2576 = vld [vmem:[%s520 + $0xa0] sm:$0xff]
        %v2577 = vld [vmem:[%s520 + $0xa8] sm:$0xff]
        %v2578 = vld [vmem:[%s520 + $0xb0] sm:$0xff]
        %v2579 = vld [vmem:[%s520 + $0xb8] sm:$0xff]
        %v2580 = vld [vmem:[%s520 + $0xc0] sm:$0xff]
        %v2581 = vld [vmem:[%s520 + $0xc8] sm:$0xff]
        %v2582 = vld [vmem:[%s520 + $0xd0] sm:$0xff]
        %v2583 = vld [vmem:[%s520 + $0xd8] sm:$0xff]
        %v2584 = vld [vmem:[%s520 + $0xe0] sm:$0xff]
        %v2585 = vld [vmem:[%s520 + $0xe8] sm:$0xff]
        %v2586 = vld [vmem:[%s520 + $0xf0] sm:$0xff]
        %v2587 = vld [vmem:[%s520 + $0xf8] sm:$0xff]
        %v2588 = vld [vmem:[%s520 + $0x100] sm:$0xff]
        %v2589 = vld [vmem:[%s520 + $0x108] sm:$0xff]
        %v2590 = vld [vmem:[%s520 + $0x110] sm:$0xff]
        %v2591 = vld [vmem:[%s520 + $0x118] sm:$0xff]
        %v2592 = vld [vmem:[%s520 + $0x120] sm:$0xff]
        %v2593 = vld [vmem:[%s520 + $0x128] sm:$0xff]
        %v2594 = vld [vmem:[%s520 + $0x130] sm:$0xff]
        %v2595 = vld [vmem:[%s520 + $0x138] sm:$0xff]
        %v2596 = vld [vmem:[%s520 + $0x140] sm:$0xff]
        %v2597 = vld [vmem:[%s520 + $0x148] sm:$0xff]
        %v2598 = vld [vmem:[%s520 + $0x150] sm:$0xff]
        %v2599 = vld [vmem:[%s520 + $0x158] sm:$0xff]
        %v2600 = vld [vmem:[%s520 + $0x160] sm:$0xff]
        %v2601 = vld [vmem:[%s520 + $0x168] sm:$0xff]
        %v2602 = vld [vmem:[%s520 + $0x170] sm:$0xff]
        %v2603 = vld [vmem:[%s520 + $0x178] sm:$0xff]
        %v2604 = vld [vmem:[%s520 + $0x180] sm:$0xff]
        %v2605 = vld [vmem:[%s520 + $0x188] sm:$0xff]
        %v2606 = vld [vmem:[%s520 + $0x190] sm:$0xff]
        %v2607 = vld [vmem:[%s520 + $0x198] sm:$0xff]
        %v2608 = vld [vmem:[%s520 + $0x1a0] sm:$0xff]
        %v2609 = vld [vmem:[%s520 + $0x1a8] sm:$0xff]
        %v2610 = vld [vmem:[%s520 + $0x1b0] sm:$0xff]
        %v2611 = vld [vmem:[%s520 + $0x1b8] sm:$0xff]
        %v2612 = vld [vmem:[%s520 + $0x1c0] sm:$0xff]
        %v2613 = vld [vmem:[%s520 + $0x1c8] sm:$0xff]
        %v2614 = vld [vmem:[%s520 + $0x1d0] sm:$0xff]
        %v2615 = vld [vmem:[%s520 + $0x1d8] sm:$0xff]
        %v2616 = vld [vmem:[%s520 + $0x1e0] sm:$0xff]
        %v2617 = vld [vmem:[%s520 + $0x1e8] sm:$0xff]
        %v2618 = vld [vmem:[%s520 + $0x1f0] sm:$0xff]
        %v2619 = vld [vmem:[%s520 + $0x1f8] sm:$0xff]
        %v2620 = vstv %s2554
        %vm2621 = vcmp.ge.f32.partialorder %v2556, %v2620
        %vm2622 = vcmp.ge.f32.partialorder %v2557, %v2620
        %vm2623 = vcmp.ge.f32.partialorder %v2558, %v2620
        %vm2624 = vcmp.ge.f32.partialorder %v2559, %v2620
        %vm2625 = vcmp.ge.f32.partialorder %v2560, %v2620
        %vm2626 = vcmp.ge.f32.partialorder %v2561, %v2620
        %vm2627 = vcmp.ge.f32.partialorder %v2562, %v2620
        %vm2628 = vcmp.ge.f32.partialorder %v2563, %v2620
        %vm2629 = vcmp.ge.f32.partialorder %v2564, %v2620
        %vm2630 = vcmp.ge.f32.partialorder %v2565, %v2620
        %vm2631 = vcmp.ge.f32.partialorder %v2566, %v2620
        %vm2632 = vcmp.ge.f32.partialorder %v2567, %v2620
        %vm2633 = vcmp.ge.f32.partialorder %v2568, %v2620
        %vm2634 = vcmp.ge.f32.partialorder %v2569, %v2620
        %vm2635 = vcmp.ge.f32.partialorder %v2570, %v2620
        %vm2636 = vcmp.ge.f32.partialorder %v2571, %v2620
        %vm2637 = vcmp.ge.f32.partialorder %v2572, %v2620
        %vm2638 = vcmp.ge.f32.partialorder %v2573, %v2620
        %vm2639 = vcmp.ge.f32.partialorder %v2574, %v2620
        %vm2640 = vcmp.ge.f32.partialorder %v2575, %v2620
        %vm2641 = vcmp.ge.f32.partialorder %v2576, %v2620
        %vm2642 = vcmp.ge.f32.partialorder %v2577, %v2620
        %vm2643 = vcmp.ge.f32.partialorder %v2578, %v2620
        %vm2644 = vcmp.ge.f32.partialorder %v2579, %v2620
        %vm2645 = vcmp.ge.f32.partialorder %v2580, %v2620
        %vm2646 = vcmp.ge.f32.partialorder %v2581, %v2620
        %vm2647 = vcmp.ge.f32.partialorder %v2582, %v2620
        %vm2648 = vcmp.ge.f32.partialorder %v2583, %v2620
        %vm2649 = vcmp.ge.f32.partialorder %v2584, %v2620
        %vm2650 = vcmp.ge.f32.partialorder %v2585, %v2620
        %vm2651 = vcmp.ge.f32.partialorder %v2586, %v2620
        %vm2652 = vcmp.ge.f32.partialorder %v2587, %v2620
        %vm2653 = vcmp.ge.f32.partialorder %v2588, %v2620
        %vm2654 = vcmp.ge.f32.partialorder %v2589, %v2620
        %vm2655 = vcmp.ge.f32.partialorder %v2590, %v2620
        %vm2656 = vcmp.ge.f32.partialorder %v2591, %v2620
        %vm2657 = vcmp.ge.f32.partialorder %v2592, %v2620
        %vm2658 = vcmp.ge.f32.partialorder %v2593, %v2620
        %vm2659 = vcmp.ge.f32.partialorder %v2594, %v2620
        %vm2660 = vcmp.ge.f32.partialorder %v2595, %v2620
        %vm2661 = vcmp.ge.f32.partialorder %v2596, %v2620
        %vm2662 = vcmp.ge.f32.partialorder %v2597, %v2620
        %vm2663 = vcmp.ge.f32.partialorder %v2598, %v2620
        %vm2664 = vcmp.ge.f32.partialorder %v2599, %v2620
        %vm2665 = vcmp.ge.f32.partialorder %v2600, %v2620
        %vm2666 = vcmp.ge.f32.partialorder %v2601, %v2620
        %vm2667 = vcmp.ge.f32.partialorder %v2602, %v2620
        %vm2668 = vcmp.ge.f32.partialorder %v2603, %v2620
        %vm2669 = vcmp.ge.f32.partialorder %v2604, %v2620
        %vm2670 = vcmp.ge.f32.partialorder %v2605, %v2620
        %vm2671 = vcmp.ge.f32.partialorder %v2606, %v2620
        %vm2672 = vcmp.ge.f32.partialorder %v2607, %v2620
        %vm2673 = vcmp.ge.f32.partialorder %v2608, %v2620
        %vm2674 = vcmp.ge.f32.partialorder %v2609, %v2620
        %vm2675 = vcmp.ge.f32.partialorder %v2610, %v2620
        %vm2676 = vcmp.ge.f32.partialorder %v2611, %v2620
        %vm2677 = vcmp.ge.f32.partialorder %v2612, %v2620
        %vm2678 = vcmp.ge.f32.partialorder %v2613, %v2620
        %vm2679 = vcmp.ge.f32.partialorder %v2614, %v2620
        %vm2680 = vcmp.ge.f32.partialorder %v2615, %v2620
        %vm2681 = vcmp.ge.f32.partialorder %v2616, %v2620
        %vm2682 = vcmp.ge.f32.partialorder %v2617, %v2620
        %vm2683 = vcmp.ge.f32.partialorder %v2618, %v2620
        %vm2684 = vcmp.ge.f32.partialorder %v2619, %v2620
        %v2685 = vstv %s2555
        %v2686 = vmul.f32 %v2490, %v2685
        %v2687 = vmul.f32 %v2491, %v2685
        %v2688 = vmul.f32 %v2492, %v2685
        %v2689 = vmul.f32 %v2493, %v2685
        %v2690 = vmul.f32 %v2494, %v2685
        %v2691 = vmul.f32 %v2495, %v2685
        %v2692 = vmul.f32 %v2496, %v2685
        %v2693 = vmul.f32 %v2497, %v2685
        %v2694 = vmul.f32 %v2498, %v2685
        %v2695 = vmul.f32 %v2499, %v2685
        %v2696 = vmul.f32 %v2500, %v2685
        %v2697 = vmul.f32 %v2501, %v2685
        %v2698 = vmul.f32 %v2502, %v2685
        %v2699 = vmul.f32 %v2503, %v2685
        %v2700 = vmul.f32 %v2504, %v2685
        %v2701 = vmul.f32 %v2505, %v2685
        %v2702 = vmul.f32 %v2506, %v2685
        %v2703 = vmul.f32 %v2507, %v2685
        %v2704 = vmul.f32 %v2508, %v2685
        %v2705 = vmul.f32 %v2509, %v2685
        %v2706 = vmul.f32 %v2510, %v2685
        %v2707 = vmul.f32 %v2511, %v2685
        %v2708 = vmul.f32 %v2512, %v2685
        %v2709 = vmul.f32 %v2513, %v2685
        %v2710 = vmul.f32 %v2514, %v2685
        %v2711 = vmul.f32 %v2515, %v2685
        %v2712 = vmul.f32 %v2516, %v2685
        %v2713 = vmul.f32 %v2517, %v2685
        %v2714 = vmul.f32 %v2518, %v2685
        %v2715 = vmul.f32 %v2519, %v2685
        %v2716 = vmul.f32 %v2520, %v2685
        %v2717 = vmul.f32 %v2521, %v2685
        %v2718 = vmul.f32 %v2522, %v2685
        %v2719 = vmul.f32 %v2523, %v2685
        %v2720 = vmul.f32 %v2524, %v2685
        %v2721 = vmul.f32 %v2525, %v2685
        %v2722 = vmul.f32 %v2526, %v2685
        %v2723 = vmul.f32 %v2527, %v2685
        %v2724 = vmul.f32 %v2528, %v2685
        %v2725 = vmul.f32 %v2529, %v2685
        %v2726 = vmul.f32 %v2530, %v2685
        %v2727 = vmul.f32 %v2531, %v2685
        %v2728 = vmul.f32 %v2532, %v2685
        %v2729 = vmul.f32 %v2533, %v2685
        %v2730 = vmul.f32 %v2534, %v2685
        %v2731 = vmul.f32 %v2535, %v2685
        %v2732 = vmul.f32 %v2536, %v2685
        %v2733 = vmul.f32 %v2537, %v2685
        %v2734 = vmul.f32 %v2538, %v2685
        %v2735 = vmul.f32 %v2539, %v2685
        %v2736 = vmul.f32 %v2540, %v2685
        %v2737 = vmul.f32 %v2541, %v2685
        %v2738 = vmul.f32 %v2542, %v2685
        %v2739 = vmul.f32 %v2543, %v2685
        %v2740 = vmul.f32 %v2544, %v2685
        %v2741 = vmul.f32 %v2545, %v2685
        %v2742 = vmul.f32 %v2546, %v2685
        %v2743 = vmul.f32 %v2547, %v2685
        %v2744 = vmul.f32 %v2548, %v2685
        %v2745 = vmul.f32 %v2549, %v2685
        %v2746 = vmul.f32 %v2550, %v2685
        %v2747 = vmul.f32 %v2551, %v2685
        %v2748 = vmul.f32 %v2552, %v2685
        %v2749 = vmul.f32 %v2553, %v2685
        %v2750 = vsel %vm2621, %v2686, 0.0
        %v2751 = vsel %vm2622, %v2687, 0.0
        %v2752 = vsel %vm2623, %v2688, 0.0
        %v2753 = vsel %vm2624, %v2689, 0.0
        %v2754 = vsel %vm2625, %v2690, 0.0
        %v2755 = vsel %vm2626, %v2691, 0.0
        %v2756 = vsel %vm2627, %v2692, 0.0
        %v2757 = vsel %vm2628, %v2693, 0.0
        %v2758 = vsel %vm2629, %v2694, 0.0
        %v2759 = vsel %vm2630, %v2695, 0.0
        %v2760 = vsel %vm2631, %v2696, 0.0
        %v2761 = vsel %vm2632, %v2697, 0.0
        %v2762 = vsel %vm2633, %v2698, 0.0
        %v2763 = vsel %vm2634, %v2699, 0.0
        %v2764 = vsel %vm2635, %v2700, 0.0
        %v2765 = vsel %vm2636, %v2701, 0.0
        %v2766 = vsel %vm2637, %v2702, 0.0
        %v2767 = vsel %vm2638, %v2703, 0.0
        %v2768 = vsel %vm2639, %v2704, 0.0
        %v2769 = vsel %vm2640, %v2705, 0.0
        %v2770 = vsel %vm2641, %v2706, 0.0
        %v2771 = vsel %vm2642, %v2707, 0.0
        %v2772 = vsel %vm2643, %v2708, 0.0
        %v2773 = vsel %vm2644, %v2709, 0.0
        %v2774 = vsel %vm2645, %v2710, 0.0
        %v2775 = vsel %vm2646, %v2711, 0.0
        %v2776 = vsel %vm2647, %v2712, 0.0
        %v2777 = vsel %vm2648, %v2713, 0.0
        %v2778 = vsel %vm2649, %v2714, 0.0
        %v2779 = vsel %vm2650, %v2715, 0.0
        %v2780 = vsel %vm2651, %v2716, 0.0
        %v2781 = vsel %vm2652, %v2717, 0.0
        %v2782 = vsel %vm2653, %v2718, 0.0
        %v2783 = vsel %vm2654, %v2719, 0.0
        %v2784 = vsel %vm2655, %v2720, 0.0
        %v2785 = vsel %vm2656, %v2721, 0.0
        %v2786 = vsel %vm2657, %v2722, 0.0
        %v2787 = vsel %vm2658, %v2723, 0.0
        %v2788 = vsel %vm2659, %v2724, 0.0
        %v2789 = vsel %vm2660, %v2725, 0.0
        %v2790 = vsel %vm2661, %v2726, 0.0
        %v2791 = vsel %vm2662, %v2727, 0.0
        %v2792 = vsel %vm2663, %v2728, 0.0
        %v2793 = vsel %vm2664, %v2729, 0.0
        %v2794 = vsel %vm2665, %v2730, 0.0
        %v2795 = vsel %vm2666, %v2731, 0.0
        %v2796 = vsel %vm2667, %v2732, 0.0
        %v2797 = vsel %vm2668, %v2733, 0.0
        %v2798 = vsel %vm2669, %v2734, 0.0
        %v2799 = vsel %vm2670, %v2735, 0.0
        %v2800 = vsel %vm2671, %v2736, 0.0
        %v2801 = vsel %vm2672, %v2737, 0.0
        %v2802 = vsel %vm2673, %v2738, 0.0
        %v2803 = vsel %vm2674, %v2739, 0.0
        %v2804 = vsel %vm2675, %v2740, 0.0
        %v2805 = vsel %vm2676, %v2741, 0.0
        %v2806 = vsel %vm2677, %v2742, 0.0
        %v2807 = vsel %vm2678, %v2743, 0.0
        %v2808 = vsel %vm2679, %v2744, 0.0
        %v2809 = vsel %vm2680, %v2745, 0.0
        %v2810 = vsel %vm2681, %v2746, 0.0
        %v2811 = vsel %vm2682, %v2747, 0.0
        %v2812 = vsel %vm2683, %v2748, 0.0
        %v2813 = vsel %vm2684, %v2749, 0.0
        %v2814 = vpack.c.bf16 %v2754, %v2750
        %v2815 = vpack.c.bf16 %v2755, %v2751
        %v2816 = vpack.c.bf16 %v2756, %v2752
        %v2817 = vpack.c.bf16 %v2757, %v2753
        %v2818 = vpack.c.bf16 %v2762, %v2758
        %v2819 = vpack.c.bf16 %v2763, %v2759
        %v2820 = vpack.c.bf16 %v2764, %v2760
        %v2821 = vpack.c.bf16 %v2765, %v2761
        %v2822 = vpack.c.bf16 %v2770, %v2766
        %v2823 = vpack.c.bf16 %v2771, %v2767
        %v2824 = vpack.c.bf16 %v2772, %v2768
        %v2825 = vpack.c.bf16 %v2773, %v2769
        %v2826 = vpack.c.bf16 %v2778, %v2774
        %v2827 = vpack.c.bf16 %v2779, %v2775
        %v2828 = vpack.c.bf16 %v2780, %v2776
        %v2829 = vpack.c.bf16 %v2781, %v2777
        %v2830 = vpack.c.bf16 %v2786, %v2782
        %v2831 = vpack.c.bf16 %v2787, %v2783
        %v2832 = vpack.c.bf16 %v2788, %v2784
        %v2833 = vpack.c.bf16 %v2789, %v2785
        %v2834 = vpack.c.bf16 %v2794, %v2790
        %v2835 = vpack.c.bf16 %v2795, %v2791
        %v2836 = vpack.c.bf16 %v2796, %v2792
        %v2837 = vpack.c.bf16 %v2797, %v2793
        %v2838 = vpack.c.bf16 %v2802, %v2798
        %v2839 = vpack.c.bf16 %v2803, %v2799
        %v2840 = vpack.c.bf16 %v2804, %v2800
        %v2841 = vpack.c.bf16 %v2805, %v2801
        %v2842 = vpack.c.bf16 %v2810, %v2806
        %v2843 = vpack.c.bf16 %v2811, %v2807
        %v2844 = vpack.c.bf16 %v2812, %v2808
        %v2845 = vpack.c.bf16 %v2813, %v2809
        %v2846 = vld [vmem:[#allocation10] sm:$0xf]
        %v2847 = vld [vmem:[#allocation10 + $0x4] sm:$0xf]
        %v2848 = vld [vmem:[#allocation10 + $0x8] sm:$0xf]
        %v2849 = vld [vmem:[#allocation10 + $0xc] sm:$0xf]
        %v2850 = vld [vmem:[#allocation10 + $0x10] sm:$0xf]
        %v2851 = vld [vmem:[#allocation10 + $0x14] sm:$0xf]
        %v2852 = vld [vmem:[#allocation10 + $0x18] sm:$0xf]
        %v2853 = vld [vmem:[#allocation10 + $0x1c] sm:$0xf]
        %v2854 = vld [vmem:[#allocation10 + $0x20] sm:$0xf]
        %v2855 = vld [vmem:[#allocation10 + $0x24] sm:$0xf]
        %v2856 = vld [vmem:[#allocation10 + $0x28] sm:$0xf]
        %v2857 = vld [vmem:[#allocation10 + $0x2c] sm:$0xf]
        %v2858 = vld [vmem:[#allocation10 + $0x30] sm:$0xf]
        %v2859 = vld [vmem:[#allocation10 + $0x34] sm:$0xf]
        %v2860 = vld [vmem:[#allocation10 + $0x38] sm:$0xf]
        %v2861 = vld [vmem:[#allocation10 + $0x3c] sm:$0xf]
        %v2862 = vld [vmem:[#allocation10 + $0x40] sm:$0xf]
        %v2863 = vld [vmem:[#allocation10 + $0x44] sm:$0xf]
        %v2864 = vld [vmem:[#allocation10 + $0x48] sm:$0xf]
        %v2865 = vld [vmem:[#allocation10 + $0x4c] sm:$0xf]
        %v2866 = vld [vmem:[#allocation10 + $0x50] sm:$0xf]
        %v2867 = vld [vmem:[#allocation10 + $0x54] sm:$0xf]
        %v2868 = vld [vmem:[#allocation10 + $0x58] sm:$0xf]
        %v2869 = vld [vmem:[#allocation10 + $0x5c] sm:$0xf]
        %v2870 = vld [vmem:[#allocation10 + $0x60] sm:$0xf]
        %v2871 = vld [vmem:[#allocation10 + $0x64] sm:$0xf]
        %v2872 = vld [vmem:[#allocation10 + $0x68] sm:$0xf]
        %v2873 = vld [vmem:[#allocation10 + $0x6c] sm:$0xf]
        %v2874 = vld [vmem:[#allocation10 + $0x70] sm:$0xf]
        %v2875 = vld [vmem:[#allocation10 + $0x74] sm:$0xf]
        %v2876 = vld [vmem:[#allocation10 + $0x78] sm:$0xf]
        %v2877 = vld [vmem:[#allocation10 + $0x7c] sm:$0xf]
        %v2878 = vld [vmem:[#allocation10 + $0x80] sm:$0xf]
        %v2879 = vld [vmem:[#allocation10 + $0x84] sm:$0xf]
        %v2880 = vld [vmem:[#allocation10 + $0x88] sm:$0xf]
        %v2881 = vld [vmem:[#allocation10 + $0x8c] sm:$0xf]
        %v2882 = vld [vmem:[#allocation10 + $0x90] sm:$0xf]
        %v2883 = vld [vmem:[#allocation10 + $0x94] sm:$0xf]
        %v2884 = vld [vmem:[#allocation10 + $0x98] sm:$0xf]
        %v2885 = vld [vmem:[#allocation10 + $0x9c] sm:$0xf]
        %v2886 = vld [vmem:[#allocation10 + $0xa0] sm:$0xf]
        %v2887 = vld [vmem:[#allocation10 + $0xa4] sm:$0xf]
        %v2888 = vld [vmem:[#allocation10 + $0xa8] sm:$0xf]
        %v2889 = vld [vmem:[#allocation10 + $0xac] sm:$0xf]
        %v2890 = vld [vmem:[#allocation10 + $0xb0] sm:$0xf]
        %v2891 = vld [vmem:[#allocation10 + $0xb4] sm:$0xf]
        %v2892 = vld [vmem:[#allocation10 + $0xb8] sm:$0xf]
        %v2893 = vld [vmem:[#allocation10 + $0xbc] sm:$0xf]
        %v2894 = vld [vmem:[#allocation10 + $0xc0] sm:$0xf]
        %v2895 = vld [vmem:[#allocation10 + $0xc4] sm:$0xf]
        %v2896 = vld [vmem:[#allocation10 + $0xc8] sm:$0xf]
        %v2897 = vld [vmem:[#allocation10 + $0xcc] sm:$0xf]
        %v2898 = vld [vmem:[#allocation10 + $0xd0] sm:$0xf]
        %v2899 = vld [vmem:[#allocation10 + $0xd4] sm:$0xf]
        %v2900 = vld [vmem:[#allocation10 + $0xd8] sm:$0xf]
        %v2901 = vld [vmem:[#allocation10 + $0xdc] sm:$0xf]
        %v2902 = vld [vmem:[#allocation10 + $0xe0] sm:$0xf]
        %v2903 = vld [vmem:[#allocation10 + $0xe4] sm:$0xf]
        %v2904 = vld [vmem:[#allocation10 + $0xe8] sm:$0xf]
        %v2905 = vld [vmem:[#allocation10 + $0xec] sm:$0xf]
        %v2906 = vld [vmem:[#allocation10 + $0xf0] sm:$0xf]
        %v2907 = vld [vmem:[#allocation10 + $0xf4] sm:$0xf]
        %v2908 = vld [vmem:[#allocation10 + $0xf8] sm:$0xf]
        %v2909 = vld [vmem:[#allocation10 + $0xfc] sm:$0xf]
        %v2910 = vld [vmem:[%s14] sm:$0x1]
        %v2912 = vlaneseq
        %v2913 = vshrl.u32 %v2912, 7
        %v2914 = vsub.s32 0, %v2913
        %v2915 = vrot.slane %v2910, %v2914
        %v2981 = vunpack.c.l.b16 %v2846
        %v2982 = vunpack.c.l.b16 %v2847
        %v2983 = vunpack.c.l.b16 %v2848
        %v2984 = vunpack.c.l.b16 %v2849
        %v2985 = vunpack.c.l.b16 %v2850
        %v2986 = vunpack.c.l.b16 %v2851
        %v2987 = vunpack.c.l.b16 %v2852
        %v2988 = vunpack.c.l.b16 %v2853
        %v2989 = vunpack.c.l.b16 %v2854
        %v2990 = vunpack.c.l.b16 %v2855
        %v2991 = vunpack.c.l.b16 %v2856
        %v2992 = vunpack.c.l.b16 %v2857
        %v2993 = vunpack.c.l.b16 %v2858
        %v2994 = vunpack.c.l.b16 %v2859
        %v2995 = vunpack.c.l.b16 %v2860
        %v2996 = vunpack.c.l.b16 %v2861
        %v2997 = vunpack.c.l.b16 %v2862
        %v2998 = vunpack.c.l.b16 %v2863
        %v2999 = vunpack.c.l.b16 %v2864
        %v3000 = vunpack.c.l.b16 %v2865
        %v3001 = vunpack.c.l.b16 %v2866
        %v3002 = vunpack.c.l.b16 %v2867
        %v3003 = vunpack.c.l.b16 %v2868
        %v3004 = vunpack.c.l.b16 %v2869
        %v3005 = vunpack.c.l.b16 %v2870
        %v3006 = vunpack.c.l.b16 %v2871
        %v3007 = vunpack.c.l.b16 %v2872
        %v3008 = vunpack.c.l.b16 %v2873
        %v3009 = vunpack.c.l.b16 %v2874
        %v3010 = vunpack.c.l.b16 %v2875
        %v3011 = vunpack.c.l.b16 %v2876
        %v3012 = vunpack.c.l.b16 %v2877
        %v3013 = vunpack.c.l.b16 %v2878
        %v3014 = vunpack.c.l.b16 %v2879
        %v3015 = vunpack.c.l.b16 %v2880
        %v3016 = vunpack.c.l.b16 %v2881
        %v3017 = vunpack.c.l.b16 %v2882
        %v3018 = vunpack.c.l.b16 %v2883
        %v3019 = vunpack.c.l.b16 %v2884
        %v3020 = vunpack.c.l.b16 %v2885
        %v3021 = vunpack.c.l.b16 %v2886
        %v3022 = vunpack.c.l.b16 %v2887
        %v3023 = vunpack.c.l.b16 %v2888
        %v3024 = vunpack.c.l.b16 %v2889
        %v3025 = vunpack.c.l.b16 %v2890
        %v3026 = vunpack.c.l.b16 %v2891
        %v3027 = vunpack.c.l.b16 %v2892
        %v3028 = vunpack.c.l.b16 %v2893
        %v3029 = vunpack.c.l.b16 %v2894
        %v3030 = vunpack.c.l.b16 %v2895
        %v3031 = vunpack.c.l.b16 %v2896
        %v3032 = vunpack.c.l.b16 %v2897
        %v3033 = vunpack.c.l.b16 %v2898
        %v3034 = vunpack.c.l.b16 %v2899
        %v3035 = vunpack.c.l.b16 %v2900
        %v3036 = vunpack.c.l.b16 %v2901
        %v3037 = vunpack.c.l.b16 %v2902
        %v3038 = vunpack.c.l.b16 %v2903
        %v3039 = vunpack.c.l.b16 %v2904
        %v3040 = vunpack.c.l.b16 %v2905
        %v3041 = vunpack.c.l.b16 %v2906
        %v3042 = vunpack.c.l.b16 %v2907
        %v3043 = vunpack.c.l.b16 %v2908
        %v3044 = vunpack.c.l.b16 %v2909
        %v3045 = vpack.c.b16 %v2982, %v2981
        %v3046 = vpack.c.b16 %v2984, %v2983
        %v3047 = vpack.c.b16 %v2986, %v2985
        %v3048 = vpack.c.b16 %v2988, %v2987
        %v3049 = vpack.c.b16 %v2990, %v2989
        %v3050 = vpack.c.b16 %v2992, %v2991
        %v3051 = vpack.c.b16 %v2994, %v2993
        %v3052 = vpack.c.b16 %v2996, %v2995
        %v3053 = vpack.c.b16 %v2998, %v2997
        %v3054 = vpack.c.b16 %v3000, %v2999
        %v3055 = vpack.c.b16 %v3002, %v3001
        %v3056 = vpack.c.b16 %v3004, %v3003
        %v3057 = vpack.c.b16 %v3006, %v3005
        %v3058 = vpack.c.b16 %v3008, %v3007
        %v3059 = vpack.c.b16 %v3010, %v3009
        %v3060 = vpack.c.b16 %v3012, %v3011
        %v3061 = vpack.c.b16 %v3014, %v3013
        %v3062 = vpack.c.b16 %v3016, %v3015
        %v3063 = vpack.c.b16 %v3018, %v3017
        %v3064 = vpack.c.b16 %v3020, %v3019
        %v3065 = vpack.c.b16 %v3022, %v3021
        %v3066 = vpack.c.b16 %v3024, %v3023
        %v3067 = vpack.c.b16 %v3026, %v3025
        %v3068 = vpack.c.b16 %v3028, %v3027
        %v3069 = vpack.c.b16 %v3030, %v3029
        %v3070 = vpack.c.b16 %v3032, %v3031
        %v3071 = vpack.c.b16 %v3034, %v3033
        %v3072 = vpack.c.b16 %v3036, %v3035
        %v3073 = vpack.c.b16 %v3038, %v3037
        %v3074 = vpack.c.b16 %v3040, %v3039
        %v3075 = vpack.c.b16 %v3042, %v3041
        %v3076 = vpack.c.b16 %v3044, %v3043
        %3109 = vmatprep.subr.bf16.mxu0 0
        %3110 = vmatpush1.bf16.msra.mxu0 %v3045
        %3111 = vmatprep.subr.bf16.mxu0 0
        %3112 = vmatpush1.bf16.msra.mxu0 %v3046
        %3113 = vmatprep.subr.bf16.mxu0 0
        %3114 = vmatpush1.bf16.msra.mxu0 %v3047
        %3115 = vmatprep.subr.bf16.mxu0 0
        %3116 = vmatpush1.bf16.msra.mxu0 %v3048
        %3117 = vmatprep.subr.bf16.mxu0 0
        %3118 = vmatpush1.bf16.msra.mxu0 %v3049
        %3119 = vmatprep.subr.bf16.mxu0 0
        %3120 = vmatpush1.bf16.msra.mxu0 %v3050
        %3121 = vmatprep.subr.bf16.mxu0 0
        %3122 = vmatpush1.bf16.msra.mxu0 %v3051
        %3123 = vmatprep.subr.bf16.mxu0 0
        %3124 = vmatpush1.bf16.msra.mxu0 %v3052
        %3125 = vmatprep.subr.bf16.mxu0 0
        %3126 = vmatpush1.bf16.msra.mxu0 %v3053
        %3127 = vmatprep.subr.bf16.mxu0 0
        %3128 = vmatpush1.bf16.msra.mxu0 %v3054
        %3129 = vmatprep.subr.bf16.mxu0 0
        %3130 = vmatpush1.bf16.msra.mxu0 %v3055
        %3131 = vmatprep.subr.bf16.mxu0 0
        %3132 = vmatpush1.bf16.msra.mxu0 %v3056
        %3133 = vmatprep.subr.bf16.mxu0 0
        %3134 = vmatpush1.bf16.msra.mxu0 %v3057
        %3135 = vmatprep.subr.bf16.mxu0 0
        %3136 = vmatpush1.bf16.msra.mxu0 %v3058
        %3137 = vmatprep.subr.bf16.mxu0 0
        %3138 = vmatpush1.bf16.msra.mxu0 %v3059
        %3139 = vmatprep.subr.bf16.mxu0 0
        %3140 = vmatpush1.bf16.msra.mxu0 %v3060
        %3141 = vmatprep.mubr.bf16.mxu0 %v2815
        %3142 = vmatmul.mubr.bf16.gmra.mrb[0].mxu0 %v2814
        %v3143 = vpop.f32.mrb[0].mxu0
        %v3144 = vadd.f32 %v2915, %v3143
        %v3145 = vpop.f32.mrb[0].mxu0
        %v3146 = vpop.f32.mrb[0].mxu0
        %v3147 = vadd.f32 %v2915, %v3146
        %v3148 = vpop.f32.mrb[0].mxu0
        %3149 = vmatprep.mubr.bf16.mxu0 %v2819
        %3150 = vmatmul.mubr.bf16.gmra.mrb[0].mxu0 %v2818
        %v3151 = vpop.f32.mrb[0].mxu0
        %v3152 = vadd.f32 %v2915, %v3151
        %v3153 = vpop.f32.mrb[0].mxu0
        %v3154 = vpop.f32.mrb[0].mxu0
        %v3155 = vadd.f32 %v2915, %v3154
        %v3156 = vpop.f32.mrb[0].mxu0
        %3157 = vmatprep.mubr.bf16.mxu0 %v2823
        %3158 = vmatmul.mubr.bf16.gmra.mrb[0].mxu0 %v2822
        %v3159 = vpop.f32.mrb[0].mxu0
        %v3160 = vadd.f32 %v2915, %v3159
        %v3161 = vpop.f32.mrb[0].mxu0
        %v3162 = vpop.f32.mrb[0].mxu0
        %v3163 = vadd.f32 %v2915, %v3162
        %v3164 = vpop.f32.mrb[0].mxu0
        %3165 = vmatprep.mubr.bf16.mxu0 %v2827
        %3166 = vmatmul.mubr.bf16.gmra.mrb[0].mxu0 %v2826
        %v3167 = vpop.f32.mrb[0].mxu0
        %v3168 = vadd.f32 %v2915, %v3167
        %v3169 = vpop.f32.mrb[0].mxu0
        %v3170 = vpop.f32.mrb[0].mxu0
        %v3171 = vadd.f32 %v2915, %v3170
        %v3172 = vpop.f32.mrb[0].mxu0
        %3173 = vmatprep.mubr.bf16.mxu0 %v2831
        %3174 = vmatmul.mubr.bf16.gmra.mrb[0].mxu0 %v2830
        %v3175 = vpop.f32.mrb[0].mxu0
        %v3176 = vadd.f32 %v2915, %v3175
        %v3177 = vpop.f32.mrb[0].mxu0
        %v3178 = vpop.f32.mrb[0].mxu0
        %v3179 = vadd.f32 %v2915, %v3178
        %v3180 = vpop.f32.mrb[0].mxu0
        %3181 = vmatprep.mubr.bf16.mxu0 %v2835
        %3182 = vmatmul.mubr.bf16.gmra.mrb[0].mxu0 %v2834
        %v3183 = vpop.f32.mrb[0].mxu0
        %v3184 = vadd.f32 %v2915, %v3183
        %v3185 = vpop.f32.mrb[0].mxu0
        %v3186 = vpop.f32.mrb[0].mxu0
        %v3187 = vadd.f32 %v2915, %v3186
        %v3188 = vpop.f32.mrb[0].mxu0
        %3189 = vmatprep.mubr.bf16.mxu0 %v2839
        %3190 = vmatmul.mubr.bf16.gmra.mrb[0].mxu0 %v2838
        %v3191 = vpop.f32.mrb[0].mxu0
        %v3192 = vadd.f32 %v2915, %v3191
        %v3193 = vpop.f32.mrb[0].mxu0
        %v3194 = vpop.f32.mrb[0].mxu0
        %v3195 = vadd.f32 %v2915, %v3194
        %v3196 = vpop.f32.mrb[0].mxu0
        %3197 = vmatprep.mubr.bf16.mxu0 %v2843
        %3198 = vmatmul.mubr.bf16.gmra.mrb[0].mxu0 %v2842
        %v3199 = vpop.f32.mrb[0].mxu0
        %v3200 = vadd.f32 %v2915, %v3199
        %v3201 = vpop.f32.mrb[0].mxu0
        %v3202 = vpop.f32.mrb[0].mxu0
        %v3203 = vadd.f32 %v2915, %v3202
        %v3204 = vpop.f32.mrb[0].mxu0
        %3205 = vdwg.mxu0
        %3206 = vmatprep.subr.bf16.mxu0 0
        %3207 = vmatpush1.bf16.msra.mxu0 %v3061
        %3208 = vmatprep.subr.bf16.mxu0 0
        %3209 = vmatpush1.bf16.msra.mxu0 %v3062
        %3210 = vmatprep.subr.bf16.mxu0 0
        %3211 = vmatpush1.bf16.msra.mxu0 %v3063
        %3212 = vmatprep.subr.bf16.mxu0 0
        %3213 = vmatpush1.bf16.msra.mxu0 %v3064
        %3214 = vmatprep.subr.bf16.mxu0 0
        %3215 = vmatpush1.bf16.msra.mxu0 %v3065
        %3216 = vmatprep.subr.bf16.mxu0 0
        %3217 = vmatpush1.bf16.msra.mxu0 %v3066
        %3218 = vmatprep.subr.bf16.mxu0 0
        %3219 = vmatpush1.bf16.msra.mxu0 %v3067
        %3220 = vmatprep.subr.bf16.mxu0 0
        %3221 = vmatpush1.bf16.msra.mxu0 %v3068
        %3222 = vmatprep.subr.bf16.mxu0 0
        %3223 = vmatpush1.bf16.msra.mxu0 %v3069
        %3224 = vmatprep.subr.bf16.mxu0 0
        %3225 = vmatpush1.bf16.msra.mxu0 %v3070
        %3226 = vmatprep.subr.bf16.mxu0 0
        %3227 = vmatpush1.bf16.msra.mxu0 %v3071
        %3228 = vmatprep.subr.bf16.mxu0 0
        %3229 = vmatpush1.bf16.msra.mxu0 %v3072
        %3230 = vmatprep.subr.bf16.mxu0 0
        %3231 = vmatpush1.bf16.msra.mxu0 %v3073
        %3232 = vmatprep.subr.bf16.mxu0 0
        %3233 = vmatpush1.bf16.msra.mxu0 %v3074
        %3234 = vmatprep.subr.bf16.mxu0 0
        %3235 = vmatpush1.bf16.msra.mxu0 %v3075
        %3236 = vmatprep.subr.bf16.mxu0 0
        %3237 = vmatpush1.bf16.msra.mxu0 %v3076
        %3238 = vmatprep.mubr.bf16.mxu0 %v2817
        %3239 = vmatmul.mubr.bf16.gmra.mrb[0].mxu0 %v2816
        %v3240 = vpop.f32.mrb[0].mxu0
        %v3241 = vadd.f32 %v3144, %v3240
        %v3242 = vpop.f32.mrb[0].mxu0
        %v3243 = vpop.f32.mrb[0].mxu0
        %v3244 = vadd.f32 %v3147, %v3243
        %v3245 = vpop.f32.mrb[0].mxu0
        %3246 = vmatprep.mubr.bf16.mxu0 %v2821
        %3247 = vmatmul.mubr.bf16.gmra.mrb[0].mxu0 %v2820
        %v3248 = vpop.f32.mrb[0].mxu0
        %v3249 = vadd.f32 %v3152, %v3248
        %v3250 = vpop.f32.mrb[0].mxu0
        %v3251 = vpop.f32.mrb[0].mxu0
        %v3252 = vadd.f32 %v3155, %v3251
        %v3253 = vpop.f32.mrb[0].mxu0
        %3254 = vmatprep.mubr.bf16.mxu0 %v2825
        %3255 = vmatmul.mubr.bf16.gmra.mrb[0].mxu0 %v2824
        %v3256 = vpop.f32.mrb[0].mxu0
        %v3257 = vadd.f32 %v3160, %v3256
        %v3258 = vpop.f32.mrb[0].mxu0
        %v3259 = vpop.f32.mrb[0].mxu0
        %v3260 = vadd.f32 %v3163, %v3259
        %v3261 = vpop.f32.mrb[0].mxu0
        %3262 = vmatprep.mubr.bf16.mxu0 %v2829
        %3263 = vmatmul.mubr.bf16.gmra.mrb[0].mxu0 %v2828
        %v3264 = vpop.f32.mrb[0].mxu0
        %v3265 = vadd.f32 %v3168, %v3264
        %v3266 = vpop.f32.mrb[0].mxu0
        %v3267 = vpop.f32.mrb[0].mxu0
        %v3268 = vadd.f32 %v3171, %v3267
        %v3269 = vpop.f32.mrb[0].mxu0
        %3270 = vmatprep.mubr.bf16.mxu0 %v2833
        %3271 = vmatmul.mubr.bf16.gmra.mrb[0].mxu0 %v2832
        %v3272 = vpop.f32.mrb[0].mxu0
        %v3273 = vadd.f32 %v3176, %v3272
        %v3274 = vpop.f32.mrb[0].mxu0
        %v3275 = vpop.f32.mrb[0].mxu0
        %v3276 = vadd.f32 %v3179, %v3275
        %v3277 = vpop.f32.mrb[0].mxu0
        %3278 = vmatprep.mubr.bf16.mxu0 %v2837
        %3279 = vmatmul.mubr.bf16.gmra.mrb[0].mxu0 %v2836
        %v3280 = vpop.f32.mrb[0].mxu0
        %v3281 = vadd.f32 %v3184, %v3280
        %v3282 = vpop.f32.mrb[0].mxu0
        %v3283 = vpop.f32.mrb[0].mxu0
        %v3284 = vadd.f32 %v3187, %v3283
        %v3285 = vpop.f32.mrb[0].mxu0
        %3286 = vmatprep.mubr.bf16.mxu0 %v2841
        %3287 = vmatmul.mubr.bf16.gmra.mrb[0].mxu0 %v2840
        %v3288 = vpop.f32.mrb[0].mxu0
        %v3289 = vadd.f32 %v3192, %v3288
        %v3290 = vpop.f32.mrb[0].mxu0
        %v3291 = vpop.f32.mrb[0].mxu0
        %v3292 = vadd.f32 %v3195, %v3291
        %v3293 = vpop.f32.mrb[0].mxu0
        %3294 = vmatprep.mubr.bf16.mxu0 %v2845
        %3295 = vmatmul.mubr.bf16.gmra.mrb[0].mxu0 %v2844
        %v3296 = vpop.f32.mrb[0].mxu0
        %v3297 = vadd.f32 %v3200, %v3296
        %v3298 = vpop.f32.mrb[0].mxu0
        %v3299 = vpop.f32.mrb[0].mxu0
        %v3300 = vadd.f32 %v3203, %v3299
        %v3301 = vpop.f32.mrb[0].mxu0
        %3302 = vdwg.mxu0
        %3303 = vst [vmem:[%s596] sm:$0xff] %v3241
        %3304 = vst [vmem:[%s596 + $0x8] sm:$0xff] %v3244
        %3305 = vst [vmem:[%s596 + $0x10] sm:$0xff] %v3249
        %3306 = vst [vmem:[%s596 + $0x18] sm:$0xff] %v3252
        %3307 = vst [vmem:[%s596 + $0x20] sm:$0xff] %v3257
        %3308 = vst [vmem:[%s596 + $0x28] sm:$0xff] %v3260
        %3309 = vst [vmem:[%s596 + $0x30] sm:$0xff] %v3265
        %3310 = vst [vmem:[%s596 + $0x38] sm:$0xff] %v3268
        %3311 = vst [vmem:[%s596 + $0x40] sm:$0xff] %v3273
        %3312 = vst [vmem:[%s596 + $0x48] sm:$0xff] %v3276
        %3313 = vst [vmem:[%s596 + $0x50] sm:$0xff] %v3281
        %3314 = vst [vmem:[%s596 + $0x58] sm:$0xff] %v3284
        %3315 = vst [vmem:[%s596 + $0x60] sm:$0xff] %v3289
        %3316 = vst [vmem:[%s596 + $0x68] sm:$0xff] %v3292
        %3317 = vst [vmem:[%s596 + $0x70] sm:$0xff] %v3297
        %3318 = vst [vmem:[%s596 + $0x78] sm:$0xff] %v3300
        %s3319 = smul.u32 16, %s32
        %p3320 = scmp.lt.s32.totalorder %s3319, 31
        %s3321 = scalar_select %p3320, %s3319, 31
        %s3322 = smul.addr %s3321, 8
        %s3323 = scalar_lea.vmem %s15, %s3322
        // Predicated region
        $region101: #{densenet_forward.1} parent=79 // pred_check
          %p3324 = pneg %p375
        $region102: #{densenet_forward.1} parent=79 // pred_check_branch
          %3326 = sbr.rel (%p3324) target = $region104
        $region103: #{densenet_forward.1} parent=79 // pred_region
          %s3327 = smul.u32 16, %s32
        $region104: #{densenet_forward.1} parent=79 // pred_fallthru
          _
      $region80: #{densenet_forward.1} parent=5 // pred_fallthru
        _
      %p3328 = scmp.le.s32.totalorder 2, %s27
      // Predicated region
      $region105: #{densenet_forward.1} parent=5 // pred_check
        %p3329 = pneg %p3328
      $region106: #{densenet_forward.1} parent=5 // pred_check_branch
        %3331 = sbr.rel (%p3329) target = $region108
      $region107: #{densenet_forward.1} parent=5 // pred_region
        %s3332 = ssub.s32 %s27, 2
        // Predicated region
        $region109: #{densenet_forward.1} parent=107 // pred_check
          %p3333 = pneg %p381
        $region110: #{densenet_forward.1} parent=107 // pred_check_branch
          %3335 = sbr.rel (%p3333) target = $region112
        $region111: #{densenet_forward.1} parent=107 // pred_region
          %s3336 = smul.u32 16, %s33
          %p3337 = scmp.lt.s32.totalorder %s3336, 31
          %s3338 = scalar_select %p3337, %s3336, 31
          %s3339 = smul.addr %s3338, 8
          %s3340 = scalar_lea.vmem %s15, %s3339
        $region112: #{densenet_forward.1} parent=107 // pred_fallthru
          _
      $region108: #{densenet_forward.1} parent=5 // pred_fallthru
        _
    $region6: #{densenet_forward.1} parent=1 // loop_footer
      %s31 = sadd.s32 1, %s27
    $region7: #{densenet_forward.1} parent=1 // loop_footer_branch
      %26 = sbr.rel target = $region3
    $region8: #{densenet_forward.1} parent=1 // loop_exit
      _
    %3341 = vsyncpa [#allocation4], 1
    %s3342 = scalar_lea.sflag [#allocation4], 1
    %3343 = vsyncpa %s3342, 1
    %3344 = vsyncpa [#allocation8], 1
    %3345 = vsyncpa [#allocation11], 1
    %3346 = vsyncpa [#allocation5], 1
    %s3347 = scalar_lea.sflag [#allocation5], 1
    %3348 = vsyncpa %s3347, 1

</llo_original>
